<compile_context>
chip_gen: v5e
topology: v5e:2x2
jax: 0.10.0
libtpu: 0.0.40
codegen_flags: <defaults>
</compile_context>

<pallas_src>
import functools

import jax
import jax.numpy as jnp
from jax.experimental import pallas as pl
from jax.experimental.pallas import tpu as pltpu

LN_EPS = 1e-5          # torch.nn.LayerNorm default eps
PATCH = 16             # Conv2d kernel_size == stride


# ----------------------------------------------------------------------------
# Kernel 1: fused fc(P->1) patch pooling (commuted) + conv projection
# ----------------------------------------------------------------------------
def _frame_pool_project_kernel(x_ref, fcwmap_ref, fold_ref, wct_ref, bias_ref,
                               o_ref, *, chans, height, n_hp, patch):
    # x_ref      : (TM, C*H, W)      raw frames, natural layout (no im2col)
    # fcwmap_ref : (Hp, W)           fc weight per (patch row, pixel column)
    # fold_ref   : (W, PATCH)        0/1 matrix folding w -> w % PATCH
    # wct_ref    : (C*PATCH, PATCH, D) conv weight, bf16, indexed by (c, ky)
    # bias_ref   : (1, D)            conv_b * sum(fc_w) + fc_b
    # o_ref      : (TM, D)
    fcwmap = fcwmap_ref[...]                                   # (Hp, W) f32
    fold_w = fold_ref[...]                                     # (W, 16) f32
    tm, d = o_ref.shape
    acc = jnp.zeros((tm, d), jnp.float32)
    for c in range(chans):
        base = c * height
        for dy in range(patch):
            # rows {base + hp*16 + dy}: kernel-row dy of every patch row hp
            v = x_ref[:, pl.ds(base + dy, n_hp, stride=patch), :]  # (TM, Hp, W)
            # fc pooling commuted ahead of the conv: weight by fc(hp, wp) and
            # fold the patch-row axis (VPU mul + sublane reduce)
            u = jnp.sum(v * fcwmap, axis=1)                         # (TM, W)
            # fold the patch-column axis on the MXU (0/1 selection matrix)
            p = jnp.dot(u, fold_w,
                        preferred_element_type=jnp.float32)         # (TM, 16)
            # conv projection for this (c, ky) slice: bf16 MXU, f32 accumulate
            acc = acc + jnp.dot(p.astype(jnp.bfloat16),
                                wct_ref[c * patch + dy],
                                preferred_element_type=jnp.float32)  # (TM, D)
    o_ref[...] = (acc + bias_ref[...]).astype(o_ref.dtype)


def _frame_pool_project(x, fcwmap, fold_w, wct, bias_eff, *, tm):
    n, ch, w = x.shape
    cpatch, patch, d = wct.shape
    chans = cpatch // patch
    height = ch // chans
    n_hp = height // patch
    kernel = functools.partial(_frame_pool_project_kernel,
                               chans=chans, height=height,
                               n_hp=n_hp, patch=patch)
    return pl.pallas_call(
        kernel,
        out_shape=jax.ShapeDtypeStruct((n, d), jnp.float32),
        grid=(pl.cdiv(n, tm),),
        in_specs=[
            pl.BlockSpec((tm, ch, w), lambda i: (i, 0, 0)),
            pl.BlockSpec((n_hp, w), lambda i: (0, 0)),
            pl.BlockSpec((w, patch), lambda i: (0, 0)),
            pl.BlockSpec((cpatch, patch, d), lambda i: (0, 0, 0)),
            pl.BlockSpec((1, d), lambda i: (0, 0)),
        ],
        out_specs=pl.BlockSpec((tm, d), lambda i: (i, 0)),
        compiler_params=pltpu.CompilerParams(
            dimension_semantics=("parallel",),
            # explicit scoped-VMEM budget (v7x default is 32 MiB / 64 MiB phys);
            # at tm=16..32 and 224x224 frames this kernel needs ~7..14 MB
            # double-buffered plus <1 MB of resident weights.
            vmem_limit_bytes=48 * 1024 * 1024),
    )(x, fcwmap, fold_w, wct, bias_eff)


# ----------------------------------------------------------------------------
# Kernel 2: fused [bos | frames | 0] assembly + eos scatter + pos-embed + LN
# ----------------------------------------------------------------------------
def _assemble_ln_kernel(f_ref, ends_ref, bos_ref, eos_ref, pos_ref,
                        g_ref, b_ref, o_ref):
    # f_ref   : (TB, L, D)   frame embeddings (no wrapper-side jnp.pad)
    # ends_ref: (TB, 1, 1)   eos row index per clip (int32, already wrapped)
    # bos/eos : (1, D);  pos : (S, D);  g/b : (1, D) LayerNorm gamma/beta
    frames = f_ref[...].astype(jnp.float32)                     # (TB, L, D)
    tb, l, d = frames.shape
    s = l + 2
    bos = jnp.broadcast_to(bos_ref[...].astype(jnp.float32)[None, :, :],
                           (tb, 1, d))
    tail = jnp.zeros((tb, 1, d), jnp.float32)
    x = jnp.concatenate([bos, frames, tail], axis=1)            # (TB, S, D)
    row = jax.lax.broadcasted_iota(jnp.int32, (tb, s, 1), 1)
    is_eos = row == ends_ref[...]                               # (TB, S, 1)
    x = jnp.where(is_eos, eos_ref[...].astype(jnp.float32)[None, :, :], x)
    x = x + pos_ref[...].astype(jnp.float32)                    # + pos embed
    mean = jnp.mean(x, axis=-1, keepdims=True)
    xc = x - mean
    var = jnp.mean(xc * xc, axis=-1, keepdims=True)
    y = xc * jax.lax.rsqrt(var + LN_EPS)
    o_ref[...] = (y * g_ref[...] + b_ref[...]).astype(o_ref.dtype)


def _assemble_ln(frame_emb, ends, bos, eos, pos, ln_g, ln_b, *, tb):
    b, l, d = frame_emb.shape
    s = l + 2
    return pl.pallas_call(
        _assemble_ln_kernel,
        out_shape=jax.ShapeDtypeStruct((b, s, d), jnp.float32),
        grid=(pl.cdiv(b, tb),),
        in_specs=[
            pl.BlockSpec((tb, l, d), lambda i: (i, 0, 0)),
            pl.BlockSpec((tb, 1, 1), lambda i: (i, 0, 0)),
            pl.BlockSpec((1, d), lambda i: (0, 0)),
            pl.BlockSpec((1, d), lambda i: (0, 0)),
            pl.BlockSpec((s, d), lambda i: (0, 0)),
            pl.BlockSpec((1, d), lambda i: (0, 0)),
            pl.BlockSpec((1, d), lambda i: (0, 0)),
        ],
        out_specs=pl.BlockSpec((tb, s, d), lambda i: (i, 0, 0)),
        compiler_params=pltpu.CompilerParams(
            dimension_semantics=("parallel",)),
    )(frame_emb, ends, bos, eos, pos, ln_g, ln_b)


# ----------------------------------------------------------------------------
# Forward pass
# ----------------------------------------------------------------------------
def temporal_of_embedding_forward(params, video_embed, video_embed_mask,
                                  *, tm=8, tb=1):
    # tm: frames per grid step (multiple of 8; 16-32 on v7x, 32-64 on v5e/v6e)
    # tb: clips per grid step for the assembly/LN kernel
    B, L, C, H, W = video_embed.shape
    D = params["conv_w"].shape[0]
    Hp, Wp = H // PATCH, W // PATCH
    N = B * L
    S = L + 2

    # --- tiny derived weights (cheap; could be cached by the caller) --------
    fc2 = params["fc_w"].reshape(Hp, Wp).astype(jnp.float32)
    fcwmap = jnp.repeat(fc2, PATCH, axis=1)                    # (Hp, W)
    fold_w = (jnp.arange(W, dtype=jnp.int32)[:, None] % PATCH ==
              jnp.arange(PATCH, dtype=jnp.int32)[None, :]).astype(jnp.float32)
    wct = jnp.transpose(params["conv_w"], (1, 2, 3, 0)) \
             .reshape(C * PATCH, PATCH, D).astype(jnp.bfloat16)
    bias_eff = (params["conv_b"] * jnp.sum(params["fc_w"])
                + params["fc_b"]).reshape(1, D).astype(jnp.float32)

    # natural-layout frames (free reshape, no im2col HBM round trip)
    x = video_embed.reshape(N, C * H, W)
    frame_emb = _frame_pool_project(x, fcwmap, fold_w, wct, bias_eff, tm=tm)
    frame_emb = frame_emb.reshape(B, L, D)

    # eos position; wrap -1 (all-zero mask) to the last row like torch [-1]
    ends = jnp.sum(video_embed_mask.astype(jnp.int32), axis=1) - 1
    ends = jnp.where(ends < 0, ends + S, ends).reshape(B, 1, 1)

    out = _assemble_ln(frame_emb, ends,
                       params["bos"].reshape(1, D), params["eos"].reshape(1, D),
                       params["pos_embed"][:S],
                       params["ln_g"].reshape(1, D), params["ln_b"].reshape(1, D),
                       tb=tb)
    # TODO(synk): nn.Dropout(hidden_dropout_prob) is inference-mode identity here.
    return out


# ----------------------------------------------------------------------------
# Pure-JAX reference (mirrors the PyTorch module) for a tolerance check
# ----------------------------------------------------------------------------
def _reference_forward(params, video_embed, video_embed_mask):
    B, L, C, H, W = video_embed.shape
    D = params["conv_w"].shape[0]
    Hp, Wp = H // PATCH, W // PATCH
    P = Hp * Wp
    S = L + 2
    x = video_embed.reshape(B * L, C, Hp, PATCH, Wp, PATCH)
    x = x.transpose(0, 2, 4, 1, 3, 5).reshape(B * L, P, C * PATCH * PATCH)
    wc = params["conv_w"].reshape(D, -1)
    conv = jnp.einsum("npk,dk->npd", x, wc) + params["conv_b"]
    fe = jnp.einsum("npd,p->nd", conv, params["fc_w"][0]) + params["fc_b"][0]
    fe = fe.reshape(B, L, D)
    seq = jnp.concatenate(
        [jnp.broadcast_to(params["bos"], (B, 1, D)), fe,
         jnp.zeros((B, 1, D), jnp.float32)], axis=1)
    ends = jnp.sum(video_embed_mask.astype(jnp.int32), axis=1) - 1
    ends = jnp.where(ends < 0, ends + S, ends)
    onehot = (jnp.arange(S)[None, :] == ends[:, None])[..., None]
    seq = jnp.where(onehot, params["eos"][None, None, :], seq)
    seq = seq + params["pos_embed"][:S][None]
    mu = jnp.mean(seq, axis=-1, keepdims=True)
    var = jnp.mean((seq - mu) ** 2, axis=-1, keepdims=True)
    return ((seq - mu) * jax.lax.rsqrt(var + LN_EPS)
            * params["ln_g"] + params["ln_b"])


# ----------------------------------------------------------------------------
# Parameter initialization (matches module init style)
# ----------------------------------------------------------------------------
def init_params(key, hidden_size, num_patches, max_position_embeddings):
    ks = jax.random.split(key, 6)

    def tn(k, shape, std=0.02):
        return std * jax.random.truncated_normal(k, -2.0, 2.0, shape, jnp.float32)

    return {
        "conv_w": tn(ks[0], (hidden_size, 2, PATCH, PATCH)),
        "conv_b": jnp.zeros((hidden_size,), jnp.float32),
        "fc_w": tn(ks[1], (1, num_patches)),
        "fc_b": jnp.zeros((1,), jnp.float32),
        "bos": tn(ks[2], (hidden_size,)),
        "eos": tn(ks[3], (hidden_size,)),
        "pos_embed": tn(ks[4], (max_position_embeddings, hidden_size)),
        "ln_g": jnp.ones((hidden_size,), jnp.float32),
        "ln_b": jnp.zeros((hidden_size,), jnp.float32),
    }


# ----------------------------------------------------------------------------
# Demo
# ----------------------------------------------------------------------------
if __name__ == "__main__":
    D = 32                 # hidden_size (small demo)
    B, L = 2, 6            # batch, frames per clip
    C, H, W = 2, 32, 32    # optical-flow channels, small frame size
    # NOTE: the reference hardcodes 224x224 frames -> 196 patches; the demo
    # uses 32x32 -> 4 patches with fc sized to the actual patch count
    # (identical computation, just smaller).
    P = (H // PATCH) * (W // PATCH)
    S = L + 2
    max_pos = 16

    key = jax.random.PRNGKey(0)
    kp, kv = jax.random.split(key)
    params = init_params(kp, D, P, max_pos)
    video_embed = jax.random.normal(kv, (B, L, C, H, W), jnp.float32)

    # mask covers [bos] + valid frames (+ [eos]); ends = mask.sum(1) - 1
    mask = jnp.zeros((B, S), jnp.int32)
    mask = mask.at[0, :].set(1)     # all frames valid -> eos at row 7 (zeros)
    mask = mask.at[1, :6].set(1)    # fewer valid      -> eos at row 5
    video_embed_mask = mask

    fwd = jax.jit(functools.partial(temporal_of_embedding_forward, tm=8, tb=1))
    out = fwd(params, video_embed, video_embed_mask)
    jax.block_until_ready(out)

    ref = _reference_forward(params, video_embed, video_embed_mask)
    assert out.shape == (B, S, D), out.shape
    assert bool(jnp.all(jnp.isfinite(out)))
    max_err = float(jnp.max(jnp.abs(out - ref)))
    assert max_err < 5e-2, f"max abs err vs reference: {max_err}"
    print("KERNEL_OK")
</pallas_src>

<mosaic_0001>
module attributes {stable_mosaic.version = 11 : i64} {
  func.func @_assemble_ln_kernel(%arg0: i32, %arg1: memref<1x6x32xf32, #tpu.memory_space<vmem>>, %arg2: memref<1x1x1xi32, #tpu.memory_space<vmem>>, %arg3: memref<1x32xf32, #tpu.memory_space<vmem>>, %arg4: memref<1x32xf32, #tpu.memory_space<vmem>>, %arg5: memref<8x32xf32, #tpu.memory_space<vmem>>, %arg6: memref<1x32xf32, #tpu.memory_space<vmem>>, %arg7: memref<1x32xf32, #tpu.memory_space<vmem>>, %arg8: memref<1x8x32xf32, #tpu.memory_space<vmem>>) attributes {dimension_semantics = [#tpu.dimension_semantics<parallel>], iteration_bounds = array<i64: 2>, scalar_prefetch = 0 : i64, scratch_operands = 0 : i64, tpu.core_type = #tpu.core_type<tc>, window_params = [{transform_indices = @transform_0, window_bounds = array<i64: 1, 6, 32>}, {transform_indices = @transform_1, window_bounds = array<i64: 1, 1, 1>}, {pipeline_mode = #tpu.pipeline_mode<synchronous>, transform_indices = @transform_2, window_bounds = array<i64: 1, 32>}, {pipeline_mode = #tpu.pipeline_mode<synchronous>, transform_indices = @transform_3, window_bounds = array<i64: 1, 32>}, {pipeline_mode = #tpu.pipeline_mode<synchronous>, transform_indices = @transform_4, window_bounds = array<i64: 8, 32>}, {pipeline_mode = #tpu.pipeline_mode<synchronous>, transform_indices = @transform_5, window_bounds = array<i64: 1, 32>}, {pipeline_mode = #tpu.pipeline_mode<synchronous>, transform_indices = @transform_6, window_bounds = array<i64: 1, 32>}, {transform_indices = @transform_7, window_bounds = array<i64: 1, 8, 32>}]} {
    %c0 = arith.constant 0 : index
    %c0_0 = arith.constant 0 : index
    %c0_1 = arith.constant 0 : index
    %0 = vector.load %arg1[%c0, %c0_0, %c0_1] : memref<1x6x32xf32, #tpu.memory_space<vmem>>, vector<1x6x32xf32>
    %c0_2 = arith.constant 0 : index
    %c0_3 = arith.constant 0 : index
    %1 = vector.load %arg3[%c0_2, %c0_3] : memref<1x32xf32, #tpu.memory_space<vmem>>, vector<1x32xf32>
    %2 = vector.shape_cast %1 : vector<1x32xf32> to vector<1x1x32xf32>
    %cst = arith.constant 0.000000e+00 : f32
    %3 = vector.broadcast %cst : f32 to vector<1x1x32xf32>
    %4 = tpu.concatenate %2, %0, %3 in 1 : vector<1x1x32xf32>, vector<1x6x32xf32>, vector<1x1x32xf32> -> vector<1x8x32xf32>
    %5 = tpu.iota {dimensions = array<i32: 1>} : vector<1x8x1xi32>
    %c0_4 = arith.constant 0 : index
    %c0_5 = arith.constant 0 : index
    %c0_6 = arith.constant 0 : index
    %6 = vector.load %arg2[%c0_4, %c0_5, %c0_6] : memref<1x1x1xi32, #tpu.memory_space<vmem>>, vector<1x1x1xi32>
    %7 = vector.broadcast %6 : vector<1x1x1xi32> to vector<1x8x1xi32>
    %8 = arith.cmpi eq, %5, %7 : vector<1x8x1xi32>
    %c0_7 = arith.constant 0 : index
    %c0_8 = arith.constant 0 : index
    %9 = vector.load %arg4[%c0_7, %c0_8] : memref<1x32xf32, #tpu.memory_space<vmem>>, vector<1x32xf32>
    %10 = vector.shape_cast %9 : vector<1x32xf32> to vector<1x1x32xf32>
    %11 = vector.shape_cast %8 : vector<1x8x1xi1> to vector<1x8x1xi1>
    %12 = vector.broadcast %11 : vector<1x8x1xi1> to vector<1x8x32xi1>
    %13 = vector.shape_cast %10 : vector<1x1x32xf32> to vector<1x1x32xf32>
    %14 = vector.broadcast %13 : vector<1x1x32xf32> to vector<1x8x32xf32>
    %15 = arith.select %12, %14, %4 : vector<1x8x32xi1>, vector<1x8x32xf32>
    %c0_9 = arith.constant 0 : index
    %c0_10 = arith.constant 0 : index
    %16 = vector.load %arg5[%c0_9, %c0_10] : memref<8x32xf32, #tpu.memory_space<vmem>>, vector<8x32xf32>
    %17 = vector.shape_cast %16 : vector<8x32xf32> to vector<1x8x32xf32>
    %18 = arith.addf %15, %17 : vector<1x8x32xf32>
    %cst_11 = arith.constant dense<0.000000e+00> : vector<1x8xf32>
    %19 = vector.multi_reduction <add>, %18, %cst_11 [2] : vector<1x8x32xf32> to vector<1x8xf32>
    %20 = vector.shape_cast %19 : vector<1x8xf32> to vector<1x8x1xf32>
    %cst_12 = arith.constant 3.200000e+01 : f32
    %21 = vector.broadcast %cst_12 : f32 to vector<1x8x1xf32>
    %22 = arith.divf %20, %21 : vector<1x8x1xf32>
    %23 = vector.broadcast %22 : vector<1x8x1xf32> to vector<1x8x32xf32>
    %24 = arith.subf %18, %23 : vector<1x8x32xf32>
    %25 = arith.mulf %24, %24 : vector<1x8x32xf32>
    %cst_13 = arith.constant dense<0.000000e+00> : vector<1x8xf32>
    %26 = vector.multi_reduction <add>, %25, %cst_13 [2] : vector<1x8x32xf32> to vector<1x8xf32>
    %27 = vector.shape_cast %26 : vector<1x8xf32> to vector<1x8x1xf32>
    %cst_14 = arith.constant 3.200000e+01 : f32
    %28 = vector.broadcast %cst_14 : f32 to vector<1x8x1xf32>
    %29 = arith.divf %27, %28 : vector<1x8x1xf32>
    %cst_15 = arith.constant 9.99999974E-6 : f32
    %30 = vector.broadcast %cst_15 : f32 to vector<1x8x1xf32>
    %31 = arith.addf %29, %30 : vector<1x8x1xf32>
    %32 = math.rsqrt %31 : vector<1x8x1xf32>
    %33 = vector.broadcast %32 : vector<1x8x1xf32> to vector<1x8x32xf32>
    %34 = arith.mulf %24, %33 : vector<1x8x32xf32>
    %c0_16 = arith.constant 0 : index
    %c0_17 = arith.constant 0 : index
    %35 = vector.load %arg6[%c0_16, %c0_17] : memref<1x32xf32, #tpu.memory_space<vmem>>, vector<1x32xf32>
    %36 = vector.shape_cast %35 : vector<1x32xf32> to vector<1x1x32xf32>
    %37 = vector.broadcast %36 : vector<1x1x32xf32> to vector<1x8x32xf32>
    %38 = arith.mulf %34, %37 : vector<1x8x32xf32>
    %c0_18 = arith.constant 0 : index
    %c0_19 = arith.constant 0 : index
    %39 = vector.load %arg7[%c0_18, %c0_19] : memref<1x32xf32, #tpu.memory_space<vmem>>, vector<1x32xf32>
    %40 = vector.shape_cast %39 : vector<1x32xf32> to vector<1x1x32xf32>
    %41 = vector.broadcast %40 : vector<1x1x32xf32> to vector<1x8x32xf32>
    %42 = arith.addf %38, %41 : vector<1x8x32xf32>
    %c0_20 = arith.constant 0 : index
    %c0_21 = arith.constant 0 : index
    %c0_22 = arith.constant 0 : index
    %43 = vector.load %arg8[%c0_20, %c0_21, %c0_22] : memref<1x8x32xf32, #tpu.memory_space<vmem>>, vector<1x8x32xf32>
    tpu.vector_store %arg8[%c0_20, %c0_21, %c0_22], %42 {strides = array<i32>} : memref<1x8x32xf32, #tpu.memory_space<vmem>>, vector<1x8x32xf32>,
    return
  }
  func.func @transform_0(%arg0: i32) -> (i32, i32, i32) {
    %c0_i32 = arith.constant 0 : i32
    %c0_i32_0 = arith.constant 0 : i32
    %c0_i32_1 = arith.constant 0 : i32
    return %arg0, %c0_i32, %c0_i32_0 : i32, i32, i32
  }
  func.func @transform_1(%arg0: i32) -> (i32, i32, i32) {
    %c0_i32 = arith.constant 0 : i32
    %c0_i32_0 = arith.constant 0 : i32
    %c0_i32_1 = arith.constant 0 : i32
    return %arg0, %c0_i32, %c0_i32_0 : i32, i32, i32
  }
  func.func @transform_2(%arg0: i32) -> (i32, i32) {
    %c0_i32 = arith.constant 0 : i32
    %c0_i32_0 = arith.constant 0 : i32
    %c0_i32_1 = arith.constant 0 : i32
    return %c0_i32, %c0_i32_0 : i32, i32
  }
  func.func @transform_3(%arg0: i32) -> (i32, i32) {
    %c0_i32 = arith.constant 0 : i32
    %c0_i32_0 = arith.constant 0 : i32
    %c0_i32_1 = arith.constant 0 : i32
    return %c0_i32, %c0_i32_0 : i32, i32
  }
  func.func @transform_4(%arg0: i32) -> (i32, i32) {
    %c0_i32 = arith.constant 0 : i32
    %c0_i32_0 = arith.constant 0 : i32
    %c0_i32_1 = arith.constant 0 : i32
    return %c0_i32, %c0_i32_0 : i32, i32
  }
  func.func @transform_5(%arg0: i32) -> (i32, i32) {
    %c0_i32 = arith.constant 0 : i32
    %c0_i32_0 = arith.constant 0 : i32
    %c0_i32_1 = arith.constant 0 : i32
    return %c0_i32, %c0_i32_0 : i32, i32
  }
  func.func @transform_6(%arg0: i32) -> (i32, i32) {
    %c0_i32 = arith.constant 0 : i32
    %c0_i32_0 = arith.constant 0 : i32
    %c0_i32_1 = arith.constant 0 : i32
    return %c0_i32, %c0_i32_0 : i32, i32
  }
  func.func @transform_7(%arg0: i32) -> (i32, i32, i32) {
    %c0_i32 = arith.constant 0 : i32
    %c0_i32_0 = arith.constant 0 : i32
    %c0_i32_1 = arith.constant 0 : i32
    return %arg0, %c0_i32, %c0_i32_0 : i32, i32, i32
  }
}

module attributes {stable_mosaic.version = 11 : i64} {
  func.func @_frame_pool_project_kernel(%arg0: i32, %arg1: memref<8x64x32xf32, #tpu.memory_space<vmem>>, %arg2: memref<2x32xf32, #tpu.memory_space<vmem>>, %arg3: memref<32x16xf32, #tpu.memory_space<vmem>>, %arg4: memref<32x16x32xbf16, #tpu.memory_space<vmem>>, %arg5: memref<1x32xf32, #tpu.memory_space<vmem>>, %arg6: memref<8x32xf32, #tpu.memory_space<vmem>>) attributes {dimension_semantics = [#tpu.dimension_semantics<parallel>], iteration_bounds = array<i64: 2>, scalar_prefetch = 0 : i64, scratch_operands = 0 : i64, tpu.core_type = #tpu.core_type<tc>, window_params = [{transform_indices = @transform_0, window_bounds = array<i64: 8, 64, 32>}, {pipeline_mode = #tpu.pipeline_mode<synchronous>, transform_indices = @transform_1, window_bounds = array<i64: 2, 32>}, {pipeline_mode = #tpu.pipeline_mode<synchronous>, transform_indices = @transform_2, window_bounds = array<i64: 32, 16>}, {pipeline_mode = #tpu.pipeline_mode<synchronous>, transform_indices = @transform_3, window_bounds = array<i64: 32, 16, 32>}, {pipeline_mode = #tpu.pipeline_mode<synchronous>, transform_indices = @transform_4, window_bounds = array<i64: 1, 32>}, {transform_indices = @transform_5, window_bounds = array<i64: 8, 32>}]} {
    %c0 = arith.constant 0 : index
    %c0_0 = arith.constant 0 : index
    %0 = vector.load %arg2[%c0, %c0_0] : memref<2x32xf32, #tpu.memory_space<vmem>>, vector<2x32xf32>
    %c0_1 = arith.constant 0 : index
    %c0_2 = arith.constant 0 : index
    %1 = vector.load %arg3[%c0_1, %c0_2] : memref<32x16xf32, #tpu.memory_space<vmem>>, vector<32x16xf32>
    %cst = arith.constant 0.000000e+00 : f32
    %2 = vector.broadcast %cst : f32 to vector<8x32xf32>
    %c0_3 = arith.constant 0 : index
    %c0_4 = arith.constant 0 : index
    %c0_5 = arith.constant 0 : index
    %3 = tpu.strided_load %arg1[%c0_3, %c0_4, %c0_5] {strides = array<i32: 1, 16, 1>} : memref<8x64x32xf32, #tpu.memory_space<vmem>>, vector<8x2x32xf32>
    %4 = vector.shape_cast %0 : vector<2x32xf32> to vector<1x2x32xf32>
    %5 = vector.broadcast %4 : vector<1x2x32xf32> to vector<8x2x32xf32>
    %6 = arith.mulf %3, %5 : vector<8x2x32xf32>
    %cst_6 = arith.constant dense<0.000000e+00> : vector<8x32xf32>
    %7 = vector.multi_reduction <add>, %6, %cst_6 [1] : vector<8x2x32xf32> to vector<8x32xf32>
    %cst_7 = arith.constant dense<0.000000e+00> : vector<8x16xf32>
    %8 = tpu.matmul %7, %1, %cst_7 {dimension_numbers = #tpu.dot_dimension_numbers<[1], [0], [0], [1], [0, 0, 1, 1], [], []>} : vector<8x32xf32>, vector<32x16xf32>, vector<8x16xf32> -> vector<8x16xf32>
    %9 = arith.truncf %8 : vector<8x16xf32> to vector<8x16xbf16>
    %c0_8 = arith.constant 0 : index
    %c0_9 = arith.constant 0 : index
    %c0_10 = arith.constant 0 : index
    %10 = vector.load %arg4[%c0_8, %c0_9, %c0_10] : memref<32x16x32xbf16, #tpu.memory_space<vmem>>, vector<1x16x32xbf16>
    %11 = vector.shape_cast %10 : vector<1x16x32xbf16> to vector<16x32xbf16>
    %cst_11 = arith.constant dense<0.000000e+00> : vector<8x32xf32>
    %12 = tpu.matmul %9, %11, %cst_11 {dimension_numbers = #tpu.dot_dimension_numbers<[1], [0], [0], [1], [0, 0, 1, 1], [], []>} : vector<8x16xbf16>, vector<16x32xbf16>, vector<8x32xf32> -> vector<8x32xf32>
    %13 = arith.addf %2, %12 : vector<8x32xf32>
    %c0_12 = arith.constant 0 : index
    %c1 = arith.constant 1 : index
    %c0_13 = arith.constant 0 : index
    %14 = tpu.strided_load %arg1[%c0_12, %c1, %c0_13] {strides = array<i32: 1, 16, 1>} : memref<8x64x32xf32, #tpu.memory_space<vmem>>, vector<8x2x32xf32>
    %15 = vector.shape_cast %0 : vector<2x32xf32> to vector<1x2x32xf32>
    %16 = vector.broadcast %15 : vector<1x2x32xf32> to vector<8x2x32xf32>
    %17 = arith.mulf %14, %16 : vector<8x2x32xf32>
    %cst_14 = arith.constant dense<0.000000e+00> : vector<8x32xf32>
    %18 = vector.multi_reduction <add>, %17, %cst_14 [1] : vector<8x2x32xf32> to vector<8x32xf32>
    %cst_15 = arith.constant dense<0.000000e+00> : vector<8x16xf32>
    %19 = tpu.matmul %18, %1, %cst_15 {dimension_numbers = #tpu.dot_dimension_numbers<[1], [0], [0], [1], [0, 0, 1, 1], [], []>} : vector<8x32xf32>, vector<32x16xf32>, vector<8x16xf32> -> vector<8x16xf32>
    %20 = arith.truncf %19 : vector<8x16xf32> to vector<8x16xbf16>
    %c1_16 = arith.constant 1 : index
    %c0_17 = arith.constant 0 : index
    %c0_18 = arith.constant 0 : index
    %21 = vector.load %arg4[%c1_16, %c0_17, %c0_18] : memref<32x16x32xbf16, #tpu.memory_space<vmem>>, vector<1x16x32xbf16>
    %22 = vector.shape_cast %21 : vector<1x16x32xbf16> to vector<16x32xbf16>
    %cst_19 = arith.constant dense<0.000000e+00> : vector<8x32xf32>
    %23 = tpu.matmul %20, %22, %cst_19 {dimension_numbers = #tpu.dot_dimension_numbers<[1], [0], [0], [1], [0, 0, 1, 1], [], []>} : vector<8x16xbf16>, vector<16x32xbf16>, vector<8x32xf32> -> vector<8x32xf32>
    %24 = arith.addf %13, %23 : vector<8x32xf32>
    %c0_20 = arith.constant 0 : index
    %c2 = arith.constant 2 : index
    %c0_21 = arith.constant 0 : index
    %25 = tpu.strided_load %arg1[%c0_20, %c2, %c0_21] {strides = array<i32: 1, 16, 1>} : memref<8x64x32xf32, #tpu.memory_space<vmem>>, vector<8x2x32xf32>
    %26 = vector.shape_cast %0 : vector<2x32xf32> to vector<1x2x32xf32>
    %27 = vector.broadcast %26 : vector<1x2x32xf32> to vector<8x2x32xf32>
    %28 = arith.mulf %25, %27 : vector<8x2x32xf32>
    %cst_22 = arith.constant dense<0.000000e+00> : vector<8x32xf32>
    %29 = vector.multi_reduction <add>, %28, %cst_22 [1] : vector<8x2x32xf32> to vector<8x32xf32>
    %cst_23 = arith.constant dense<0.000000e+00> : vector<8x16xf32>
    %30 = tpu.matmul %29, %1, %cst_23 {dimension_numbers = #tpu.dot_dimension_numbers<[1], [0], [0], [1], [0, 0, 1, 1], [], []>} : vector<8x32xf32>, vector<32x16xf32>, vector<8x16xf32> -> vector<8x16xf32>
    %31 = arith.truncf %30 : vector<8x16xf32> to vector<8x16xbf16>
    %c2_24 = arith.constant 2 : index
    %c0_25 = arith.constant 0 : index
    %c0_26 = arith.constant 0 : index
    %32 = vector.load %arg4[%c2_24, %c0_25, %c0_26] : memref<32x16x32xbf16, #tpu.memory_space<vmem>>, vector<1x16x32xbf16>
    %33 = vector.shape_cast %32 : vector<1x16x32xbf16> to vector<16x32xbf16>
    %cst_27 = arith.constant dense<0.000000e+00> : vector<8x32xf32>
    %34 = tpu.matmul %31, %33, %cst_27 {dimension_numbers = #tpu.dot_dimension_numbers<[1], [0], [0], [1], [0, 0, 1, 1], [], []>} : vector<8x16xbf16>, vector<16x32xbf16>, vector<8x32xf32> -> vector<8x32xf32>
    %35 = arith.addf %24, %34 : vector<8x32xf32>
    %c0_28 = arith.constant 0 : index
    %c3 = arith.constant 3 : index
    %c0_29 = arith.constant 0 : index
    %36 = tpu.strided_load %arg1[%c0_28, %c3, %c0_29] {strides = array<i32: 1, 16, 1>} : memref<8x64x32xf32, #tpu.memory_space<vmem>>, vector<8x2x32xf32>
    %37 = vector.shape_cast %0 : vector<2x32xf32> to vector<1x2x32xf32>
    %38 = vector.broadcast %37 : vector<1x2x32xf32> to vector<8x2x32xf32>
    %39 = arith.mulf %36, %38 : vector<8x2x32xf32>
    %cst_30 = arith.constant dense<0.000000e+00> : vector<8x32xf32>
    %40 = vector.multi_reduction <add>, %39, %cst_30 [1] : vector<8x2x32xf32> to vector<8x32xf32>
    %cst_31 = arith.constant dense<0.000000e+00> : vector<8x16xf32>
    %41 = tpu.matmul %40, %1, %cst_31 {dimension_numbers = #tpu.dot_dimension_numbers<[1], [0], [0], [1], [0, 0, 1, 1], [], []>} : vector<8x32xf32>, vector<32x16xf32>, vector<8x16xf32> -> vector<8x16xf32>
    %42 = arith.truncf %41 : vector<8x16xf32> to vector<8x16xbf16>
    %c3_32 = arith.constant 3 : index
    %c0_33 = arith.constant 0 : index
    %c0_34 = arith.constant 0 : index
    %43 = vector.load %arg4[%c3_32, %c0_33, %c0_34] : memref<32x16x32xbf16, #tpu.memory_space<vmem>>, vector<1x16x32xbf16>
    %44 = vector.shape_cast %43 : vector<1x16x32xbf16> to vector<16x32xbf16>
    %cst_35 = arith.constant dense<0.000000e+00> : vector<8x32xf32>
    %45 = tpu.matmul %42, %44, %cst_35 {dimension_numbers = #tpu.dot_dimension_numbers<[1], [0], [0], [1], [0, 0, 1, 1], [], []>} : vector<8x16xbf16>, vector<16x32xbf16>, vector<8x32xf32> -> vector<8x32xf32>
    %46 = arith.addf %35, %45 : vector<8x32xf32>
    %c0_36 = arith.constant 0 : index
    %c4 = arith.constant 4 : index
    %c0_37 = arith.constant 0 : index
    %47 = tpu.strided_load %arg1[%c0_36, %c4, %c0_37] {strides = array<i32: 1, 16, 1>} : memref<8x64x32xf32, #tpu.memory_space<vmem>>, vector<8x2x32xf32>
    %48 = vector.shape_cast %0 : vector<2x32xf32> to vector<1x2x32xf32>
    %49 = vector.broadcast %48 : vector<1x2x32xf32> to vector<8x2x32xf32>
    %50 = arith.mulf %47, %49 : vector<8x2x32xf32>
    %cst_38 = arith.constant dense<0.000000e+00> : vector<8x32xf32>
    %51 = vector.multi_reduction <add>, %50, %cst_38 [1] : vector<8x2x32xf32> to vector<8x32xf32>
    %cst_39 = arith.constant dense<0.000000e+00> : vector<8x16xf32>
    %52 = tpu.matmul %51, %1, %cst_39 {dimension_numbers = #tpu.dot_dimension_numbers<[1], [0], [0], [1], [0, 0, 1, 1], [], []>} : vector<8x32xf32>, vector<32x16xf32>, vector<8x16xf32> -> vector<8x16xf32>
    %53 = arith.truncf %52 : vector<8x16xf32> to vector<8x16xbf16>
    %c4_40 = arith.constant 4 : index
    %c0_41 = arith.constant 0 : index
    %c0_42 = arith.constant 0 : index
    %54 = vector.load %arg4[%c4_40, %c0_41, %c0_42] : memref<32x16x32xbf16, #tpu.memory_space<vmem>>, vector<1x16x32xbf16>
    %55 = vector.shape_cast %54 : vector<1x16x32xbf16> to vector<16x32xbf16>
    %cst_43 = arith.constant dense<0.000000e+00> : vector<8x32xf32>
    %56 = tpu.matmul %53, %55, %cst_43 {dimension_numbers = #tpu.dot_dimension_numbers<[1], [0], [0], [1], [0, 0, 1, 1], [], []>} : vector<8x16xbf16>, vector<16x32xbf16>, vector<8x32xf32> -> vector<8x32xf32>
    %57 = arith.addf %46, %56 : vector<8x32xf32>
    %c0_44 = arith.constant 0 : index
    %c5 = arith.constant 5 : index
    %c0_45 = arith.constant 0 : index
    %58 = tpu.strided_load %arg1[%c0_44, %c5, %c0_45] {strides = array<i32: 1, 16, 1>} : memref<8x64x32xf32, #tpu.memory_space<vmem>>, vector<8x2x32xf32>
    %59 = vector.shape_cast %0 : vector<2x32xf32> to vector<1x2x32xf32>
    %60 = vector.broadcast %59 : vector<1x2x32xf32> to vector<8x2x32xf32>
    %61 = arith.mulf %58, %60 : vector<8x2x32xf32>
    %cst_46 = arith.constant dense<0.000000e+00> : vector<8x32xf32>
    %62 = vector.multi_reduction <add>, %61, %cst_46 [1] : vector<8x2x32xf32> to vector<8x32xf32>
    %cst_47 = arith.constant dense<0.000000e+00> : vector<8x16xf32>
    %63 = tpu.matmul %62, %1, %cst_47 {dimension_numbers = #tpu.dot_dimension_numbers<[1], [0], [0], [1], [0, 0, 1, 1], [], []>} : vector<8x32xf32>, vector<32x16xf32>, vector<8x16xf32> -> vector<8x16xf32>
    %64 = arith.truncf %63 : vector<8x16xf32> to vector<8x16xbf16>
    %c5_48 = arith.constant 5 : index
    %c0_49 = arith.constant 0 : index
    %c0_50 = arith.constant 0 : index
    %65 = vector.load %arg4[%c5_48, %c0_49, %c0_50] : memref<32x16x32xbf16, #tpu.memory_space<vmem>>, vector<1x16x32xbf16>
    %66 = vector.shape_cast %65 : vector<1x16x32xbf16> to vector<16x32xbf16>
    %cst_51 = arith.constant dense<0.000000e+00> : vector<8x32xf32>
    %67 = tpu.matmul %64, %66, %cst_51 {dimension_numbers = #tpu.dot_dimension_numbers<[1], [0], [0], [1], [0, 0, 1, 1], [], []>} : vector<8x16xbf16>, vector<16x32xbf16>, vector<8x32xf32> -> vector<8x32xf32>
    %68 = arith.addf %57, %67 : vector<8x32xf32>
    %c0_52 = arith.constant 0 : index
    %c6 = arith.constant 6 : index
    %c0_53 = arith.constant 0 : index
    %69 = tpu.strided_load %arg1[%c0_52, %c6, %c0_53] {strides = array<i32: 1, 16, 1>} : memref<8x64x32xf32, #tpu.memory_space<vmem>>, vector<8x2x32xf32>
    %70 = vector.shape_cast %0 : vector<2x32xf32> to vector<1x2x32xf32>
    %71 = vector.broadcast %70 : vector<1x2x32xf32> to vector<8x2x32xf32>
    %72 = arith.mulf %69, %71 : vector<8x2x32xf32>
    %cst_54 = arith.constant dense<0.000000e+00> : vector<8x32xf32>
    %73 = vector.multi_reduction <add>, %72, %cst_54 [1] : vector<8x2x32xf32> to vector<8x32xf32>
    %cst_55 = arith.constant dense<0.000000e+00> : vector<8x16xf32>
    %74 = tpu.matmul %73, %1, %cst_55 {dimension_numbers = #tpu.dot_dimension_numbers<[1], [0], [0], [1], [0, 0, 1, 1], [], []>} : vector<8x32xf32>, vector<32x16xf32>, vector<8x16xf32> -> vector<8x16xf32>
    %75 = arith.truncf %74 : vector<8x16xf32> to vector<8x16xbf16>
    %c6_56 = arith.constant 6 : index
    %c0_57 = arith.constant 0 : index
    %c0_58 = arith.constant 0 : index
    %76 = vector.load %arg4[%c6_56, %c0_57, %c0_58] : memref<32x16x32xbf16, #tpu.memory_space<vmem>>, vector<1x16x32xbf16>
    %77 = vector.shape_cast %76 : vector<1x16x32xbf16> to vector<16x32xbf16>
    %cst_59 = arith.constant dense<0.000000e+00> : vector<8x32xf32>
    %78 = tpu.matmul %75, %77, %cst_59 {dimension_numbers = #tpu.dot_dimension_numbers<[1], [0], [0], [1], [0, 0, 1, 1], [], []>} : vector<8x16xbf16>, vector<16x32xbf16>, vector<8x32xf32> -> vector<8x32xf32>
    %79 = arith.addf %68, %78 : vector<8x32xf32>
    %c0_60 = arith.constant 0 : index
    %c7 = arith.constant 7 : index
    %c0_61 = arith.constant 0 : index
    %80 = tpu.strided_load %arg1[%c0_60, %c7, %c0_61] {strides = array<i32: 1, 16, 1>} : memref<8x64x32xf32, #tpu.memory_space<vmem>>, vector<8x2x32xf32>
    %81 = vector.shape_cast %0 : vector<2x32xf32> to vector<1x2x32xf32>
    %82 = vector.broadcast %81 : vector<1x2x32xf32> to vector<8x2x32xf32>
    %83 = arith.mulf %80, %82 : vector<8x2x32xf32>
    %cst_62 = arith.constant dense<0.000000e+00> : vector<8x32xf32>
    %84 = vector.multi_reduction <add>, %83, %cst_62 [1] : vector<8x2x32xf32> to vector<8x32xf32>
    %cst_63 = arith.constant dense<0.000000e+00> : vector<8x16xf32>
    %85 = tpu.matmul %84, %1, %cst_63 {dimension_numbers = #tpu.dot_dimension_numbers<[1], [0], [0], [1], [0, 0, 1, 1], [], []>} : vector<8x32xf32>, vector<32x16xf32>, vector<8x16xf32> -> vector<8x16xf32>
    %86 = arith.truncf %85 : vector<8x16xf32> to vector<8x16xbf16>
    %c7_64 = arith.constant 7 : index
    %c0_65 = arith.constant 0 : index
    %c0_66 = arith.constant 0 : index
    %87 = vector.load %arg4[%c7_64, %c0_65, %c0_66] : memref<32x16x32xbf16, #tpu.memory_space<vmem>>, vector<1x16x32xbf16>
    %88 = vector.shape_cast %87 : vector<1x16x32xbf16> to vector<16x32xbf16>
    %cst_67 = arith.constant dense<0.000000e+00> : vector<8x32xf32>
    %89 = tpu.matmul %86, %88, %cst_67 {dimension_numbers = #tpu.dot_dimension_numbers<[1], [0], [0], [1], [0, 0, 1, 1], [], []>} : vector<8x16xbf16>, vector<16x32xbf16>, vector<8x32xf32> -> vector<8x32xf32>
    %90 = arith.addf %79, %89 : vector<8x32xf32>
    %c0_68 = arith.constant 0 : index
    %c8 = arith.constant 8 : index
    %c0_69 = arith.constant 0 : index
    %91 = tpu.strided_load %arg1[%c0_68, %c8, %c0_69] {strides = array<i32: 1, 16, 1>} : memref<8x64x32xf32, #tpu.memory_space<vmem>>, vector<8x2x32xf32>
    %92 = vector.shape_cast %0 : vector<2x32xf32> to vector<1x2x32xf32>
    %93 = vector.broadcast %92 : vector<1x2x32xf32> to vector<8x2x32xf32>
    %94 = arith.mulf %91, %93 : vector<8x2x32xf32>
    %cst_70 = arith.constant dense<0.000000e+00> : vector<8x32xf32>
    %95 = vector.multi_reduction <add>, %94, %cst_70 [1] : vector<8x2x32xf32> to vector<8x32xf32>
    %cst_71 = arith.constant dense<0.000000e+00> : vector<8x16xf32>
    %96 = tpu.matmul %95, %1, %cst_71 {dimension_numbers = #tpu.dot_dimension_numbers<[1], [0], [0], [1], [0, 0, 1, 1], [], []>} : vector<8x32xf32>, vector<32x16xf32>, vector<8x16xf32> -> vector<8x16xf32>
    %97 = arith.truncf %96 : vector<8x16xf32> to vector<8x16xbf16>
    %c8_72 = arith.constant 8 : index
    %c0_73 = arith.constant 0 : index
    %c0_74 = arith.constant 0 : index
    %98 = vector.load %arg4[%c8_72, %c0_73, %c0_74] : memref<32x16x32xbf16, #tpu.memory_space<vmem>>, vector<1x16x32xbf16>
    %99 = vector.shape_cast %98 : vector<1x16x32xbf16> to vector<16x32xbf16>
    %cst_75 = arith.constant dense<0.000000e+00> : vector<8x32xf32>
    %100 = tpu.matmul %97, %99, %cst_75 {dimension_numbers = #tpu.dot_dimension_numbers<[1], [0], [0], [1], [0, 0, 1, 1], [], []>} : vector<8x16xbf16>, vector<16x32xbf16>, vector<8x32xf32> -> vector<8x32xf32>
    %101 = arith.addf %90, %100 : vector<8x32xf32>
    %c0_76 = arith.constant 0 : index
    %c9 = arith.constant 9 : index
    %c0_77 = arith.constant 0 : index
    %102 = tpu.strided_load %arg1[%c0_76, %c9, %c0_77] {strides = array<i32: 1, 16, 1>} : memref<8x64x32xf32, #tpu.memory_space<vmem>>, vector<8x2x32xf32>
    %103 = vector.shape_cast %0 : vector<2x32xf32> to vector<1x2x32xf32>
    %104 = vector.broadcast %103 : vector<1x2x32xf32> to vector<8x2x32xf32>
    %105 = arith.mulf %102, %104 : vector<8x2x32xf32>
    %cst_78 = arith.constant dense<0.000000e+00> : vector<8x32xf32>
    %106 = vector.multi_reduction <add>, %105, %cst_78 [1] : vector<8x2x32xf32> to vector<8x32xf32>
    %cst_79 = arith.constant dense<0.000000e+00> : vector<8x16xf32>
    %107 = tpu.matmul %106, %1, %cst_79 {dimension_numbers = #tpu.dot_dimension_numbers<[1], [0], [0], [1], [0, 0, 1, 1], [], []>} : vector<8x32xf32>, vector<32x16xf32>, vector<8x16xf32> -> vector<8x16xf32>
    %108 = arith.truncf %107 : vector<8x16xf32> to vector<8x16xbf16>
    %c9_80 = arith.constant 9 : index
    %c0_81 = arith.constant 0 : index
    %c0_82 = arith.constant 0 : index
    %109 = vector.load %arg4[%c9_80, %c0_81, %c0_82] : memref<32x16x32xbf16, #tpu.memory_space<vmem>>, vector<1x16x32xbf16>
    %110 = vector.shape_cast %109 : vector<1x16x32xbf16> to vector<16x32xbf16>
    %cst_83 = arith.constant dense<0.000000e+00> : vector<8x32xf32>
    %111 = tpu.matmul %108, %110, %cst_83 {dimension_numbers = #tpu.dot_dimension_numbers<[1], [0], [0], [1], [0, 0, 1, 1], [], []>} : vector<8x16xbf16>, vector<16x32xbf16>, vector<8x32xf32> -> vector<8x32xf32>
    %112 = arith.addf %101, %111 : vector<8x32xf32>
    %c0_84 = arith.constant 0 : index
    %c10 = arith.constant 10 : index
    %c0_85 = arith.constant 0 : index
    %113 = tpu.strided_load %arg1[%c0_84, %c10, %c0_85] {strides = array<i32: 1, 16, 1>} : memref<8x64x32xf32, #tpu.memory_space<vmem>>, vector<8x2x32xf32>
    %114 = vector.shape_cast %0 : vector<2x32xf32> to vector<1x2x32xf32>
    %115 = vector.broadcast %114 : vector<1x2x32xf32> to vector<8x2x32xf32>
    %116 = arith.mulf %113, %115 : vector<8x2x32xf32>
    %cst_86 = arith.constant dense<0.000000e+00> : vector<8x32xf32>
    %117 = vector.multi_reduction <add>, %116, %cst_86 [1] : vector<8x2x32xf32> to vector<8x32xf32>
    %cst_87 = arith.constant dense<0.000000e+00> : vector<8x16xf32>
    %118 = tpu.matmul %117, %1, %cst_87 {dimension_numbers = #tpu.dot_dimension_numbers<[1], [0], [0], [1], [0, 0, 1, 1], [], []>} : vector<8x32xf32>, vector<32x16xf32>, vector<8x16xf32> -> vector<8x16xf32>
    %119 = arith.truncf %118 : vector<8x16xf32> to vector<8x16xbf16>
    %c10_88 = arith.constant 10 : index
    %c0_89 = arith.constant 0 : index
    %c0_90 = arith.constant 0 : index
    %120 = vector.load %arg4[%c10_88, %c0_89, %c0_90] : memref<32x16x32xbf16, #tpu.memory_space<vmem>>, vector<1x16x32xbf16>
    %121 = vector.shape_cast %120 : vector<1x16x32xbf16> to vector<16x32xbf16>
    %cst_91 = arith.constant dense<0.000000e+00> : vector<8x32xf32>
    %122 = tpu.matmul %119, %121, %cst_91 {dimension_numbers = #tpu.dot_dimension_numbers<[1], [0], [0], [1], [0, 0, 1, 1], [], []>} : vector<8x16xbf16>, vector<16x32xbf16>, vector<8x32xf32> -> vector<8x32xf32>
    %123 = arith.addf %112, %122 : vector<8x32xf32>
    %c0_92 = arith.constant 0 : index
    %c11 = arith.constant 11 : index
    %c0_93 = arith.constant 0 : index
    %124 = tpu.strided_load %arg1[%c0_92, %c11, %c0_93] {strides = array<i32: 1, 16, 1>} : memref<8x64x32xf32, #tpu.memory_space<vmem>>, vector<8x2x32xf32>
    %125 = vector.shape_cast %0 : vector<2x32xf32> to vector<1x2x32xf32>
    %126 = vector.broadcast %125 : vector<1x2x32xf32> to vector<8x2x32xf32>
    %127 = arith.mulf %124, %126 : vector<8x2x32xf32>
    %cst_94 = arith.constant dense<0.000000e+00> : vector<8x32xf32>
    %128 = vector.multi_reduction <add>, %127, %cst_94 [1] : vector<8x2x32xf32> to vector<8x32xf32>
    %cst_95 = arith.constant dense<0.000000e+00> : vector<8x16xf32>
    %129 = tpu.matmul %128, %1, %cst_95 {dimension_numbers = #tpu.dot_dimension_numbers<[1], [0], [0], [1], [0, 0, 1, 1], [], []>} : vector<8x32xf32>, vector<32x16xf32>, vector<8x16xf32> -> vector<8x16xf32>
    %130 = arith.truncf %129 : vector<8x16xf32> to vector<8x16xbf16>
    %c11_96 = arith.constant 11 : index
    %c0_97 = arith.constant 0 : index
    %c0_98 = arith.constant 0 : index
    %131 = vector.load %arg4[%c11_96, %c0_97, %c0_98] : memref<32x16x32xbf16, #tpu.memory_space<vmem>>, vector<1x16x32xbf16>
    %132 = vector.shape_cast %131 : vector<1x16x32xbf16> to vector<16x32xbf16>
    %cst_99 = arith.constant dense<0.000000e+00> : vector<8x32xf32>
    %133 = tpu.matmul %130, %132, %cst_99 {dimension_numbers = #tpu.dot_dimension_numbers<[1], [0], [0], [1], [0, 0, 1, 1], [], []>} : vector<8x16xbf16>, vector<16x32xbf16>, vector<8x32xf32> -> vector<8x32xf32>
    %134 = arith.addf %123, %133 : vector<8x32xf32>
    %c0_100 = arith.constant 0 : index
    %c12 = arith.constant 12 : index
    %c0_101 = arith.constant 0 : index
    %135 = tpu.strided_load %arg1[%c0_100, %c12, %c0_101] {strides = array<i32: 1, 16, 1>} : memref<8x64x32xf32, #tpu.memory_space<vmem>>, vector<8x2x32xf32>
    %136 = vector.shape_cast %0 : vector<2x32xf32> to vector<1x2x32xf32>
    %137 = vector.broadcast %136 : vector<1x2x32xf32> to vector<8x2x32xf32>
    %138 = arith.mulf %135, %137 : vector<8x2x32xf32>
    %cst_102 = arith.constant dense<0.000000e+00> : vector<8x32xf32>
    %139 = vector.multi_reduction <add>, %138, %cst_102 [1] : vector<8x2x32xf32> to vector<8x32xf32>
    %cst_103 = arith.constant dense<0.000000e+00> : vector<8x16xf32>
    %140 = tpu.matmul %139, %1, %cst_103 {dimension_numbers = #tpu.dot_dimension_numbers<[1], [0], [0], [1], [0, 0, 1, 1], [], []>} : vector<8x32xf32>, vector<32x16xf32>, vector<8x16xf32> -> vector<8x16xf32>
    %141 = arith.truncf %140 : vector<8x16xf32> to vector<8x16xbf16>
    %c12_104 = arith.constant 12 : index
    %c0_105 = arith.constant 0 : index
    %c0_106 = arith.constant 0 : index
    %142 = vector.load %arg4[%c12_104, %c0_105, %c0_106] : memref<32x16x32xbf16, #tpu.memory_space<vmem>>, vector<1x16x32xbf16>
    %143 = vector.shape_cast %142 : vector<1x16x32xbf16> to vector<16x32xbf16>
    %cst_107 = arith.constant dense<0.000000e+00> : vector<8x32xf32>
    %144 = tpu.matmul %141, %143, %cst_107 {dimension_numbers = #tpu.dot_dimension_numbers<[1], [0], [0], [1], [0, 0, 1, 1], [], []>} : vector<8x16xbf16>, vector<16x32xbf16>, vector<8x32xf32> -> vector<8x32xf32>
    %145 = arith.addf %134, %144 : vector<8x32xf32>
    %c0_108 = arith.constant 0 : index
    %c13 = arith.constant 13 : index
    %c0_109 = arith.constant 0 : index
    %146 = tpu.strided_load %arg1[%c0_108, %c13, %c0_109] {strides = array<i32: 1, 16, 1>} : memref<8x64x32xf32, #tpu.memory_space<vmem>>, vector<8x2x32xf32>
    %147 = vector.shape_cast %0 : vector<2x32xf32> to vector<1x2x32xf32>
    %148 = vector.broadcast %147 : vector<1x2x32xf32> to vector<8x2x32xf32>
    %149 = arith.mulf %146, %148 : vector<8x2x32xf32>
    %cst_110 = arith.constant dense<0.000000e+00> : vector<8x32xf32>
    %150 = vector.multi_reduction <add>, %149, %cst_110 [1] : vector<8x2x32xf32> to vector<8x32xf32>
    %cst_111 = arith.constant dense<0.000000e+00> : vector<8x16xf32>
    %151 = tpu.matmul %150, %1, %cst_111 {dimension_numbers = #tpu.dot_dimension_numbers<[1], [0], [0], [1], [0, 0, 1, 1], [], []>} : vector<8x32xf32>, vector<32x16xf32>, vector<8x16xf32> -> vector<8x16xf32>
    %152 = arith.truncf %151 : vector<8x16xf32> to vector<8x16xbf16>
    %c13_112 = arith.constant 13 : index
    %c0_113 = arith.constant 0 : index
    %c0_114 = arith.constant 0 : index
    %153 = vector.load %arg4[%c13_112, %c0_113, %c0_114] : memref<32x16x32xbf16, #tpu.memory_space<vmem>>, vector<1x16x32xbf16>
    %154 = vector.shape_cast %153 : vector<1x16x32xbf16> to vector<16x32xbf16>
    %cst_115 = arith.constant dense<0.000000e+00> : vector<8x32xf32>
    %155 = tpu.matmul %152, %154, %cst_115 {dimension_numbers = #tpu.dot_dimension_numbers<[1], [0], [0], [1], [0, 0, 1, 1], [], []>} : vector<8x16xbf16>, vector<16x32xbf16>, vector<8x32xf32> -> vector<8x32xf32>
    %156 = arith.addf %145, %155 : vector<8x32xf32>
    %c0_116 = arith.constant 0 : index
    %c14 = arith.constant 14 : index
    %c0_117 = arith.constant 0 : index
    %157 = tpu.strided_load %arg1[%c0_116, %c14, %c0_117] {strides = array<i32: 1, 16, 1>} : memref<8x64x32xf32, #tpu.memory_space<vmem>>, vector<8x2x32xf32>
    %158 = vector.shape_cast %0 : vector<2x32xf32> to vector<1x2x32xf32>
    %159 = vector.broadcast %158 : vector<1x2x32xf32> to vector<8x2x32xf32>
    %160 = arith.mulf %157, %159 : vector<8x2x32xf32>
    %cst_118 = arith.constant dense<0.000000e+00> : vector<8x32xf32>
    %161 = vector.multi_reduction <add>, %160, %cst_118 [1] : vector<8x2x32xf32> to vector<8x32xf32>
    %cst_119 = arith.constant dense<0.000000e+00> : vector<8x16xf32>
    %162 = tpu.matmul %161, %1, %cst_119 {dimension_numbers = #tpu.dot_dimension_numbers<[1], [0], [0], [1], [0, 0, 1, 1], [], []>} : vector<8x32xf32>, vector<32x16xf32>, vector<8x16xf32> -> vector<8x16xf32>
    %163 = arith.truncf %162 : vector<8x16xf32> to vector<8x16xbf16>
    %c14_120 = arith.constant 14 : index
    %c0_121 = arith.constant 0 : index
    %c0_122 = arith.constant 0 : index
    %164 = vector.load %arg4[%c14_120, %c0_121, %c0_122] : memref<32x16x32xbf16, #tpu.memory_space<vmem>>, vector<1x16x32xbf16>
    %165 = vector.shape_cast %164 : vector<1x16x32xbf16> to vector<16x32xbf16>
    %cst_123 = arith.constant dense<0.000000e+00> : vector<8x32xf32>
    %166 = tpu.matmul %163, %165, %cst_123 {dimension_numbers = #tpu.dot_dimension_numbers<[1], [0], [0], [1], [0, 0, 1, 1], [], []>} : vector<8x16xbf16>, vector<16x32xbf16>, vector<8x32xf32> -> vector<8x32xf32>
    %167 = arith.addf %156, %166 : vector<8x32xf32>
    %c0_124 = arith.constant 0 : index
    %c15 = arith.constant 15 : index
    %c0_125 = arith.constant 0 : index
    %168 = tpu.strided_load %arg1[%c0_124, %c15, %c0_125] {strides = array<i32: 1, 16, 1>} : memref<8x64x32xf32, #tpu.memory_space<vmem>>, vector<8x2x32xf32>
    %169 = vector.shape_cast %0 : vector<2x32xf32> to vector<1x2x32xf32>
    %170 = vector.broadcast %169 : vector<1x2x32xf32> to vector<8x2x32xf32>
    %171 = arith.mulf %168, %170 : vector<8x2x32xf32>
    %cst_126 = arith.constant dense<0.000000e+00> : vector<8x32xf32>
    %172 = vector.multi_reduction <add>, %171, %cst_126 [1] : vector<8x2x32xf32> to vector<8x32xf32>
    %cst_127 = arith.constant dense<0.000000e+00> : vector<8x16xf32>
    %173 = tpu.matmul %172, %1, %cst_127 {dimension_numbers = #tpu.dot_dimension_numbers<[1], [0], [0], [1], [0, 0, 1, 1], [], []>} : vector<8x32xf32>, vector<32x16xf32>, vector<8x16xf32> -> vector<8x16xf32>
    %174 = arith.truncf %173 : vector<8x16xf32> to vector<8x16xbf16>
    %c15_128 = arith.constant 15 : index
    %c0_129 = arith.constant 0 : index
    %c0_130 = arith.constant 0 : index
    %175 = vector.load %arg4[%c15_128, %c0_129, %c0_130] : memref<32x16x32xbf16, #tpu.memory_space<vmem>>, vector<1x16x32xbf16>
    %176 = vector.shape_cast %175 : vector<1x16x32xbf16> to vector<16x32xbf16>
    %cst_131 = arith.constant dense<0.000000e+00> : vector<8x32xf32>
    %177 = tpu.matmul %174, %176, %cst_131 {dimension_numbers = #tpu.dot_dimension_numbers<[1], [0], [0], [1], [0, 0, 1, 1], [], []>} : vector<8x16xbf16>, vector<16x32xbf16>, vector<8x32xf32> -> vector<8x32xf32>
    %178 = arith.addf %167, %177 : vector<8x32xf32>
    %c0_132 = arith.constant 0 : index
    %c32 = arith.constant 32 : index
    %c0_133 = arith.constant 0 : index
    %179 = tpu.strided_load %arg1[%c0_132, %c32, %c0_133] {strides = array<i32: 1, 16, 1>} : memref<8x64x32xf32, #tpu.memory_space<vmem>>, vector<8x2x32xf32>
    %180 = vector.shape_cast %0 : vector<2x32xf32> to vector<1x2x32xf32>
    %181 = vector.broadcast %180 : vector<1x2x32xf32> to vector<8x2x32xf32>
    %182 = arith.mulf %179, %181 : vector<8x2x32xf32>
    %cst_134 = arith.constant dense<0.000000e+00> : vector<8x32xf32>
    %183 = vector.multi_reduction <add>, %182, %cst_134 [1] : vector<8x2x32xf32> to vector<8x32xf32>
    %cst_135 = arith.constant dense<0.000000e+00> : vector<8x16xf32>
    %184 = tpu.matmul %183, %1, %cst_135 {dimension_numbers = #tpu.dot_dimension_numbers<[1], [0], [0], [1], [0, 0, 1, 1], [], []>} : vector<8x32xf32>, vector<32x16xf32>, vector<8x16xf32> -> vector<8x16xf32>
    %185 = arith.truncf %184 : vector<8x16xf32> to vector<8x16xbf16>
    %c16 = arith.constant 16 : index
    %c0_136 = arith.constant 0 : index
    %c0_137 = arith.constant 0 : index
    %186 = vector.load %arg4[%c16, %c0_136, %c0_137] : memref<32x16x32xbf16, #tpu.memory_space<vmem>>, vector<1x16x32xbf16>
    %187 = vector.shape_cast %186 : vector<1x16x32xbf16> to vector<16x32xbf16>
    %cst_138 = arith.constant dense<0.000000e+00> : vector<8x32xf32>
    %188 = tpu.matmul %185, %187, %cst_138 {dimension_numbers = #tpu.dot_dimension_numbers<[1], [0], [0], [1], [0, 0, 1, 1], [], []>} : vector<8x16xbf16>, vector<16x32xbf16>, vector<8x32xf32> -> vector<8x32xf32>
    %189 = arith.addf %178, %188 : vector<8x32xf32>
    %c0_139 = arith.constant 0 : index
    %c33 = arith.constant 33 : index
    %c0_140 = arith.constant 0 : index
    %190 = tpu.strided_load %arg1[%c0_139, %c33, %c0_140] {strides = array<i32: 1, 16, 1>} : memref<8x64x32xf32, #tpu.memory_space<vmem>>, vector<8x2x32xf32>
    %191 = vector.shape_cast %0 : vector<2x32xf32> to vector<1x2x32xf32>
    %192 = vector.broadcast %191 : vector<1x2x32xf32> to vector<8x2x32xf32>
    %193 = arith.mulf %190, %192 : vector<8x2x32xf32>
    %cst_141 = arith.constant dense<0.000000e+00> : vector<8x32xf32>
    %194 = vector.multi_reduction <add>, %193, %cst_141 [1] : vector<8x2x32xf32> to vector<8x32xf32>
    %cst_142 = arith.constant dense<0.000000e+00> : vector<8x16xf32>
    %195 = tpu.matmul %194, %1, %cst_142 {dimension_numbers = #tpu.dot_dimension_numbers<[1], [0], [0], [1], [0, 0, 1, 1], [], []>} : vector<8x32xf32>, vector<32x16xf32>, vector<8x16xf32> -> vector<8x16xf32>
    %196 = arith.truncf %195 : vector<8x16xf32> to vector<8x16xbf16>
    %c17 = arith.constant 17 : index
    %c0_143 = arith.constant 0 : index
    %c0_144 = arith.constant 0 : index
    %197 = vector.load %arg4[%c17, %c0_143, %c0_144] : memref<32x16x32xbf16, #tpu.memory_space<vmem>>, vector<1x16x32xbf16>
    %198 = vector.shape_cast %197 : vector<1x16x32xbf16> to vector<16x32xbf16>
    %cst_145 = arith.constant dense<0.000000e+00> : vector<8x32xf32>
    %199 = tpu.matmul %196, %198, %cst_145 {dimension_numbers = #tpu.dot_dimension_numbers<[1], [0], [0], [1], [0, 0, 1, 1], [], []>} : vector<8x16xbf16>, vector<16x32xbf16>, vector<8x32xf32> -> vector<8x32xf32>
    %200 = arith.addf %189, %199 : vector<8x32xf32>
    %c0_146 = arith.constant 0 : index
    %c34 = arith.constant 34 : index
    %c0_147 = arith.constant 0 : index
    %201 = tpu.strided_load %arg1[%c0_146, %c34, %c0_147] {strides = array<i32: 1, 16, 1>} : memref<8x64x32xf32, #tpu.memory_space<vmem>>, vector<8x2x32xf32>
    %202 = vector.shape_cast %0 : vector<2x32xf32> to vector<1x2x32xf32>
    %203 = vector.broadcast %202 : vector<1x2x32xf32> to vector<8x2x32xf32>
    %204 = arith.mulf %201, %203 : vector<8x2x32xf32>
    %cst_148 = arith.constant dense<0.000000e+00> : vector<8x32xf32>
    %205 = vector.multi_reduction <add>, %204, %cst_148 [1] : vector<8x2x32xf32> to vector<8x32xf32>
    %cst_149 = arith.constant dense<0.000000e+00> : vector<8x16xf32>
    %206 = tpu.matmul %205, %1, %cst_149 {dimension_numbers = #tpu.dot_dimension_numbers<[1], [0], [0], [1], [0, 0, 1, 1], [], []>} : vector<8x32xf32>, vector<32x16xf32>, vector<8x16xf32> -> vector<8x16xf32>
    %207 = arith.truncf %206 : vector<8x16xf32> to vector<8x16xbf16>
    %c18 = arith.constant 18 : index
    %c0_150 = arith.constant 0 : index
    %c0_151 = arith.constant 0 : index
    %208 = vector.load %arg4[%c18, %c0_150, %c0_151] : memref<32x16x32xbf16, #tpu.memory_space<vmem>>, vector<1x16x32xbf16>
    %209 = vector.shape_cast %208 : vector<1x16x32xbf16> to vector<16x32xbf16>
    %cst_152 = arith.constant dense<0.000000e+00> : vector<8x32xf32>
    %210 = tpu.matmul %207, %209, %cst_152 {dimension_numbers = #tpu.dot_dimension_numbers<[1], [0], [0], [1], [0, 0, 1, 1], [], []>} : vector<8x16xbf16>, vector<16x32xbf16>, vector<8x32xf32> -> vector<8x32xf32>
    %211 = arith.addf %200, %210 : vector<8x32xf32>
    %c0_153 = arith.constant 0 : index
    %c35 = arith.constant 35 : index
    %c0_154 = arith.constant 0 : index
    %212 = tpu.strided_load %arg1[%c0_153, %c35, %c0_154] {strides = array<i32: 1, 16, 1>} : memref<8x64x32xf32, #tpu.memory_space<vmem>>, vector<8x2x32xf32>
    %213 = vector.shape_cast %0 : vector<2x32xf32> to vector<1x2x32xf32>
    %214 = vector.broadcast %213 : vector<1x2x32xf32> to vector<8x2x32xf32>
    %215 = arith.mulf %212, %214 : vector<8x2x32xf32>
    %cst_155 = arith.constant dense<0.000000e+00> : vector<8x32xf32>
    %216 = vector.multi_reduction <add>, %215, %cst_155 [1] : vector<8x2x32xf32> to vector<8x32xf32>
    %cst_156 = arith.constant dense<0.000000e+00> : vector<8x16xf32>
    %217 = tpu.matmul %216, %1, %cst_156 {dimension_numbers = #tpu.dot_dimension_numbers<[1], [0], [0], [1], [0, 0, 1, 1], [], []>} : vector<8x32xf32>, vector<32x16xf32>, vector<8x16xf32> -> vector<8x16xf32>
    %218 = arith.truncf %217 : vector<8x16xf32> to vector<8x16xbf16>
    %c19 = arith.constant 19 : index
    %c0_157 = arith.constant 0 : index
    %c0_158 = arith.constant 0 : index
    %219 = vector.load %arg4[%c19, %c0_157, %c0_158] : memref<32x16x32xbf16, #tpu.memory_space<vmem>>, vector<1x16x32xbf16>
    %220 = vector.shape_cast %219 : vector<1x16x32xbf16> to vector<16x32xbf16>
    %cst_159 = arith.constant dense<0.000000e+00> : vector<8x32xf32>
    %221 = tpu.matmul %218, %220, %cst_159 {dimension_numbers = #tpu.dot_dimension_numbers<[1], [0], [0], [1], [0, 0, 1, 1], [], []>} : vector<8x16xbf16>, vector<16x32xbf16>, vector<8x32xf32> -> vector<8x32xf32>
    %222 = arith.addf %211, %221 : vector<8x32xf32>
    %c0_160 = arith.constant 0 : index
    %c36 = arith.constant 36 : index
    %c0_161 = arith.constant 0 : index
    %223 = tpu.strided_load %arg1[%c0_160, %c36, %c0_161] {strides = array<i32: 1, 16, 1>} : memref<8x64x32xf32, #tpu.memory_space<vmem>>, vector<8x2x32xf32>
    %224 = vector.shape_cast %0 : vector<2x32xf32> to vector<1x2x32xf32>
    %225 = vector.broadcast %224 : vector<1x2x32xf32> to vector<8x2x32xf32>
    %226 = arith.mulf %223, %225 : vector<8x2x32xf32>
    %cst_162 = arith.constant dense<0.000000e+00> : vector<8x32xf32>
    %227 = vector.multi_reduction <add>, %226, %cst_162 [1] : vector<8x2x32xf32> to vector<8x32xf32>
    %cst_163 = arith.constant dense<0.000000e+00> : vector<8x16xf32>
    %228 = tpu.matmul %227, %1, %cst_163 {dimension_numbers = #tpu.dot_dimension_numbers<[1], [0], [0], [1], [0, 0, 1, 1], [], []>} : vector<8x32xf32>, vector<32x16xf32>, vector<8x16xf32> -> vector<8x16xf32>
    %229 = arith.truncf %228 : vector<8x16xf32> to vector<8x16xbf16>
    %c20 = arith.constant 20 : index
    %c0_164 = arith.constant 0 : index
    %c0_165 = arith.constant 0 : index
    %230 = vector.load %arg4[%c20, %c0_164, %c0_165] : memref<32x16x32xbf16, #tpu.memory_space<vmem>>, vector<1x16x32xbf16>
    %231 = vector.shape_cast %230 : vector<1x16x32xbf16> to vector<16x32xbf16>
    %cst_166 = arith.constant dense<0.000000e+00> : vector<8x32xf32>
    %232 = tpu.matmul %229, %231, %cst_166 {dimension_numbers = #tpu.dot_dimension_numbers<[1], [0], [0], [1], [0, 0, 1, 1], [], []>} : vector<8x16xbf16>, vector<16x32xbf16>, vector<8x32xf32> -> vector<8x32xf32>
    %233 = arith.addf %222, %232 : vector<8x32xf32>
    %c0_167 = arith.constant 0 : index
    %c37 = arith.constant 37 : index
    %c0_168 = arith.constant 0 : index
    %234 = tpu.strided_load %arg1[%c0_167, %c37, %c0_168] {strides = array<i32: 1, 16, 1>} : memref<8x64x32xf32, #tpu.memory_space<vmem>>, vector<8x2x32xf32>
    %235 = vector.shape_cast %0 : vector<2x32xf32> to vector<1x2x32xf32>
    %236 = vector.broadcast %235 : vector<1x2x32xf32> to vector<8x2x32xf32>
    %237 = arith.mulf %234, %236 : vector<8x2x32xf32>
    %cst_169 = arith.constant dense<0.000000e+00> : vector<8x32xf32>
    %238 = vector.multi_reduction <add>, %237, %cst_169 [1] : vector<8x2x32xf32> to vector<8x32xf32>
    %cst_170 = arith.constant dense<0.000000e+00> : vector<8x16xf32>
    %239 = tpu.matmul %238, %1, %cst_170 {dimension_numbers = #tpu.dot_dimension_numbers<[1], [0], [0], [1], [0, 0, 1, 1], [], []>} : vector<8x32xf32>, vector<32x16xf32>, vector<8x16xf32> -> vector<8x16xf32>
    %240 = arith.truncf %239 : vector<8x16xf32> to vector<8x16xbf16>
    %c21 = arith.constant 21 : index
    %c0_171 = arith.constant 0 : index
    %c0_172 = arith.constant 0 : index
    %241 = vector.load %arg4[%c21, %c0_171, %c0_172] : memref<32x16x32xbf16, #tpu.memory_space<vmem>>, vector<1x16x32xbf16>
    %242 = vector.shape_cast %241 : vector<1x16x32xbf16> to vector<16x32xbf16>
    %cst_173 = arith.constant dense<0.000000e+00> : vector<8x32xf32>
    %243 = tpu.matmul %240, %242, %cst_173 {dimension_numbers = #tpu.dot_dimension_numbers<[1], [0], [0], [1], [0, 0, 1, 1], [], []>} : vector<8x16xbf16>, vector<16x32xbf16>, vector<8x32xf32> -> vector<8x32xf32>
    %244 = arith.addf %233, %243 : vector<8x32xf32>
    %c0_174 = arith.constant 0 : index
    %c38 = arith.constant 38 : index
    %c0_175 = arith.constant 0 : index
    %245 = tpu.strided_load %arg1[%c0_174, %c38, %c0_175] {strides = array<i32: 1, 16, 1>} : memref<8x64x32xf32, #tpu.memory_space<vmem>>, vector<8x2x32xf32>
    %246 = vector.shape_cast %0 : vector<2x32xf32> to vector<1x2x32xf32>
    %247 = vector.broadcast %246 : vector<1x2x32xf32> to vector<8x2x32xf32>
    %248 = arith.mulf %245, %247 : vector<8x2x32xf32>
    %cst_176 = arith.constant dense<0.000000e+00> : vector<8x32xf32>
    %249 = vector.multi_reduction <add>, %248, %cst_176 [1] : vector<8x2x32xf32> to vector<8x32xf32>
    %cst_177 = arith.constant dense<0.000000e+00> : vector<8x16xf32>
    %250 = tpu.matmul %249, %1, %cst_177 {dimension_numbers = #tpu.dot_dimension_numbers<[1], [0], [0], [1], [0, 0, 1, 1], [], []>} : vector<8x32xf32>, vector<32x16xf32>, vector<8x16xf32> -> vector<8x16xf32>
    %251 = arith.truncf %250 : vector<8x16xf32> to vector<8x16xbf16>
    %c22 = arith.constant 22 : index
    %c0_178 = arith.constant 0 : index
    %c0_179 = arith.constant 0 : index
    %252 = vector.load %arg4[%c22, %c0_178, %c0_179] : memref<32x16x32xbf16, #tpu.memory_space<vmem>>, vector<1x16x32xbf16>
    %253 = vector.shape_cast %252 : vector<1x16x32xbf16> to vector<16x32xbf16>
    %cst_180 = arith.constant dense<0.000000e+00> : vector<8x32xf32>
    %254 = tpu.matmul %251, %253, %cst_180 {dimension_numbers = #tpu.dot_dimension_numbers<[1], [0], [0], [1], [0, 0, 1, 1], [], []>} : vector<8x16xbf16>, vector<16x32xbf16>, vector<8x32xf32> -> vector<8x32xf32>
    %255 = arith.addf %244, %254 : vector<8x32xf32>
    %c0_181 = arith.constant 0 : index
    %c39 = arith.constant 39 : index
    %c0_182 = arith.constant 0 : index
    %256 = tpu.strided_load %arg1[%c0_181, %c39, %c0_182] {strides = array<i32: 1, 16, 1>} : memref<8x64x32xf32, #tpu.memory_space<vmem>>, vector<8x2x32xf32>
    %257 = vector.shape_cast %0 : vector<2x32xf32> to vector<1x2x32xf32>
    %258 = vector.broadcast %257 : vector<1x2x32xf32> to vector<8x2x32xf32>
    %259 = arith.mulf %256, %258 : vector<8x2x32xf32>
    %cst_183 = arith.constant dense<0.000000e+00> : vector<8x32xf32>
    %260 = vector.multi_reduction <add>, %259, %cst_183 [1] : vector<8x2x32xf32> to vector<8x32xf32>
    %cst_184 = arith.constant dense<0.000000e+00> : vector<8x16xf32>
    %261 = tpu.matmul %260, %1, %cst_184 {dimension_numbers = #tpu.dot_dimension_numbers<[1], [0], [0], [1], [0, 0, 1, 1], [], []>} : vector<8x32xf32>, vector<32x16xf32>, vector<8x16xf32> -> vector<8x16xf32>
    %262 = arith.truncf %261 : vector<8x16xf32> to vector<8x16xbf16>
    %c23 = arith.constant 23 : index
    %c0_185 = arith.constant 0 : index
    %c0_186 = arith.constant 0 : index
    %263 = vector.load %arg4[%c23, %c0_185, %c0_186] : memref<32x16x32xbf16, #tpu.memory_space<vmem>>, vector<1x16x32xbf16>
    %264 = vector.shape_cast %263 : vector<1x16x32xbf16> to vector<16x32xbf16>
    %cst_187 = arith.constant dense<0.000000e+00> : vector<8x32xf32>
    %265 = tpu.matmul %262, %264, %cst_187 {dimension_numbers = #tpu.dot_dimension_numbers<[1], [0], [0], [1], [0, 0, 1, 1], [], []>} : vector<8x16xbf16>, vector<16x32xbf16>, vector<8x32xf32> -> vector<8x32xf32>
    %266 = arith.addf %255, %265 : vector<8x32xf32>
    %c0_188 = arith.constant 0 : index
    %c40 = arith.constant 40 : index
    %c0_189 = arith.constant 0 : index
    %267 = tpu.strided_load %arg1[%c0_188, %c40, %c0_189] {strides = array<i32: 1, 16, 1>} : memref<8x64x32xf32, #tpu.memory_space<vmem>>, vector<8x2x32xf32>
    %268 = vector.shape_cast %0 : vector<2x32xf32> to vector<1x2x32xf32>
    %269 = vector.broadcast %268 : vector<1x2x32xf32> to vector<8x2x32xf32>
    %270 = arith.mulf %267, %269 : vector<8x2x32xf32>
    %cst_190 = arith.constant dense<0.000000e+00> : vector<8x32xf32>
    %271 = vector.multi_reduction <add>, %270, %cst_190 [1] : vector<8x2x32xf32> to vector<8x32xf32>
    %cst_191 = arith.constant dense<0.000000e+00> : vector<8x16xf32>
    %272 = tpu.matmul %271, %1, %cst_191 {dimension_numbers = #tpu.dot_dimension_numbers<[1], [0], [0], [1], [0, 0, 1, 1], [], []>} : vector<8x32xf32>, vector<32x16xf32>, vector<8x16xf32> -> vector<8x16xf32>
    %273 = arith.truncf %272 : vector<8x16xf32> to vector<8x16xbf16>
    %c24 = arith.constant 24 : index
    %c0_192 = arith.constant 0 : index
    %c0_193 = arith.constant 0 : index
    %274 = vector.load %arg4[%c24, %c0_192, %c0_193] : memref<32x16x32xbf16, #tpu.memory_space<vmem>>, vector<1x16x32xbf16>
    %275 = vector.shape_cast %274 : vector<1x16x32xbf16> to vector<16x32xbf16>
    %cst_194 = arith.constant dense<0.000000e+00> : vector<8x32xf32>
    %276 = tpu.matmul %273, %275, %cst_194 {dimension_numbers = #tpu.dot_dimension_numbers<[1], [0], [0], [1], [0, 0, 1, 1], [], []>} : vector<8x16xbf16>, vector<16x32xbf16>, vector<8x32xf32> -> vector<8x32xf32>
    %277 = arith.addf %266, %276 : vector<8x32xf32>
    %c0_195 = arith.constant 0 : index
    %c41 = arith.constant 41 : index
    %c0_196 = arith.constant 0 : index
    %278 = tpu.strided_load %arg1[%c0_195, %c41, %c0_196] {strides = array<i32: 1, 16, 1>} : memref<8x64x32xf32, #tpu.memory_space<vmem>>, vector<8x2x32xf32>
    %279 = vector.shape_cast %0 : vector<2x32xf32> to vector<1x2x32xf32>
    %280 = vector.broadcast %279 : vector<1x2x32xf32> to vector<8x2x32xf32>
    %281 = arith.mulf %278, %280 : vector<8x2x32xf32>
    %cst_197 = arith.constant dense<0.000000e+00> : vector<8x32xf32>
    %282 = vector.multi_reduction <add>, %281, %cst_197 [1] : vector<8x2x32xf32> to vector<8x32xf32>
    %cst_198 = arith.constant dense<0.000000e+00> : vector<8x16xf32>
    %283 = tpu.matmul %282, %1, %cst_198 {dimension_numbers = #tpu.dot_dimension_numbers<[1], [0], [0], [1], [0, 0, 1, 1], [], []>} : vector<8x32xf32>, vector<32x16xf32>, vector<8x16xf32> -> vector<8x16xf32>
    %284 = arith.truncf %283 : vector<8x16xf32> to vector<8x16xbf16>
    %c25 = arith.constant 25 : index
    %c0_199 = arith.constant 0 : index
    %c0_200 = arith.constant 0 : index
    %285 = vector.load %arg4[%c25, %c0_199, %c0_200] : memref<32x16x32xbf16, #tpu.memory_space<vmem>>, vector<1x16x32xbf16>
    %286 = vector.shape_cast %285 : vector<1x16x32xbf16> to vector<16x32xbf16>
    %cst_201 = arith.constant dense<0.000000e+00> : vector<8x32xf32>
    %287 = tpu.matmul %284, %286, %cst_201 {dimension_numbers = #tpu.dot_dimension_numbers<[1], [0], [0], [1], [0, 0, 1, 1], [], []>} : vector<8x16xbf16>, vector<16x32xbf16>, vector<8x32xf32> -> vector<8x32xf32>
    %288 = arith.addf %277, %287 : vector<8x32xf32>
    %c0_202 = arith.constant 0 : index
    %c42 = arith.constant 42 : index
    %c0_203 = arith.constant 0 : index
    %289 = tpu.strided_load %arg1[%c0_202, %c42, %c0_203] {strides = array<i32: 1, 16, 1>} : memref<8x64x32xf32, #tpu.memory_space<vmem>>, vector<8x2x32xf32>
    %290 = vector.shape_cast %0 : vector<2x32xf32> to vector<1x2x32xf32>
    %291 = vector.broadcast %290 : vector<1x2x32xf32> to vector<8x2x32xf32>
    %292 = arith.mulf %289, %291 : vector<8x2x32xf32>
    %cst_204 = arith.constant dense<0.000000e+00> : vector<8x32xf32>
    %293 = vector.multi_reduction <add>, %292, %cst_204 [1] : vector<8x2x32xf32> to vector<8x32xf32>
    %cst_205 = arith.constant dense<0.000000e+00> : vector<8x16xf32>
    %294 = tpu.matmul %293, %1, %cst_205 {dimension_numbers = #tpu.dot_dimension_numbers<[1], [0], [0], [1], [0, 0, 1, 1], [], []>} : vector<8x32xf32>, vector<32x16xf32>, vector<8x16xf32> -> vector<8x16xf32>
    %295 = arith.truncf %294 : vector<8x16xf32> to vector<8x16xbf16>
    %c26 = arith.constant 26 : index
    %c0_206 = arith.constant 0 : index
    %c0_207 = arith.constant 0 : index
    %296 = vector.load %arg4[%c26, %c0_206, %c0_207] : memref<32x16x32xbf16, #tpu.memory_space<vmem>>, vector<1x16x32xbf16>
    %297 = vector.shape_cast %296 : vector<1x16x32xbf16> to vector<16x32xbf16>
    %cst_208 = arith.constant dense<0.000000e+00> : vector<8x32xf32>
    %298 = tpu.matmul %295, %297, %cst_208 {dimension_numbers = #tpu.dot_dimension_numbers<[1], [0], [0], [1], [0, 0, 1, 1], [], []>} : vector<8x16xbf16>, vector<16x32xbf16>, vector<8x32xf32> -> vector<8x32xf32>
    %299 = arith.addf %288, %298 : vector<8x32xf32>
    %c0_209 = arith.constant 0 : index
    %c43 = arith.constant 43 : index
    %c0_210 = arith.constant 0 : index
    %300 = tpu.strided_load %arg1[%c0_209, %c43, %c0_210] {strides = array<i32: 1, 16, 1>} : memref<8x64x32xf32, #tpu.memory_space<vmem>>, vector<8x2x32xf32>
    %301 = vector.shape_cast %0 : vector<2x32xf32> to vector<1x2x32xf32>
    %302 = vector.broadcast %301 : vector<1x2x32xf32> to vector<8x2x32xf32>
    %303 = arith.mulf %300, %302 : vector<8x2x32xf32>
    %cst_211 = arith.constant dense<0.000000e+00> : vector<8x32xf32>
    %304 = vector.multi_reduction <add>, %303, %cst_211 [1] : vector<8x2x32xf32> to vector<8x32xf32>
    %cst_212 = arith.constant dense<0.000000e+00> : vector<8x16xf32>
    %305 = tpu.matmul %304, %1, %cst_212 {dimension_numbers = #tpu.dot_dimension_numbers<[1], [0], [0], [1], [0, 0, 1, 1], [], []>} : vector<8x32xf32>, vector<32x16xf32>, vector<8x16xf32> -> vector<8x16xf32>
    %306 = arith.truncf %305 : vector<8x16xf32> to vector<8x16xbf16>
    %c27 = arith.constant 27 : index
    %c0_213 = arith.constant 0 : index
    %c0_214 = arith.constant 0 : index
    %307 = vector.load %arg4[%c27, %c0_213, %c0_214] : memref<32x16x32xbf16, #tpu.memory_space<vmem>>, vector<1x16x32xbf16>
    %308 = vector.shape_cast %307 : vector<1x16x32xbf16> to vector<16x32xbf16>
    %cst_215 = arith.constant dense<0.000000e+00> : vector<8x32xf32>
    %309 = tpu.matmul %306, %308, %cst_215 {dimension_numbers = #tpu.dot_dimension_numbers<[1], [0], [0], [1], [0, 0, 1, 1], [], []>} : vector<8x16xbf16>, vector<16x32xbf16>, vector<8x32xf32> -> vector<8x32xf32>
    %310 = arith.addf %299, %309 : vector<8x32xf32>
    %c0_216 = arith.constant 0 : index
    %c44 = arith.constant 44 : index
    %c0_217 = arith.constant 0 : index
    %311 = tpu.strided_load %arg1[%c0_216, %c44, %c0_217] {strides = array<i32: 1, 16, 1>} : memref<8x64x32xf32, #tpu.memory_space<vmem>>, vector<8x2x32xf32>
    %312 = vector.shape_cast %0 : vector<2x32xf32> to vector<1x2x32xf32>
    %313 = vector.broadcast %312 : vector<1x2x32xf32> to vector<8x2x32xf32>
    %314 = arith.mulf %311, %313 : vector<8x2x32xf32>
    %cst_218 = arith.constant dense<0.000000e+00> : vector<8x32xf32>
    %315 = vector.multi_reduction <add>, %314, %cst_218 [1] : vector<8x2x32xf32> to vector<8x32xf32>
    %cst_219 = arith.constant dense<0.000000e+00> : vector<8x16xf32>
    %316 = tpu.matmul %315, %1, %cst_219 {dimension_numbers = #tpu.dot_dimension_numbers<[1], [0], [0], [1], [0, 0, 1, 1], [], []>} : vector<8x32xf32>, vector<32x16xf32>, vector<8x16xf32> -> vector<8x16xf32>
    %317 = arith.truncf %316 : vector<8x16xf32> to vector<8x16xbf16>
    %c28 = arith.constant 28 : index
    %c0_220 = arith.constant 0 : index
    %c0_221 = arith.constant 0 : index
    %318 = vector.load %arg4[%c28, %c0_220, %c0_221] : memref<32x16x32xbf16, #tpu.memory_space<vmem>>, vector<1x16x32xbf16>
    %319 = vector.shape_cast %318 : vector<1x16x32xbf16> to vector<16x32xbf16>
    %cst_222 = arith.constant dense<0.000000e+00> : vector<8x32xf32>
    %320 = tpu.matmul %317, %319, %cst_222 {dimension_numbers = #tpu.dot_dimension_numbers<[1], [0], [0], [1], [0, 0, 1, 1], [], []>} : vector<8x16xbf16>, vector<16x32xbf16>, vector<8x32xf32> -> vector<8x32xf32>
    %321 = arith.addf %310, %320 : vector<8x32xf32>
    %c0_223 = arith.constant 0 : index
    %c45 = arith.constant 45 : index
    %c0_224 = arith.constant 0 : index
    %322 = tpu.strided_load %arg1[%c0_223, %c45, %c0_224] {strides = array<i32: 1, 16, 1>} : memref<8x64x32xf32, #tpu.memory_space<vmem>>, vector<8x2x32xf32>
    %323 = vector.shape_cast %0 : vector<2x32xf32> to vector<1x2x32xf32>
    %324 = vector.broadcast %323 : vector<1x2x32xf32> to vector<8x2x32xf32>
    %325 = arith.mulf %322, %324 : vector<8x2x32xf32>
    %cst_225 = arith.constant dense<0.000000e+00> : vector<8x32xf32>
    %326 = vector.multi_reduction <add>, %325, %cst_225 [1] : vector<8x2x32xf32> to vector<8x32xf32>
    %cst_226 = arith.constant dense<0.000000e+00> : vector<8x16xf32>
    %327 = tpu.matmul %326, %1, %cst_226 {dimension_numbers = #tpu.dot_dimension_numbers<[1], [0], [0], [1], [0, 0, 1, 1], [], []>} : vector<8x32xf32>, vector<32x16xf32>, vector<8x16xf32> -> vector<8x16xf32>
    %328 = arith.truncf %327 : vector<8x16xf32> to vector<8x16xbf16>
    %c29 = arith.constant 29 : index
    %c0_227 = arith.constant 0 : index
    %c0_228 = arith.constant 0 : index
    %329 = vector.load %arg4[%c29, %c0_227, %c0_228] : memref<32x16x32xbf16, #tpu.memory_space<vmem>>, vector<1x16x32xbf16>
    %330 = vector.shape_cast %329 : vector<1x16x32xbf16> to vector<16x32xbf16>
    %cst_229 = arith.constant dense<0.000000e+00> : vector<8x32xf32>
    %331 = tpu.matmul %328, %330, %cst_229 {dimension_numbers = #tpu.dot_dimension_numbers<[1], [0], [0], [1], [0, 0, 1, 1], [], []>} : vector<8x16xbf16>, vector<16x32xbf16>, vector<8x32xf32> -> vector<8x32xf32>
    %332 = arith.addf %321, %331 : vector<8x32xf32>
    %c0_230 = arith.constant 0 : index
    %c46 = arith.constant 46 : index
    %c0_231 = arith.constant 0 : index
    %333 = tpu.strided_load %arg1[%c0_230, %c46, %c0_231] {strides = array<i32: 1, 16, 1>} : memref<8x64x32xf32, #tpu.memory_space<vmem>>, vector<8x2x32xf32>
    %334 = vector.shape_cast %0 : vector<2x32xf32> to vector<1x2x32xf32>
    %335 = vector.broadcast %334 : vector<1x2x32xf32> to vector<8x2x32xf32>
    %336 = arith.mulf %333, %335 : vector<8x2x32xf32>
    %cst_232 = arith.constant dense<0.000000e+00> : vector<8x32xf32>
    %337 = vector.multi_reduction <add>, %336, %cst_232 [1] : vector<8x2x32xf32> to vector<8x32xf32>
    %cst_233 = arith.constant dense<0.000000e+00> : vector<8x16xf32>
    %338 = tpu.matmul %337, %1, %cst_233 {dimension_numbers = #tpu.dot_dimension_numbers<[1], [0], [0], [1], [0, 0, 1, 1], [], []>} : vector<8x32xf32>, vector<32x16xf32>, vector<8x16xf32> -> vector<8x16xf32>
    %339 = arith.truncf %338 : vector<8x16xf32> to vector<8x16xbf16>
    %c30 = arith.constant 30 : index
    %c0_234 = arith.constant 0 : index
    %c0_235 = arith.constant 0 : index
    %340 = vector.load %arg4[%c30, %c0_234, %c0_235] : memref<32x16x32xbf16, #tpu.memory_space<vmem>>, vector<1x16x32xbf16>
    %341 = vector.shape_cast %340 : vector<1x16x32xbf16> to vector<16x32xbf16>
    %cst_236 = arith.constant dense<0.000000e+00> : vector<8x32xf32>
    %342 = tpu.matmul %339, %341, %cst_236 {dimension_numbers = #tpu.dot_dimension_numbers<[1], [0], [0], [1], [0, 0, 1, 1], [], []>} : vector<8x16xbf16>, vector<16x32xbf16>, vector<8x32xf32> -> vector<8x32xf32>
    %343 = arith.addf %332, %342 : vector<8x32xf32>
    %c0_237 = arith.constant 0 : index
    %c47 = arith.constant 47 : index
    %c0_238 = arith.constant 0 : index
    %344 = tpu.strided_load %arg1[%c0_237, %c47, %c0_238] {strides = array<i32: 1, 16, 1>} : memref<8x64x32xf32, #tpu.memory_space<vmem>>, vector<8x2x32xf32>
    %345 = vector.shape_cast %0 : vector<2x32xf32> to vector<1x2x32xf32>
    %346 = vector.broadcast %345 : vector<1x2x32xf32> to vector<8x2x32xf32>
    %347 = arith.mulf %344, %346 : vector<8x2x32xf32>
    %cst_239 = arith.constant dense<0.000000e+00> : vector<8x32xf32>
    %348 = vector.multi_reduction <add>, %347, %cst_239 [1] : vector<8x2x32xf32> to vector<8x32xf32>
    %cst_240 = arith.constant dense<0.000000e+00> : vector<8x16xf32>
    %349 = tpu.matmul %348, %1, %cst_240 {dimension_numbers = #tpu.dot_dimension_numbers<[1], [0], [0], [1], [0, 0, 1, 1], [], []>} : vector<8x32xf32>, vector<32x16xf32>, vector<8x16xf32> -> vector<8x16xf32>
    %350 = arith.truncf %349 : vector<8x16xf32> to vector<8x16xbf16>
    %c31 = arith.constant 31 : index
    %c0_241 = arith.constant 0 : index
    %c0_242 = arith.constant 0 : index
    %351 = vector.load %arg4[%c31, %c0_241, %c0_242] : memref<32x16x32xbf16, #tpu.memory_space<vmem>>, vector<1x16x32xbf16>
    %352 = vector.shape_cast %351 : vector<1x16x32xbf16> to vector<16x32xbf16>
    %cst_243 = arith.constant dense<0.000000e+00> : vector<8x32xf32>
    %353 = tpu.matmul %350, %352, %cst_243 {dimension_numbers = #tpu.dot_dimension_numbers<[1], [0], [0], [1], [0, 0, 1, 1], [], []>} : vector<8x16xbf16>, vector<16x32xbf16>, vector<8x32xf32> -> vector<8x32xf32>
    %354 = arith.addf %343, %353 : vector<8x32xf32>
    %c0_244 = arith.constant 0 : index
    %c0_245 = arith.constant 0 : index
    %355 = vector.load %arg5[%c0_244, %c0_245] : memref<1x32xf32, #tpu.memory_space<vmem>>, vector<1x32xf32>
    %356 = vector.broadcast %355 : vector<1x32xf32> to vector<8x32xf32>
    %357 = arith.addf %354, %356 : vector<8x32xf32>
    %c0_246 = arith.constant 0 : index
    %c0_247 = arith.constant 0 : index
    %358 = vector.load %arg6[%c0_246, %c0_247] : memref<8x32xf32, #tpu.memory_space<vmem>>, vector<8x32xf32>
    tpu.vector_store %arg6[%c0_246, %c0_247], %357 {strides = array<i32>} : memref<8x32xf32, #tpu.memory_space<vmem>>, vector<8x32xf32>,
    return
  }
  func.func @transform_0(%arg0: i32) -> (i32, i32, i32) {
    %c0_i32 = arith.constant 0 : i32
    %c0_i32_0 = arith.constant 0 : i32
    %c0_i32_1 = arith.constant 0 : i32
    return %arg0, %c0_i32, %c0_i32_0 : i32, i32, i32
  }
  func.func @transform_1(%arg0: i32) -> (i32, i32) {
    %c0_i32 = arith.constant 0 : i32
    %c0_i32_0 = arith.constant 0 : i32
    %c0_i32_1 = arith.constant 0 : i32
    return %c0_i32, %c0_i32_0 : i32, i32
  }
  func.func @transform_2(%arg0: i32) -> (i32, i32) {
    %c0_i32 = arith.constant 0 : i32
    %c0_i32_0 = arith.constant 0 : i32
    %c0_i32_1 = arith.constant 0 : i32
    return %c0_i32, %c0_i32_0 : i32, i32
  }
  func.func @transform_3(%arg0: i32) -> (i32, i32, i32) {
    %c0_i32 = arith.constant 0 : i32
    %c0_i32_0 = arith.constant 0 : i32
    %c0_i32_1 = arith.constant 0 : i32
    %c0_i32_2 = arith.constant 0 : i32
    return %c0_i32, %c0_i32_0, %c0_i32_1 : i32, i32, i32
  }
  func.func @transform_4(%arg0: i32) -> (i32, i32) {
    %c0_i32 = arith.constant 0 : i32
    %c0_i32_0 = arith.constant 0 : i32
    %c0_i32_1 = arith.constant 0 : i32
    return %c0_i32, %c0_i32_0 : i32, i32
  }
  func.func @transform_5(%arg0: i32) -> (i32, i32) {
    %c0_i32 = arith.constant 0 : i32
    %c0_i32_0 = arith.constant 0 : i32
    return %arg0, %c0_i32 : i32, i32
  }
}

</mosaic_0001>

<llo_original>
// kernel: temporal_of_embedding_forward.3
$region0: #{temporal_of_embedding_forward.3}
  #allocation0 [shape = 'u32[]', space=smem, size = 0x4, offset = 0x4, fixed_abs, tag = 'smem constant byte address 0x4 - core index']
  #allocation1 [shape = 'u32[72,128]{1,0:T(1,128)}', space=vmem, size = 0x9000, scoped, tag = 'internal scratch']
  %s0 = inlined_call_operand.vmem [shape: f32[2,6,32], index: 0, kind: input, shape index: {}]
  %s1 = inlined_call_operand.vmem [shape: s32[2,1,1], index: 1, kind: input, shape index: {}]
  %s2 = inlined_call_operand.vmem [shape: f32[1,32], index: 2, kind: input, shape index: {}]
  %s3 = inlined_call_operand.vmem [shape: f32[1,32], index: 3, kind: input, shape index: {}]
  %s4 = inlined_call_operand.vmem [shape: f32[8,32], index: 4, kind: input, shape index: {}]
  %s5 = inlined_call_operand.vmem [shape: f32[1,32], index: 5, kind: input, shape index: {}]
  %s6 = inlined_call_operand.vmem [shape: f32[1,32], index: 6, kind: input, shape index: {}]
  %s7 = inlined_call_operand.hbm [shape: f32[2,8,32], index: 7, kind: output, shape index: {}]
  %s8 = sld [smem:[#allocation0]]
  $region61: #{temporal_of_embedding_forward.3} parent=0
    _
  %s10 = ssub.s32 1, %s8
  %s11 = scalar_select 0, %s10, %s8
  $region1: #{temporal_of_embedding_forward.3} parent=0
    #allocation2 [shape = 'u8[8192]{0}', space=vmem, size = 0x2000, scoped, tag = 'output window, operand 0']
    #allocation3 [shape = 's32[2]{0}', space=sflag, size = 0x8, scoped, tag = 'scoped memory for temporal_of_embedding_forward.3']
    %12 = vsyncpa [#allocation3], 0
    %s13 = scalar_lea.sflag [#allocation3], 1
    %14 = vsyncpa %s13, 0
    loop: start=0, step=1, limit=4
    $region2: #{temporal_of_embedding_forward.3} parent=1 // loop_pre_header
      _
    $region3: #{temporal_of_embedding_forward.3} parent=1 // loop_header
      %s16 = sphi 0, %s20
      %p17 = scmp.ge.s32.totalorder %s16, 4
      %s26 = sphi 0, %s28
      %s29 = sphi 0, %s26
      %s30 = sphi 0, %s29
      %s46 = sphi 0, %s30
      %s52 = sphi 0, %s54
      %s55 = sphi 0, %s52
      %s56 = sphi 0, %s55
      %s72 = sphi 0, %s56
      %s76 = sphi 0, %s76
      %s78 = sphi 0, %s76
      %s79 = sphi 0, %s78
      %s93 = sphi 0, %s79
      %s97 = sphi 0, %s97
      %s99 = sphi 0, %s97
      %s100 = sphi 0, %s99
      %s114 = sphi 0, %s100
      %s118 = sphi 0, %s118
      %s120 = sphi 0, %s118
      %s121 = sphi 0, %s120
      %s135 = sphi 0, %s121
      %s139 = sphi 0, %s139
      %s141 = sphi 0, %s139
      %s142 = sphi 0, %s141
      %s156 = sphi 0, %s142
      %s160 = sphi 0, %s160
      %s162 = sphi 0, %s160
      %s163 = sphi 0, %s162
      %s177 = sphi 0, %s163
      %s183 = sphi 0, %s185
      %s186 = sphi 0, %s183
      %s187 = sphi 0, %s186
      %s203 = sphi 0, %s187
    $region4: #{temporal_of_embedding_forward.3} parent=1 // loop_header_branch
      %19 = sbr.rel (%p17) target = $region8
    $region5: #{temporal_of_embedding_forward.3} parent=1 // loop_body
      %s21 = ssub.s32 %s16, 1
      %s22 = ssub.s32 %s16, 2
      %s23 = sadd.s32 %s16, 1
      %s24 = ssub.s32 %s16, %s23
      %p25 = scmp.eq.s32.totalorder %s24, 0
      %s27 = sadd.s32 %s26, 1
      %s28 = scalar_select %p25, %s26, %s27
      %p31 = pneg %p25
      %p32 = scmp.eq.s32.totalorder %s16, 1
      %p33 = por %p31, %p32
      %p34 = scmp.ne.s32.totalorder %s26, %s29
      %p35 = scmp.eq.s32.totalorder %s16, 0
      %p36 = por %p34, %p35
      %p37 = scmp.ne.s32.totalorder %s26, %s29
      %p38 = scmp.eq.s32.totalorder %s21, 1
      %p39 = por %p37, %p38
      %p40 = scmp.ne.s32.totalorder %s29, %s30
      %p41 = scmp.eq.s32.totalorder %s21, 0
      %p42 = por %p40, %p41
      %p43 = scmp.ne.s32.totalorder %s29, %s30
      %p44 = scmp.eq.s32.totalorder %s22, 1
      %p45 = por %p43, %p44
      %p47 = scmp.ne.s32.totalorder %s30, %s46
      %p48 = scmp.eq.s32.totalorder %s22, 0
      %p49 = por %p47, %p48
      %s50 = ssub.s32 %s16, %s23
      %p51 = scmp.eq.s32.totalorder %s50, 0
      %s53 = sadd.s32 %s52, 1
      %s54 = scalar_select %p51, %s52, %s53
      %p57 = pneg %p51
      %p58 = scmp.eq.s32.totalorder %s16, 1
      %p59 = por %p57, %p58
      %p60 = scmp.ne.s32.totalorder %s52, %s55
      %p61 = scmp.eq.s32.totalorder %s16, 0
      %p62 = por %p60, %p61
      %p63 = scmp.ne.s32.totalorder %s52, %s55
      %p64 = scmp.eq.s32.totalorder %s21, 1
      %p65 = por %p63, %p64
      %p66 = scmp.ne.s32.totalorder %s55, %s56
      %p67 = scmp.eq.s32.totalorder %s21, 0
      %p68 = por %p66, %p67
      %p69 = scmp.ne.s32.totalorder %s55, %s56
      %p70 = scmp.eq.s32.totalorder %s22, 1
      %p71 = por %p69, %p70
      %p73 = scmp.ne.s32.totalorder %s56, %s72
      %p74 = scmp.eq.s32.totalorder %s22, 0
      %p75 = por %p73, %p74
      %s77 = sadd.s32 %s76, 1
      %p80 = scmp.eq.s32.totalorder %s16, 1
      %p81 = scmp.ne.s32.totalorder %s76, %s78
      %p82 = scmp.eq.s32.totalorder %s16, 0
      %p83 = por %p81, %p82
      %p84 = scmp.ne.s32.totalorder %s76, %s78
      %p85 = scmp.eq.s32.totalorder %s21, 1
      %p86 = por %p84, %p85
      %p87 = scmp.ne.s32.totalorder %s78, %s79
      %p88 = scmp.eq.s32.totalorder %s21, 0
      %p89 = por %p87, %p88
      %p90 = scmp.ne.s32.totalorder %s78, %s79
      %p91 = scmp.eq.s32.totalorder %s22, 1
      %p92 = por %p90, %p91
      %p94 = scmp.ne.s32.totalorder %s79, %s93
      %p95 = scmp.eq.s32.totalorder %s22, 0
      %p96 = por %p94, %p95
      %s98 = sadd.s32 %s97, 1
      %p101 = scmp.eq.s32.totalorder %s16, 1
      %p102 = scmp.ne.s32.totalorder %s97, %s99
      %p103 = scmp.eq.s32.totalorder %s16, 0
      %p104 = por %p102, %p103
      %p105 = scmp.ne.s32.totalorder %s97, %s99
      %p106 = scmp.eq.s32.totalorder %s21, 1
      %p107 = por %p105, %p106
      %p108 = scmp.ne.s32.totalorder %s99, %s100
      %p109 = scmp.eq.s32.totalorder %s21, 0
      %p110 = por %p108, %p109
      %p111 = scmp.ne.s32.totalorder %s99, %s100
      %p112 = scmp.eq.s32.totalorder %s22, 1
      %p113 = por %p111, %p112
      %p115 = scmp.ne.s32.totalorder %s100, %s114
      %p116 = scmp.eq.s32.totalorder %s22, 0
      %p117 = por %p115, %p116
      %s119 = sadd.s32 %s118, 1
      %p122 = scmp.eq.s32.totalorder %s16, 1
      %p123 = scmp.ne.s32.totalorder %s118, %s120
      %p124 = scmp.eq.s32.totalorder %s16, 0
      %p125 = por %p123, %p124
      %p126 = scmp.ne.s32.totalorder %s118, %s120
      %p127 = scmp.eq.s32.totalorder %s21, 1
      %p128 = por %p126, %p127
      %p129 = scmp.ne.s32.totalorder %s120, %s121
      %p130 = scmp.eq.s32.totalorder %s21, 0
      %p131 = por %p129, %p130
      %p132 = scmp.ne.s32.totalorder %s120, %s121
      %p133 = scmp.eq.s32.totalorder %s22, 1
      %p134 = por %p132, %p133
      %p136 = scmp.ne.s32.totalorder %s121, %s135
      %p137 = scmp.eq.s32.totalorder %s22, 0
      %p138 = por %p136, %p137
      %s140 = sadd.s32 %s139, 1
      %p143 = scmp.eq.s32.totalorder %s16, 1
      %p144 = scmp.ne.s32.totalorder %s139, %s141
      %p145 = scmp.eq.s32.totalorder %s16, 0
      %p146 = por %p144, %p145
      %p147 = scmp.ne.s32.totalorder %s139, %s141
      %p148 = scmp.eq.s32.totalorder %s21, 1
      %p149 = por %p147, %p148
      %p150 = scmp.ne.s32.totalorder %s141, %s142
      %p151 = scmp.eq.s32.totalorder %s21, 0
      %p152 = por %p150, %p151
      %p153 = scmp.ne.s32.totalorder %s141, %s142
      %p154 = scmp.eq.s32.totalorder %s22, 1
      %p155 = por %p153, %p154
      %p157 = scmp.ne.s32.totalorder %s142, %s156
      %p158 = scmp.eq.s32.totalorder %s22, 0
      %p159 = por %p157, %p158
      %s161 = sadd.s32 %s160, 1
      %p164 = scmp.eq.s32.totalorder %s16, 1
      %p165 = scmp.ne.s32.totalorder %s160, %s162
      %p166 = scmp.eq.s32.totalorder %s16, 0
      %p167 = por %p165, %p166
      %p168 = scmp.ne.s32.totalorder %s160, %s162
      %p169 = scmp.eq.s32.totalorder %s21, 1
      %p170 = por %p168, %p169
      %p171 = scmp.ne.s32.totalorder %s162, %s163
      %p172 = scmp.eq.s32.totalorder %s21, 0
      %p173 = por %p171, %p172
      %p174 = scmp.ne.s32.totalorder %s162, %s163
      %p175 = scmp.eq.s32.totalorder %s22, 1
      %p176 = por %p174, %p175
      %p178 = scmp.ne.s32.totalorder %s163, %s177
      %p179 = scmp.eq.s32.totalorder %s22, 0
      %p180 = por %p178, %p179
      %s181 = ssub.s32 %s16, %s23
      %p182 = scmp.eq.s32.totalorder %s181, 0
      %s184 = sadd.s32 %s183, 1
      %s185 = scalar_select %p182, %s183, %s184
      %p188 = pneg %p182
      %p189 = scmp.eq.s32.totalorder %s16, 1
      %p190 = por %p188, %p189
      %p191 = scmp.ne.s32.totalorder %s183, %s186
      %p192 = scmp.eq.s32.totalorder %s16, 0
      %p193 = por %p191, %p192
      %p194 = scmp.ne.s32.totalorder %s183, %s186
      %p195 = scmp.eq.s32.totalorder %s21, 1
      %p196 = por %p194, %p195
      %p197 = scmp.ne.s32.totalorder %s186, %s187
      %p198 = scmp.eq.s32.totalorder %s21, 0
      %p199 = por %p197, %p198
      %p200 = scmp.ne.s32.totalorder %s186, %s187
      %p201 = scmp.eq.s32.totalorder %s22, 1
      %p202 = por %p200, %p201
      %p204 = scmp.ne.s32.totalorder %s187, %s203
      %p205 = scmp.eq.s32.totalorder %s22, 0
      %p206 = por %p204, %p205
      %p207 = scmp.le.s32.totalorder 1, %s16
      %p208 = scmp.lt.s32.totalorder %s16, 3
      %p209 = pnand %p207, %p208
      %p210 = pneg %p209
      // Predicated region
      $region9: #{temporal_of_embedding_forward.3} parent=5 // pred_check
        _
      $region10: #{temporal_of_embedding_forward.3} parent=5 // pred_check_branch
        %212 = sbr.rel (%p209) target = $region12
      $region11: #{temporal_of_embedding_forward.3} parent=5 // pred_region
        %s213 = ssub.s32 %s16, 1
        // Predicated region
        $region13: #{temporal_of_embedding_forward.3} parent=11 // pred_check
          %p214 = pneg %p89
        $region14: #{temporal_of_embedding_forward.3} parent=11 // pred_check_branch
          %216 = sbr.rel (%p214) target = $region16
        $region15: #{temporal_of_embedding_forward.3} parent=11 // pred_region
          _
        $region16: #{temporal_of_embedding_forward.3} parent=11 // pred_fallthru
          _
        // Predicated region
        $region17: #{temporal_of_embedding_forward.3} parent=11 // pred_check
          %p217 = pneg %p110
        $region18: #{temporal_of_embedding_forward.3} parent=11 // pred_check_branch
          %219 = sbr.rel (%p217) target = $region20
        $region19: #{temporal_of_embedding_forward.3} parent=11 // pred_region
          _
        $region20: #{temporal_of_embedding_forward.3} parent=11 // pred_fallthru
          _
        // Predicated region
        $region21: #{temporal_of_embedding_forward.3} parent=11 // pred_check
          %p220 = pneg %p131
        $region22: #{temporal_of_embedding_forward.3} parent=11 // pred_check_branch
          %222 = sbr.rel (%p220) target = $region24
        $region23: #{temporal_of_embedding_forward.3} parent=11 // pred_region
          _
        $region24: #{temporal_of_embedding_forward.3} parent=11 // pred_fallthru
          _
        // Predicated region
        $region25: #{temporal_of_embedding_forward.3} parent=11 // pred_check
          %p223 = pneg %p152
        $region26: #{temporal_of_embedding_forward.3} parent=11 // pred_check_branch
          %225 = sbr.rel (%p223) target = $region28
        $region27: #{temporal_of_embedding_forward.3} parent=11 // pred_region
          _
        $region28: #{temporal_of_embedding_forward.3} parent=11 // pred_fallthru
          _
        // Predicated region
        $region29: #{temporal_of_embedding_forward.3} parent=11 // pred_check
          %p226 = pneg %p173
        $region30: #{temporal_of_embedding_forward.3} parent=11 // pred_check_branch
          %228 = sbr.rel (%p226) target = $region32
        $region31: #{temporal_of_embedding_forward.3} parent=11 // pred_region
          _
        $region32: #{temporal_of_embedding_forward.3} parent=11 // pred_fallthru
          _
      $region12: #{temporal_of_embedding_forward.3} parent=5 // pred_fallthru
        _
      %p229 = scmp.lt.s32.totalorder %s16, 2
      // Predicated region
      $region33: #{temporal_of_embedding_forward.3} parent=5 // pred_check
        %p230 = pneg %p229
      $region34: #{temporal_of_embedding_forward.3} parent=5 // pred_check_branch
        %232 = sbr.rel (%p230) target = $region36
      $region35: #{temporal_of_embedding_forward.3} parent=5 // pred_region
        // Predicated region
        $region37: #{temporal_of_embedding_forward.3} parent=35 // pred_check
          %p233 = pneg %p36
        $region38: #{temporal_of_embedding_forward.3} parent=35 // pred_check_branch
          %235 = sbr.rel (%p233) target = $region40
        $region39: #{temporal_of_embedding_forward.3} parent=35 // pred_region
          %p236 = scmp.lt.s32.totalorder %s16, 1
          %s237 = scalar_select %p236, %s16, 1
          %s238 = smul.addr %s237, 8
          %s239 = scalar_lea.vmem %s0, %s238
        $region40: #{temporal_of_embedding_forward.3} parent=35 // pred_fallthru
          _
        // Predicated region
        $region41: #{temporal_of_embedding_forward.3} parent=35 // pred_check
          %p240 = pneg %p62
        $region42: #{temporal_of_embedding_forward.3} parent=35 // pred_check_branch
          %242 = sbr.rel (%p240) target = $region44
        $region43: #{temporal_of_embedding_forward.3} parent=35 // pred_region
          %p243 = scmp.lt.s32.totalorder %s16, 1
          %s244 = scalar_select %p243, %s16, 1
          %s245 = scalar_lea.vmem %s1, %s244
        $region44: #{temporal_of_embedding_forward.3} parent=35 // pred_fallthru
          _
      $region36: #{temporal_of_embedding_forward.3} parent=5 // pred_fallthru
        _
      %p246 = scmp.le.s32.totalorder 1, %s16
      %p247 = scmp.lt.s32.totalorder %s16, 3
      %p248 = pnand %p246, %p247
      %p249 = pneg %p248
      // Predicated region
      $region45: #{temporal_of_embedding_forward.3} parent=5 // pred_check
        _
      $region46: #{temporal_of_embedding_forward.3} parent=5 // pred_check_branch
        %251 = sbr.rel (%p248) target = $region48
      $region47: #{temporal_of_embedding_forward.3} parent=5 // pred_region
        %s252 = ssub.s32 %s16, 1
        %p253 = scmp.lt.s32.totalorder %s21, 1
        %s254 = scalar_select %p253, %s21, 1
        %s255 = smul.addr %s254, 8
        %s256 = scalar_lea.vmem %s0, %s255
        %p257 = pneg %p42
        %p258 = pneg %p39
        %p259 = scmp.lt.s32.totalorder %s21, 1
        %s260 = scalar_select %p259, %s21, 1
        %s261 = scalar_lea.vmem %s1, %s260
        %p262 = pneg %p68
        %p263 = pneg %p65
        %p264 = pneg %p89
        %p265 = pneg %p86
        %p266 = pneg %p110
        %p267 = pneg %p107
        %p268 = pneg %p131
        %p269 = pneg %p128
        %p270 = pneg %p152
        %p271 = pneg %p149
        %p272 = pneg %p173
        %p273 = pneg %p170
        %p274 = pneg %p199
        %p275 = pneg %p196
        %s276 = sand.u32 %s186, 1
        %s277 = scalar_lea.sflag [#allocation3], %s276
        %s278 = sand.u32 %s186, 1
        %s279 = smul.addr %s278, 8
        %s280 = scalar_lea.vmem [#allocation2], %s279
        %p281 = scmp.lt.s32.totalorder %s21, 1
        %s282 = scalar_select %p281, %s21, 1
        %s283 = smul.addr %s282, 8
        %s284 = scalar_lea.vmem %s0, %s283
        %p285 = scmp.lt.s32.totalorder %s21, 1
        %s286 = scalar_select %p285, %s21, 1
        %s287 = scalar_lea.vmem %s1, %s286
        %v288 = vld [vmem:[%s284] sm:$0x3f]
        %v289 = vld [vmem:[%s2] sm:$0x1]
        %v291 = vrot.slane %v288, 7
        %vm293 = vcmask 1040384
        %v294 = vsel %vm293, %v289, %v291
        %vm295 = vcmask 1046528
        %v296 = vsel %vm295, %v294, 0.0
        %v297 = vlaneseq
        %v298 = vshrl.u32 %v297, 7
        %v299 = vld [vmem:[%s287] sm:$0x1]
        %v300 = vperm.slane %v299, 0
        %vm301 = vcmp.eq.s32.totalorder %v298, %v300
        %v302 = vld [vmem:[%s3] sm:$0x1]
        %v303 = vsel %vm301, 1, 0
        %304 = vset.pattern.permute.xlu0 0
        %305 = vperm.xlu0 %304, %v303
        %v306 = vpop.permute.xlu0 %305
        %vm307 = vcmp.eq.s32.totalorder %v306, 1
        %v309 = vperm.slane %v302, 0
        %v311 = vsel %vm307, %v309, %v296
        %v312 = vld [vmem:[%s4] sm:$0xff]
        %v313 = vadd.f32 %v311, %v312
        %vm314 = vcmask 261120
        %v315 = vsel %vm314, %v313, 0.0
        %316 = vadd.xlane.f32.xlu0 %v315
        %v317 = vpop.xlane.xlu0 %316
        %v318 = vrcp.pop 32.0
        %v319 = vmul.f32 32.0, %v318
        %v320 = vsub.f32 1.0, %v319
        %v321 = vmul.f32 %v318, %v320
        %v322 = vadd.f32 %v318, %v321
        %vm323 = vweird.f32 %v318
        %v324 = vsel %vm323, %v318, %v322
        %v325 = vmul.f32 %v317, %v324
        %v326 = vsub.f32 %v313, %v325
        %v327 = vmul.f32 %v326, %v326
        %v328 = vsel %vm314, %v327, 0.0
        %329 = vadd.xlane.f32.xlu0 %v328
        %v330 = vpop.xlane.xlu0 %329
        %v331 = vmul.f32 %v330, %v324
        %v332 = vadd.f32 %v331, 1e-05
        %v333 = vrsqrt.pop %v332
        %v334 = vmul.f32 %v333, %v332
        %v335 = vmul.f32 %v334, %v333
        %v336 = vmul.f32 0.5, %v335
        %v337 = vsub.f32 1.5, %v336
        %v338 = vmul.f32 %v333, %v337
        %vm339 = vweird.f32 %v332
        %vm340 = vweird.f32 %v333
        %vm341 = vmor %vm339, %vm340
        %v342 = vsel %vm341, %v333, %v338
        %v343 = vmul.f32 %v326, %v342
        %v344 = vld [vmem:[%s5] sm:$0x1]
        %v346 = vperm.slane %v344, 0
        %v348 = vmul.f32 %v343, %v346
        %v349 = vld [vmem:[%s6] sm:$0x1]
        %v351 = vperm.slane %v349, 0
        %v353 = vadd.f32 %v348, %v351
        %354 = vst.msk [vmem:[%s280] sm:$0xff] %vm314, %v353
        %s355 = sand.u32 %s186, 1
        %s356 = scalar_lea.sflag [#allocation3], %s355
        %s357 = sand.u32 %s186, 1
        %s358 = smul.addr %s357, 8
        %s359 = scalar_lea.vmem [#allocation2], %s358
        // Predicated region
        $region49: #{temporal_of_embedding_forward.3} parent=47 // pred_check
          %p360 = pneg %p196
        $region50: #{temporal_of_embedding_forward.3} parent=47 // pred_check_branch
          %362 = sbr.rel (%p360) target = $region52
        $region51: #{temporal_of_embedding_forward.3} parent=47 // pred_region
          %364 = vsyncadd %s356, 0
          %s365 = smul.addr %s21, 8
          %s366 = scalar_lea.hbm %s7, %s365
          %s368 = sshll.u32 %s359, 4
          %s369 = int_to_ptr.vmem [resolvable:$true] %s368
          %s370 = sshll.u32 %s366, 4
          %s371 = int_to_ptr.hbm [resolvable:$true] %s370
          %373 = dma.vmem_to_hbm [thread:$0]  %s369, 128, %s371, %s356
        $region52: #{temporal_of_embedding_forward.3} parent=47 // pred_fallthru
          _
      $region48: #{temporal_of_embedding_forward.3} parent=5 // pred_fallthru
        _
      %p374 = scmp.le.s32.totalorder 2, %s16
      // Predicated region
      $region53: #{temporal_of_embedding_forward.3} parent=5 // pred_check
        %p375 = pneg %p374
      $region54: #{temporal_of_embedding_forward.3} parent=5 // pred_check_branch
        %377 = sbr.rel (%p375) target = $region56
      $region55: #{temporal_of_embedding_forward.3} parent=5 // pred_region
        %s378 = ssub.s32 %s16, 2
        // Predicated region
        $region57: #{temporal_of_embedding_forward.3} parent=55 // pred_check
          %p379 = pneg %p202
        $region58: #{temporal_of_embedding_forward.3} parent=55 // pred_check_branch
          %381 = sbr.rel (%p379) target = $region60
        $region59: #{temporal_of_embedding_forward.3} parent=55 // pred_region
          %s382 = sand.u32 %s187, 1
          %s383 = scalar_lea.sflag [#allocation3], %s382
          %s384 = sand.u32 %s187, 1
          %s385 = smul.addr %s384, 8
          %s386 = scalar_lea.vmem [#allocation2], %s385
          %388 = dma.done %s383, 128
        $region60: #{temporal_of_embedding_forward.3} parent=55 // pred_fallthru
          _
      $region56: #{temporal_of_embedding_forward.3} parent=5 // pred_fallthru
        _
    $region6: #{temporal_of_embedding_forward.3} parent=1 // loop_footer
      %s20 = sadd.s32 1, %s16
    $region7: #{temporal_of_embedding_forward.3} parent=1 // loop_footer_branch
      %15 = sbr.rel target = $region3
    $region8: #{temporal_of_embedding_forward.3} parent=1 // loop_exit
      _
    %389 = vsyncpa [#allocation3], 1
    %s390 = scalar_lea.sflag [#allocation3], 1
    %391 = vsyncpa %s390, 1

// kernel: temporal_of_embedding_forward.2
$region0: #{temporal_of_embedding_forward.2}
  #allocation0 [shape = 'u32[]', space=smem, size = 0x4, offset = 0x4, fixed_abs, tag = 'smem constant byte address 0x4 - core index']
  #allocation1 [shape = 'u32[72,128]{1,0:T(1,128)}', space=vmem, size = 0x9000, scoped, tag = 'internal scratch']
  %s0 = inlined_call_operand.vmem [shape: f32[12,64,32], index: 0, kind: input, shape index: {}]
  %s1 = inlined_call_operand.vmem [shape: f32[2,32], index: 1, kind: input, shape index: {}]
  %s2 = inlined_call_operand.vmem [shape: f32[32,16], index: 2, kind: input, shape index: {}]
  %s3 = inlined_call_operand.vmem [shape: bf16[32,16,32], index: 3, kind: input, shape index: {}]
  %s4 = inlined_call_operand.vmem [shape: f32[1,32], index: 4, kind: input, shape index: {}]
  %s5 = inlined_call_operand.vmem [shape: f32[12,32], index: 5, kind: output, shape index: {}]
  %s6 = sld [smem:[#allocation0]]
  $region53: #{temporal_of_embedding_forward.2} parent=0
    _
  %s8 = ssub.s32 1, %s6
  %s9 = scalar_select 0, %s8, %s6
  loop: start=0, step=1, limit=4
  $region2: #{temporal_of_embedding_forward.2} parent=0 // loop_pre_header
    _
  $region3: #{temporal_of_embedding_forward.2} parent=0 // loop_header
    %s11 = sphi 0, %s15
    %p12 = scmp.ge.s32.totalorder %s11, 4
    %s21 = sphi 0, %s23
    %s24 = sphi 0, %s21
    %s25 = sphi 0, %s24
    %s41 = sphi 0, %s25
    %s45 = sphi 0, %s45
    %s47 = sphi 0, %s45
    %s48 = sphi 0, %s47
    %s62 = sphi 0, %s48
    %s66 = sphi 0, %s66
    %s68 = sphi 0, %s66
    %s69 = sphi 0, %s68
    %s83 = sphi 0, %s69
    %s87 = sphi 0, %s87
    %s89 = sphi 0, %s87
    %s90 = sphi 0, %s89
    %s104 = sphi 0, %s90
    %s108 = sphi 0, %s108
    %s110 = sphi 0, %s108
    %s111 = sphi 0, %s110
    %s125 = sphi 0, %s111
    %s131 = sphi 0, %s133
    %s134 = sphi 0, %s131
    %s135 = sphi 0, %s134
    %s151 = sphi 0, %s135
  $region4: #{temporal_of_embedding_forward.2} parent=0 // loop_header_branch
    %14 = sbr.rel (%p12) target = $region8
  $region5: #{temporal_of_embedding_forward.2} parent=0 // loop_body
    %s16 = ssub.s32 %s11, 1
    %s17 = ssub.s32 %s11, 2
    %s18 = sadd.s32 %s11, 1
    %s19 = ssub.s32 %s11, %s18
    %p20 = scmp.eq.s32.totalorder %s19, 0
    %s22 = sadd.s32 %s21, 1
    %s23 = scalar_select %p20, %s21, %s22
    %p26 = pneg %p20
    %p27 = scmp.eq.s32.totalorder %s11, 1
    %p28 = por %p26, %p27
    %p29 = scmp.ne.s32.totalorder %s21, %s24
    %p30 = scmp.eq.s32.totalorder %s11, 0
    %p31 = por %p29, %p30
    %p32 = scmp.ne.s32.totalorder %s21, %s24
    %p33 = scmp.eq.s32.totalorder %s16, 1
    %p34 = por %p32, %p33
    %p35 = scmp.ne.s32.totalorder %s24, %s25
    %p36 = scmp.eq.s32.totalorder %s16, 0
    %p37 = por %p35, %p36
    %p38 = scmp.ne.s32.totalorder %s24, %s25
    %p39 = scmp.eq.s32.totalorder %s17, 1
    %p40 = por %p38, %p39
    %p42 = scmp.ne.s32.totalorder %s25, %s41
    %p43 = scmp.eq.s32.totalorder %s17, 0
    %p44 = por %p42, %p43
    %s46 = sadd.s32 %s45, 1
    %p49 = scmp.eq.s32.totalorder %s11, 1
    %p50 = scmp.ne.s32.totalorder %s45, %s47
    %p51 = scmp.eq.s32.totalorder %s11, 0
    %p52 = por %p50, %p51
    %p53 = scmp.ne.s32.totalorder %s45, %s47
    %p54 = scmp.eq.s32.totalorder %s16, 1
    %p55 = por %p53, %p54
    %p56 = scmp.ne.s32.totalorder %s47, %s48
    %p57 = scmp.eq.s32.totalorder %s16, 0
    %p58 = por %p56, %p57
    %p59 = scmp.ne.s32.totalorder %s47, %s48
    %p60 = scmp.eq.s32.totalorder %s17, 1
    %p61 = por %p59, %p60
    %p63 = scmp.ne.s32.totalorder %s48, %s62
    %p64 = scmp.eq.s32.totalorder %s17, 0
    %p65 = por %p63, %p64
    %s67 = sadd.s32 %s66, 1
    %p70 = scmp.eq.s32.totalorder %s11, 1
    %p71 = scmp.ne.s32.totalorder %s66, %s68
    %p72 = scmp.eq.s32.totalorder %s11, 0
    %p73 = por %p71, %p72
    %p74 = scmp.ne.s32.totalorder %s66, %s68
    %p75 = scmp.eq.s32.totalorder %s16, 1
    %p76 = por %p74, %p75
    %p77 = scmp.ne.s32.totalorder %s68, %s69
    %p78 = scmp.eq.s32.totalorder %s16, 0
    %p79 = por %p77, %p78
    %p80 = scmp.ne.s32.totalorder %s68, %s69
    %p81 = scmp.eq.s32.totalorder %s17, 1
    %p82 = por %p80, %p81
    %p84 = scmp.ne.s32.totalorder %s69, %s83
    %p85 = scmp.eq.s32.totalorder %s17, 0
    %p86 = por %p84, %p85
    %s88 = sadd.s32 %s87, 1
    %p91 = scmp.eq.s32.totalorder %s11, 1
    %p92 = scmp.ne.s32.totalorder %s87, %s89
    %p93 = scmp.eq.s32.totalorder %s11, 0
    %p94 = por %p92, %p93
    %p95 = scmp.ne.s32.totalorder %s87, %s89
    %p96 = scmp.eq.s32.totalorder %s16, 1
    %p97 = por %p95, %p96
    %p98 = scmp.ne.s32.totalorder %s89, %s90
    %p99 = scmp.eq.s32.totalorder %s16, 0
    %p100 = por %p98, %p99
    %p101 = scmp.ne.s32.totalorder %s89, %s90
    %p102 = scmp.eq.s32.totalorder %s17, 1
    %p103 = por %p101, %p102
    %p105 = scmp.ne.s32.totalorder %s90, %s104
    %p106 = scmp.eq.s32.totalorder %s17, 0
    %p107 = por %p105, %p106
    %s109 = sadd.s32 %s108, 1
    %p112 = scmp.eq.s32.totalorder %s11, 1
    %p113 = scmp.ne.s32.totalorder %s108, %s110
    %p114 = scmp.eq.s32.totalorder %s11, 0
    %p115 = por %p113, %p114
    %p116 = scmp.ne.s32.totalorder %s108, %s110
    %p117 = scmp.eq.s32.totalorder %s16, 1
    %p118 = por %p116, %p117
    %p119 = scmp.ne.s32.totalorder %s110, %s111
    %p120 = scmp.eq.s32.totalorder %s16, 0
    %p121 = por %p119, %p120
    %p122 = scmp.ne.s32.totalorder %s110, %s111
    %p123 = scmp.eq.s32.totalorder %s17, 1
    %p124 = por %p122, %p123
    %p126 = scmp.ne.s32.totalorder %s111, %s125
    %p127 = scmp.eq.s32.totalorder %s17, 0
    %p128 = por %p126, %p127
    %s129 = ssub.s32 %s11, %s18
    %p130 = scmp.eq.s32.totalorder %s129, 0
    %s132 = sadd.s32 %s131, 1
    %s133 = scalar_select %p130, %s131, %s132
    %p136 = pneg %p130
    %p137 = scmp.eq.s32.totalorder %s11, 1
    %p138 = por %p136, %p137
    %p139 = scmp.ne.s32.totalorder %s131, %s134
    %p140 = scmp.eq.s32.totalorder %s11, 0
    %p141 = por %p139, %p140
    %p142 = scmp.ne.s32.totalorder %s131, %s134
    %p143 = scmp.eq.s32.totalorder %s16, 1
    %p144 = por %p142, %p143
    %p145 = scmp.ne.s32.totalorder %s134, %s135
    %p146 = scmp.eq.s32.totalorder %s16, 0
    %p147 = por %p145, %p146
    %p148 = scmp.ne.s32.totalorder %s134, %s135
    %p149 = scmp.eq.s32.totalorder %s17, 1
    %p150 = por %p148, %p149
    %p152 = scmp.ne.s32.totalorder %s135, %s151
    %p153 = scmp.eq.s32.totalorder %s17, 0
    %p154 = por %p152, %p153
    %p155 = scmp.le.s32.totalorder 1, %s11
    %p156 = scmp.lt.s32.totalorder %s11, 3
    %p157 = pnand %p155, %p156
    %p158 = pneg %p157
    // Predicated region
    $region9: #{temporal_of_embedding_forward.2} parent=5 // pred_check
      _
    $region10: #{temporal_of_embedding_forward.2} parent=5 // pred_check_branch
      %160 = sbr.rel (%p157) target = $region12
    $region11: #{temporal_of_embedding_forward.2} parent=5 // pred_region
      %s161 = ssub.s32 %s11, 1
      // Predicated region
      $region13: #{temporal_of_embedding_forward.2} parent=11 // pred_check
        %p162 = pneg %p58
      $region14: #{temporal_of_embedding_forward.2} parent=11 // pred_check_branch
        %164 = sbr.rel (%p162) target = $region16
      $region15: #{temporal_of_embedding_forward.2} parent=11 // pred_region
        _
      $region16: #{temporal_of_embedding_forward.2} parent=11 // pred_fallthru
        _
      // Predicated region
      $region17: #{temporal_of_embedding_forward.2} parent=11 // pred_check
        %p165 = pneg %p79
      $region18: #{temporal_of_embedding_forward.2} parent=11 // pred_check_branch
        %167 = sbr.rel (%p165) target = $region20
      $region19: #{temporal_of_embedding_forward.2} parent=11 // pred_region
        _
      $region20: #{temporal_of_embedding_forward.2} parent=11 // pred_fallthru
        _
      // Predicated region
      $region21: #{temporal_of_embedding_forward.2} parent=11 // pred_check
        %p168 = pneg %p100
      $region22: #{temporal_of_embedding_forward.2} parent=11 // pred_check_branch
        %170 = sbr.rel (%p168) target = $region24
      $region23: #{temporal_of_embedding_forward.2} parent=11 // pred_region
        _
      $region24: #{temporal_of_embedding_forward.2} parent=11 // pred_fallthru
        _
      // Predicated region
      $region25: #{temporal_of_embedding_forward.2} parent=11 // pred_check
        %p171 = pneg %p121
      $region26: #{temporal_of_embedding_forward.2} parent=11 // pred_check_branch
        %173 = sbr.rel (%p171) target = $region28
      $region27: #{temporal_of_embedding_forward.2} parent=11 // pred_region
        _
      $region28: #{temporal_of_embedding_forward.2} parent=11 // pred_fallthru
        _
    $region12: #{temporal_of_embedding_forward.2} parent=5 // pred_fallthru
      _
    %p174 = scmp.lt.s32.totalorder %s11, 2
    // Predicated region
    $region29: #{temporal_of_embedding_forward.2} parent=5 // pred_check
      %p175 = pneg %p174
    $region30: #{temporal_of_embedding_forward.2} parent=5 // pred_check_branch
      %177 = sbr.rel (%p175) target = $region32
    $region31: #{temporal_of_embedding_forward.2} parent=5 // pred_region
      // Predicated region
      $region33: #{temporal_of_embedding_forward.2} parent=31 // pred_check
        %p178 = pneg %p31
      $region34: #{temporal_of_embedding_forward.2} parent=31 // pred_check_branch
        %180 = sbr.rel (%p178) target = $region36
      $region35: #{temporal_of_embedding_forward.2} parent=31 // pred_region
        %s181 = smul.u32 8, %s11
        %s182 = ssub.s32 12, %s181
        %p183 = scmp.lt.s32.totalorder %s182, 8
        %s184 = scalar_select %p183, %s182, 8
        %s185 = smul.u32 8, %s184
        %s186 = smul.u32 %s185, 8
        %p187 = scmp.lt.s32.totalorder %s181, 11
        %s188 = scalar_select %p187, %s181, 11
        %s189 = smul.addr %s188, 8
        %s190 = smul.addr %s189, 8
        %s191 = scalar_lea.vmem %s0, %s190
        %s192 = smul.u32 8, %s11
        %s193 = ssub.s32 12, %s192
        %p194 = scmp.lt.s32.totalorder %s193, 8
        %s195 = scalar_select %p194, %s193, 8
        %s196 = smul.u32 8, %s195
        %s197 = smul.u32 %s196, 8
      $region36: #{temporal_of_embedding_forward.2} parent=31 // pred_fallthru
        _
    $region32: #{temporal_of_embedding_forward.2} parent=5 // pred_fallthru
      _
    %p198 = scmp.le.s32.totalorder 1, %s11
    %p199 = scmp.lt.s32.totalorder %s11, 3
    %p200 = pnand %p198, %p199
    %p201 = pneg %p200
    // Predicated region
    $region37: #{temporal_of_embedding_forward.2} parent=5 // pred_check
      _
    $region38: #{temporal_of_embedding_forward.2} parent=5 // pred_check_branch
      %203 = sbr.rel (%p200) target = $region40
    $region39: #{temporal_of_embedding_forward.2} parent=5 // pred_region
      %s204 = ssub.s32 %s11, 1
      %s205 = smul.u32 8, %s16
      %s206 = ssub.s32 12, %s205
      %p207 = scmp.lt.s32.totalorder %s206, 8
      %s208 = scalar_select %p207, %s206, 8
      %s209 = smul.u32 8, %s208
      %s210 = smul.u32 %s209, 8
      %p211 = scmp.lt.s32.totalorder %s205, 11
      %s212 = scalar_select %p211, %s205, 11
      %s213 = smul.addr %s212, 8
      %s214 = smul.addr %s213, 8
      %s215 = scalar_lea.vmem %s0, %s214
      %p216 = pneg %p37
      %p217 = pneg %p34
      %p218 = pneg %p58
      %p219 = pneg %p55
      %p220 = pneg %p79
      %p221 = pneg %p76
      %p222 = pneg %p100
      %p223 = pneg %p97
      %p224 = pneg %p121
      %p225 = pneg %p118
      %p226 = pneg %p147
      %p227 = pneg %p144
      %p228 = scmp.lt.s32.totalorder %s16, 1
      %s229 = scalar_select %p228, %s16, 1
      %s230 = smul.addr %s229, 8
      %s231 = scalar_lea.vmem %s5, %s230
      %s232 = smul.u32 8, %s16
      %s233 = ssub.s32 12, %s232
      %p234 = scmp.lt.s32.totalorder %s233, 8
      %s235 = scalar_select %p234, %s233, 8
      %s236 = smul.u32 8, %s235
      %s237 = smul.u32 %s236, 8
      %p238 = scmp.lt.s32.totalorder %s232, 11
      %s239 = scalar_select %p238, %s232, 11
      %s240 = smul.addr %s239, 8
      %s241 = smul.addr %s240, 8
      %s242 = scalar_lea.vmem %s0, %s241
      %s243 = smul.u32 8, %s16
      %s244 = ssub.s32 12, %s243
      %p245 = scmp.lt.s32.totalorder %s244, 8
      %s246 = scalar_select %p245, %s244, 8
      %s247 = smul.u32 8, %s246
      %s248 = smul.u32 %s247, 8
      %p249 = scmp.lt.s32.totalorder %s16, 1
      %s250 = scalar_select %p249, %s16, 1
      %s251 = smul.addr %s250, 8
      %s252 = scalar_lea.vmem %s5, %s251
      %v254 = vld [vmem:[%s1] sm:$0x3]
      %v255 = vld [vmem:[%s2] sm:$0xff]
      %v256 = vld [vmem:[%s2 + $0x8] sm:$0xff]
      %v257 = vld [vmem:[%s2 + $0x10] sm:$0xff]
      %v258 = vld [vmem:[%s2 + $0x18] sm:$0xff]
      %v259 = vld [vmem:[%s242] ss:$16 sm:$0x3]
      %s260 = scalar_lea.vmem %s242, 64
      %v261 = vld [vmem:[%s260] ss:$16 sm:$0x3]
      %s262 = scalar_lea.vmem %s242, 128
      %v263 = vld [vmem:[%s262] ss:$16 sm:$0x3]
      %s264 = scalar_lea.vmem %s242, 192
      %v265 = vld [vmem:[%s264] ss:$16 sm:$0x3]
      %s266 = scalar_lea.vmem %s242, 256
      %v267 = vld [vmem:[%s266] ss:$16 sm:$0x3]
      %s268 = scalar_lea.vmem %s242, 320
      %v269 = vld [vmem:[%s268] ss:$16 sm:$0x3]
      %s270 = scalar_lea.vmem %s242, 384
      %v271 = vld [vmem:[%s270] ss:$16 sm:$0x3]
      %s272 = scalar_lea.vmem %s242, 448
      %v273 = vld [vmem:[%s272] ss:$16 sm:$0x3]
      %v274 = vmul.f32 %v259, %v254
      %v275 = vmul.f32 %v261, %v254
      %v276 = vmul.f32 %v263, %v254
      %v277 = vmul.f32 %v265, %v254
      %v278 = vmul.f32 %v267, %v254
      %v279 = vmul.f32 %v269, %v254
      %v280 = vmul.f32 %v271, %v254
      %v281 = vmul.f32 %v273, %v254
      %vm282 = vcmask 254976
      %v283 = vsel %vm282, %v274, 0.0
      %v284 = vrot.slane %v283, 4
      %v285 = vadd.f32 %v283, %v284
      %v286 = vrot.slane %v285, 2
      %v287 = vadd.f32 %v285, %v286
      %v288 = vrot.slane %v287, 1
      %v289 = vadd.f32 %v287, %v288
      %v290 = vsel %vm282, %v275, 0.0
      %v291 = vrot.slane %v290, 4
      %v292 = vadd.f32 %v290, %v291
      %v293 = vrot.slane %v292, 2
      %v294 = vadd.f32 %v292, %v293
      %v295 = vrot.slane %v294, 1
      %v296 = vadd.f32 %v294, %v295
      %v297 = vsel %vm282, %v276, 0.0
      %v298 = vrot.slane %v297, 4
      %v299 = vadd.f32 %v297, %v298
      %v300 = vrot.slane %v299, 2
      %v301 = vadd.f32 %v299, %v300
      %v302 = vrot.slane %v301, 1
      %v303 = vadd.f32 %v301, %v302
      %v304 = vsel %vm282, %v277, 0.0
      %v305 = vrot.slane %v304, 4
      %v306 = vadd.f32 %v304, %v305
      %v307 = vrot.slane %v306, 2
      %v308 = vadd.f32 %v306, %v307
      %v309 = vrot.slane %v308, 1
      %v310 = vadd.f32 %v308, %v309
      %v311 = vsel %vm282, %v278, 0.0
      %v312 = vrot.slane %v311, 4
      %v313 = vadd.f32 %v311, %v312
      %v314 = vrot.slane %v313, 2
      %v315 = vadd.f32 %v313, %v314
      %v316 = vrot.slane %v315, 1
      %v317 = vadd.f32 %v315, %v316
      %v318 = vsel %vm282, %v279, 0.0
      %v319 = vrot.slane %v318, 4
      %v320 = vadd.f32 %v318, %v319
      %v321 = vrot.slane %v320, 2
      %v322 = vadd.f32 %v320, %v321
      %v323 = vrot.slane %v322, 1
      %v324 = vadd.f32 %v322, %v323
      %v325 = vsel %vm282, %v280, 0.0
      %v326 = vrot.slane %v325, 4
      %v327 = vadd.f32 %v325, %v326
      %v328 = vrot.slane %v327, 2
      %v329 = vadd.f32 %v327, %v328
      %v330 = vrot.slane %v329, 1
      %v331 = vadd.f32 %v329, %v330
      %v332 = vsel %vm282, %v281, 0.0
      %v333 = vrot.slane %v332, 4
      %v334 = vadd.f32 %v332, %v333
      %v335 = vrot.slane %v334, 2
      %v336 = vadd.f32 %v334, %v335
      %v337 = vrot.slane %v336, 1
      %v338 = vadd.f32 %v336, %v337
      %vm347 = vcmask 1041409
      %v348 = vsel %vm347, %v296, %v289
      %vm349 = vcmask 1042434
      %v350 = vsel %vm349, %v303, %v348
      %vm351 = vcmask 1043459
      %v352 = vsel %vm351, %v310, %v350
      %vm353 = vcmask 1044484
      %v354 = vsel %vm353, %v317, %v352
      %vm355 = vcmask 1045509
      %v356 = vsel %vm355, %v324, %v354
      %vm357 = vcmask 1046534
      %v358 = vsel %vm357, %v331, %v356
      %vm359 = vcmask 1047559
      %v360 = vsel %vm359, %v338, %v358
      %vm361 = vcmask 261120
      %v362 = vsel %vm361, %v360, 0
      %364 = vmatpush.msra.mxu0 0.0
      %365 = vmatpush.msra.mxu0 0.0
      %366 = vmatpush.msra.mxu0 0.0
      %367 = vmatpush.msra.mxu0 0.0
      %368 = vmatpush.msra.mxu0 0.0
      %369 = vmatpush.msra.mxu0 0.0
      %370 = vmatpush.msra.mxu0 0.0
      %371 = vmatpush.msra.mxu0 0.0
      %372 = vmatpush.msra.mxu0 0.0
      %373 = vmatpush.msra.mxu0 0.0
      %374 = vmatpush.msra.mxu0 0.0
      %375 = vmatpush.msra.mxu0 0.0
      %376 = vmatpush.msra.mxu0 %v258
      %377 = vmatpush.msra.mxu0 %v257
      %378 = vmatpush.msra.mxu0 %v256
      %379 = vmatpush.msra.mxu0 %v255
      %380 = vmatmul.f32.gmra.mxu0 %v362
      %v381 = vpop.f32.mrf.mxu0
      %v382 = vadd.f32 0.0, %v381
      %383 = vdwg.mxu0
      %v384 = vpack.c.bf16 %v382, %v382
      %v385 = vld [vmem:[%s3] sm:$0xf]
      %v386 = vld [vmem:[%s3 + $0x4] sm:$0xf]
      %s387 = scalar_lea.vmem %s242, 1
      %v388 = vld [vmem:[%s387] ss:$16 sm:$0x3]
      %s389 = scalar_lea.vmem %s242, 65
      %v390 = vld [vmem:[%s389] ss:$16 sm:$0x3]
      %s391 = scalar_lea.vmem %s242, 129
      %v392 = vld [vmem:[%s391] ss:$16 sm:$0x3]
      %s393 = scalar_lea.vmem %s242, 193
      %v394 = vld [vmem:[%s393] ss:$16 sm:$0x3]
      %s395 = scalar_lea.vmem %s242, 257
      %v396 = vld [vmem:[%s395] ss:$16 sm:$0x3]
      %s397 = scalar_lea.vmem %s242, 321
      %v398 = vld [vmem:[%s397] ss:$16 sm:$0x3]
      %s399 = scalar_lea.vmem %s242, 385
      %v400 = vld [vmem:[%s399] ss:$16 sm:$0x3]
      %s401 = scalar_lea.vmem %s242, 449
      %v402 = vld [vmem:[%s401] ss:$16 sm:$0x3]
      %v403 = vmul.f32 %v388, %v254
      %v404 = vmul.f32 %v390, %v254
      %v405 = vmul.f32 %v392, %v254
      %v406 = vmul.f32 %v394, %v254
      %v407 = vmul.f32 %v396, %v254
      %v408 = vmul.f32 %v398, %v254
      %v409 = vmul.f32 %v400, %v254
      %v410 = vmul.f32 %v402, %v254
      %v411 = vsel %vm282, %v403, 0.0
      %v412 = vrot.slane %v411, 4
      %v413 = vadd.f32 %v411, %v412
      %v414 = vrot.slane %v413, 2
      %v415 = vadd.f32 %v413, %v414
      %v416 = vrot.slane %v415, 1
      %v417 = vadd.f32 %v415, %v416
      %v418 = vsel %vm282, %v404, 0.0
      %v419 = vrot.slane %v418, 4
      %v420 = vadd.f32 %v418, %v419
      %v421 = vrot.slane %v420, 2
      %v422 = vadd.f32 %v420, %v421
      %v423 = vrot.slane %v422, 1
      %v424 = vadd.f32 %v422, %v423
      %v425 = vsel %vm282, %v405, 0.0
      %v426 = vrot.slane %v425, 4
      %v427 = vadd.f32 %v425, %v426
      %v428 = vrot.slane %v427, 2
      %v429 = vadd.f32 %v427, %v428
      %v430 = vrot.slane %v429, 1
      %v431 = vadd.f32 %v429, %v430
      %v432 = vsel %vm282, %v406, 0.0
      %v433 = vrot.slane %v432, 4
      %v434 = vadd.f32 %v432, %v433
      %v435 = vrot.slane %v434, 2
      %v436 = vadd.f32 %v434, %v435
      %v437 = vrot.slane %v436, 1
      %v438 = vadd.f32 %v436, %v437
      %v439 = vsel %vm282, %v407, 0.0
      %v440 = vrot.slane %v439, 4
      %v441 = vadd.f32 %v439, %v440
      %v442 = vrot.slane %v441, 2
      %v443 = vadd.f32 %v441, %v442
      %v444 = vrot.slane %v443, 1
      %v445 = vadd.f32 %v443, %v444
      %v446 = vsel %vm282, %v408, 0.0
      %v447 = vrot.slane %v446, 4
      %v448 = vadd.f32 %v446, %v447
      %v449 = vrot.slane %v448, 2
      %v450 = vadd.f32 %v448, %v449
      %v451 = vrot.slane %v450, 1
      %v452 = vadd.f32 %v450, %v451
      %v453 = vsel %vm282, %v409, 0.0
      %v454 = vrot.slane %v453, 4
      %v455 = vadd.f32 %v453, %v454
      %v456 = vrot.slane %v455, 2
      %v457 = vadd.f32 %v455, %v456
      %v458 = vrot.slane %v457, 1
      %v459 = vadd.f32 %v457, %v458
      %v460 = vsel %vm282, %v410, 0.0
      %v461 = vrot.slane %v460, 4
      %v462 = vadd.f32 %v460, %v461
      %v463 = vrot.slane %v462, 2
      %v464 = vadd.f32 %v462, %v463
      %v465 = vrot.slane %v464, 1
      %v466 = vadd.f32 %v464, %v465
      %v475 = vsel %vm347, %v424, %v417
      %v476 = vsel %vm349, %v431, %v475
      %v477 = vsel %vm351, %v438, %v476
      %v478 = vsel %vm353, %v445, %v477
      %v479 = vsel %vm355, %v452, %v478
      %v480 = vsel %vm357, %v459, %v479
      %v481 = vsel %vm359, %v466, %v480
      %v482 = vsel %vm361, %v481, 0
      %484 = vmatpush.msra.mxu0 0.0
      %485 = vmatpush.msra.mxu0 0.0
      %486 = vmatpush.msra.mxu0 0.0
      %487 = vmatpush.msra.mxu0 0.0
      %488 = vmatpush.msra.mxu0 0.0
      %489 = vmatpush.msra.mxu0 0.0
      %490 = vmatpush.msra.mxu0 0.0
      %491 = vmatpush.msra.mxu0 0.0
      %492 = vmatpush.msra.mxu0 0.0
      %493 = vmatpush.msra.mxu0 0.0
      %494 = vmatpush.msra.mxu0 0.0
      %495 = vmatpush.msra.mxu0 0.0
      %496 = vmatpush.msra.mxu0 %v258
      %497 = vmatpush.msra.mxu0 %v257
      %498 = vmatpush.msra.mxu0 %v256
      %499 = vmatpush.msra.mxu0 %v255
      %500 = vmatmul.f32.gmra.mxu0 %v482
      %v501 = vpop.f32.mrf.mxu0
      %v502 = vadd.f32 0.0, %v501
      %503 = vdwg.mxu0
      %v504 = vpack.c.bf16 %v502, %v502
      %s505 = scalar_lea.vmem %s3, 8
      %v506 = vld [vmem:[%s505] sm:$0xf]
      %v507 = vld [vmem:[%s505 + $0x4] sm:$0xf]
      %v510 = vunpack.c.l.b16 %v506
      %v511 = vunpack.c.l.b16 %v507
      %v512 = vpack.c.b16 %v511, %v510
      %vm514 = vcmask 130048
      %v516 = vsel %vm514, %v504, 0
      %518 = vmatpush.bf16.msra.mxu0 0
      %519 = vmatpush.bf16.msra.mxu0 0
      %520 = vmatpush.bf16.msra.mxu0 0
      %521 = vmatpush.bf16.msra.mxu0 0
      %522 = vmatpush.bf16.msra.mxu0 0
      %523 = vmatpush.bf16.msra.mxu0 0
      %524 = vmatpush.bf16.msra.mxu0 0
      %525 = vmatpush.bf16.msra.mxu0 %v512
      %526 = vmatmul.bf16.gmra.mxu0 %v516
      %v527 = vpop.f32.mrf.mxu0
      %v528 = vadd.f32 0.0, %v527
      %v529 = vpop.f32.mrf.mxu0
      %530 = vdwg.mxu0
      %v533 = vunpack.c.l.b16 %v385
      %v534 = vunpack.c.l.b16 %v386
      %v535 = vpack.c.b16 %v534, %v533
      %v538 = vsel %vm514, %v384, 0
      %540 = vmatpush.bf16.msra.mxu0 0
      %541 = vmatpush.bf16.msra.mxu0 0
      %542 = vmatpush.bf16.msra.mxu0 0
      %543 = vmatpush.bf16.msra.mxu0 0
      %544 = vmatpush.bf16.msra.mxu0 0
      %545 = vmatpush.bf16.msra.mxu0 0
      %546 = vmatpush.bf16.msra.mxu0 0
      %547 = vmatpush.bf16.msra.mxu0 %v535
      %548 = vmatmul.bf16.gmra.mxu0 %v538
      %v549 = vpop.f32.mrf.mxu0
      %v550 = vadd.f32 %v528, %v549
      %v551 = vpop.f32.mrf.mxu0
      %552 = vdwg.mxu0
      %s553 = scalar_lea.vmem %s242, 2
      %v554 = vld [vmem:[%s553] ss:$16 sm:$0x3]
      %s555 = scalar_lea.vmem %s242, 66
      %v556 = vld [vmem:[%s555] ss:$16 sm:$0x3]
      %s557 = scalar_lea.vmem %s242, 130
      %v558 = vld [vmem:[%s557] ss:$16 sm:$0x3]
      %s559 = scalar_lea.vmem %s242, 194
      %v560 = vld [vmem:[%s559] ss:$16 sm:$0x3]
      %s561 = scalar_lea.vmem %s242, 258
      %v562 = vld [vmem:[%s561] ss:$16 sm:$0x3]
      %s563 = scalar_lea.vmem %s242, 322
      %v564 = vld [vmem:[%s563] ss:$16 sm:$0x3]
      %s565 = scalar_lea.vmem %s242, 386
      %v566 = vld [vmem:[%s565] ss:$16 sm:$0x3]
      %s567 = scalar_lea.vmem %s242, 450
      %v568 = vld [vmem:[%s567] ss:$16 sm:$0x3]
      %v569 = vmul.f32 %v554, %v254
      %v570 = vmul.f32 %v556, %v254
      %v571 = vmul.f32 %v558, %v254
      %v572 = vmul.f32 %v560, %v254
      %v573 = vmul.f32 %v562, %v254
      %v574 = vmul.f32 %v564, %v254
      %v575 = vmul.f32 %v566, %v254
      %v576 = vmul.f32 %v568, %v254
      %v577 = vsel %vm282, %v569, 0.0
      %v578 = vrot.slane %v577, 4
      %v579 = vadd.f32 %v577, %v578
      %v580 = vrot.slane %v579, 2
      %v581 = vadd.f32 %v579, %v580
      %v582 = vrot.slane %v581, 1
      %v583 = vadd.f32 %v581, %v582
      %v584 = vsel %vm282, %v570, 0.0
      %v585 = vrot.slane %v584, 4
      %v586 = vadd.f32 %v584, %v585
      %v587 = vrot.slane %v586, 2
      %v588 = vadd.f32 %v586, %v587
      %v589 = vrot.slane %v588, 1
      %v590 = vadd.f32 %v588, %v589
      %v591 = vsel %vm282, %v571, 0.0
      %v592 = vrot.slane %v591, 4
      %v593 = vadd.f32 %v591, %v592
      %v594 = vrot.slane %v593, 2
      %v595 = vadd.f32 %v593, %v594
      %v596 = vrot.slane %v595, 1
      %v597 = vadd.f32 %v595, %v596
      %v598 = vsel %vm282, %v572, 0.0
      %v599 = vrot.slane %v598, 4
      %v600 = vadd.f32 %v598, %v599
      %v601 = vrot.slane %v600, 2
      %v602 = vadd.f32 %v600, %v601
      %v603 = vrot.slane %v602, 1
      %v604 = vadd.f32 %v602, %v603
      %v605 = vsel %vm282, %v573, 0.0
      %v606 = vrot.slane %v605, 4
      %v607 = vadd.f32 %v605, %v606
      %v608 = vrot.slane %v607, 2
      %v609 = vadd.f32 %v607, %v608
      %v610 = vrot.slane %v609, 1
      %v611 = vadd.f32 %v609, %v610
      %v612 = vsel %vm282, %v574, 0.0
      %v613 = vrot.slane %v612, 4
      %v614 = vadd.f32 %v612, %v613
      %v615 = vrot.slane %v614, 2
      %v616 = vadd.f32 %v614, %v615
      %v617 = vrot.slane %v616, 1
      %v618 = vadd.f32 %v616, %v617
      %v619 = vsel %vm282, %v575, 0.0
      %v620 = vrot.slane %v619, 4
      %v621 = vadd.f32 %v619, %v620
      %v622 = vrot.slane %v621, 2
      %v623 = vadd.f32 %v621, %v622
      %v624 = vrot.slane %v623, 1
      %v625 = vadd.f32 %v623, %v624
      %v626 = vsel %vm282, %v576, 0.0
      %v627 = vrot.slane %v626, 4
      %v628 = vadd.f32 %v626, %v627
      %v629 = vrot.slane %v628, 2
      %v630 = vadd.f32 %v628, %v629
      %v631 = vrot.slane %v630, 1
      %v632 = vadd.f32 %v630, %v631
      %v641 = vsel %vm347, %v590, %v583
      %v642 = vsel %vm349, %v597, %v641
      %v643 = vsel %vm351, %v604, %v642
      %v644 = vsel %vm353, %v611, %v643
      %v645 = vsel %vm355, %v618, %v644
      %v646 = vsel %vm357, %v625, %v645
      %v647 = vsel %vm359, %v632, %v646
      %v648 = vsel %vm361, %v647, 0
      %650 = vmatpush.msra.mxu0 0.0
      %651 = vmatpush.msra.mxu0 0.0
      %652 = vmatpush.msra.mxu0 0.0
      %653 = vmatpush.msra.mxu0 0.0
      %654 = vmatpush.msra.mxu0 0.0
      %655 = vmatpush.msra.mxu0 0.0
      %656 = vmatpush.msra.mxu0 0.0
      %657 = vmatpush.msra.mxu0 0.0
      %658 = vmatpush.msra.mxu0 0.0
      %659 = vmatpush.msra.mxu0 0.0
      %660 = vmatpush.msra.mxu0 0.0
      %661 = vmatpush.msra.mxu0 0.0
      %662 = vmatpush.msra.mxu0 %v258
      %663 = vmatpush.msra.mxu0 %v257
      %664 = vmatpush.msra.mxu0 %v256
      %665 = vmatpush.msra.mxu0 %v255
      %666 = vmatmul.f32.gmra.mxu0 %v648
      %v667 = vpop.f32.mrf.mxu0
      %v668 = vadd.f32 0.0, %v667
      %669 = vdwg.mxu0
      %v670 = vpack.c.bf16 %v668, %v668
      %s671 = scalar_lea.vmem %s3, 16
      %v672 = vld [vmem:[%s671] sm:$0xf]
      %v673 = vld [vmem:[%s671 + $0x4] sm:$0xf]
      %v676 = vunpack.c.l.b16 %v672
      %v677 = vunpack.c.l.b16 %v673
      %v678 = vpack.c.b16 %v677, %v676
      %v681 = vsel %vm514, %v670, 0
      %683 = vmatpush.bf16.msra.mxu0 0
      %684 = vmatpush.bf16.msra.mxu0 0
      %685 = vmatpush.bf16.msra.mxu0 0
      %686 = vmatpush.bf16.msra.mxu0 0
      %687 = vmatpush.bf16.msra.mxu0 0
      %688 = vmatpush.bf16.msra.mxu0 0
      %689 = vmatpush.bf16.msra.mxu0 0
      %690 = vmatpush.bf16.msra.mxu0 %v678
      %691 = vmatmul.bf16.gmra.mxu0 %v681
      %v692 = vpop.f32.mrf.mxu0
      %v693 = vadd.f32 0.0, %v692
      %v694 = vpop.f32.mrf.mxu0
      %695 = vdwg.mxu0
      %v696 = vadd.f32 %v550, %v693
      %s697 = scalar_lea.vmem %s242, 3
      %v698 = vld [vmem:[%s697] ss:$16 sm:$0x3]
      %s699 = scalar_lea.vmem %s242, 67
      %v700 = vld [vmem:[%s699] ss:$16 sm:$0x3]
      %s701 = scalar_lea.vmem %s242, 131
      %v702 = vld [vmem:[%s701] ss:$16 sm:$0x3]
      %s703 = scalar_lea.vmem %s242, 195
      %v704 = vld [vmem:[%s703] ss:$16 sm:$0x3]
      %s705 = scalar_lea.vmem %s242, 259
      %v706 = vld [vmem:[%s705] ss:$16 sm:$0x3]
      %s707 = scalar_lea.vmem %s242, 323
      %v708 = vld [vmem:[%s707] ss:$16 sm:$0x3]
      %s709 = scalar_lea.vmem %s242, 387
      %v710 = vld [vmem:[%s709] ss:$16 sm:$0x3]
      %s711 = scalar_lea.vmem %s242, 451
      %v712 = vld [vmem:[%s711] ss:$16 sm:$0x3]
      %v713 = vmul.f32 %v698, %v254
      %v714 = vmul.f32 %v700, %v254
      %v715 = vmul.f32 %v702, %v254
      %v716 = vmul.f32 %v704, %v254
      %v717 = vmul.f32 %v706, %v254
      %v718 = vmul.f32 %v708, %v254
      %v719 = vmul.f32 %v710, %v254
      %v720 = vmul.f32 %v712, %v254
      %v721 = vsel %vm282, %v713, 0.0
      %v722 = vrot.slane %v721, 4
      %v723 = vadd.f32 %v721, %v722
      %v724 = vrot.slane %v723, 2
      %v725 = vadd.f32 %v723, %v724
      %v726 = vrot.slane %v725, 1
      %v727 = vadd.f32 %v725, %v726
      %v728 = vsel %vm282, %v714, 0.0
      %v729 = vrot.slane %v728, 4
      %v730 = vadd.f32 %v728, %v729
      %v731 = vrot.slane %v730, 2
      %v732 = vadd.f32 %v730, %v731
      %v733 = vrot.slane %v732, 1
      %v734 = vadd.f32 %v732, %v733
      %v735 = vsel %vm282, %v715, 0.0
      %v736 = vrot.slane %v735, 4
      %v737 = vadd.f32 %v735, %v736
      %v738 = vrot.slane %v737, 2
      %v739 = vadd.f32 %v737, %v738
      %v740 = vrot.slane %v739, 1
      %v741 = vadd.f32 %v739, %v740
      %v742 = vsel %vm282, %v716, 0.0
      %v743 = vrot.slane %v742, 4
      %v744 = vadd.f32 %v742, %v743
      %v745 = vrot.slane %v744, 2
      %v746 = vadd.f32 %v744, %v745
      %v747 = vrot.slane %v746, 1
      %v748 = vadd.f32 %v746, %v747
      %v749 = vsel %vm282, %v717, 0.0
      %v750 = vrot.slane %v749, 4
      %v751 = vadd.f32 %v749, %v750
      %v752 = vrot.slane %v751, 2
      %v753 = vadd.f32 %v751, %v752
      %v754 = vrot.slane %v753, 1
      %v755 = vadd.f32 %v753, %v754
      %v756 = vsel %vm282, %v718, 0.0
      %v757 = vrot.slane %v756, 4
      %v758 = vadd.f32 %v756, %v757
      %v759 = vrot.slane %v758, 2
      %v760 = vadd.f32 %v758, %v759
      %v761 = vrot.slane %v760, 1
      %v762 = vadd.f32 %v760, %v761
      %v763 = vsel %vm282, %v719, 0.0
      %v764 = vrot.slane %v763, 4
      %v765 = vadd.f32 %v763, %v764
      %v766 = vrot.slane %v765, 2
      %v767 = vadd.f32 %v765, %v766
      %v768 = vrot.slane %v767, 1
      %v769 = vadd.f32 %v767, %v768
      %v770 = vsel %vm282, %v720, 0.0
      %v771 = vrot.slane %v770, 4
      %v772 = vadd.f32 %v770, %v771
      %v773 = vrot.slane %v772, 2
      %v774 = vadd.f32 %v772, %v773
      %v775 = vrot.slane %v774, 1
      %v776 = vadd.f32 %v774, %v775
      %v785 = vsel %vm347, %v734, %v727
      %v786 = vsel %vm349, %v741, %v785
      %v787 = vsel %vm351, %v748, %v786
      %v788 = vsel %vm353, %v755, %v787
      %v789 = vsel %vm355, %v762, %v788
      %v790 = vsel %vm357, %v769, %v789
      %v791 = vsel %vm359, %v776, %v790
      %v792 = vsel %vm361, %v791, 0
      %794 = vmatpush.msra.mxu0 0.0
      %795 = vmatpush.msra.mxu0 0.0
      %796 = vmatpush.msra.mxu0 0.0
      %797 = vmatpush.msra.mxu0 0.0
      %798 = vmatpush.msra.mxu0 0.0
      %799 = vmatpush.msra.mxu0 0.0
      %800 = vmatpush.msra.mxu0 0.0
      %801 = vmatpush.msra.mxu0 0.0
      %802 = vmatpush.msra.mxu0 0.0
      %803 = vmatpush.msra.mxu0 0.0
      %804 = vmatpush.msra.mxu0 0.0
      %805 = vmatpush.msra.mxu0 0.0
      %806 = vmatpush.msra.mxu0 %v258
      %807 = vmatpush.msra.mxu0 %v257
      %808 = vmatpush.msra.mxu0 %v256
      %809 = vmatpush.msra.mxu0 %v255
      %810 = vmatmul.f32.gmra.mxu0 %v792
      %v811 = vpop.f32.mrf.mxu0
      %v812 = vadd.f32 0.0, %v811
      %813 = vdwg.mxu0
      %v814 = vpack.c.bf16 %v812, %v812
      %s815 = scalar_lea.vmem %s3, 24
      %v816 = vld [vmem:[%s815] sm:$0xf]
      %v817 = vld [vmem:[%s815 + $0x4] sm:$0xf]
      %v820 = vunpack.c.l.b16 %v816
      %v821 = vunpack.c.l.b16 %v817
      %v822 = vpack.c.b16 %v821, %v820
      %v825 = vsel %vm514, %v814, 0
      %827 = vmatpush.bf16.msra.mxu0 0
      %828 = vmatpush.bf16.msra.mxu0 0
      %829 = vmatpush.bf16.msra.mxu0 0
      %830 = vmatpush.bf16.msra.mxu0 0
      %831 = vmatpush.bf16.msra.mxu0 0
      %832 = vmatpush.bf16.msra.mxu0 0
      %833 = vmatpush.bf16.msra.mxu0 0
      %834 = vmatpush.bf16.msra.mxu0 %v822
      %835 = vmatmul.bf16.gmra.mxu0 %v825
      %v836 = vpop.f32.mrf.mxu0
      %v837 = vadd.f32 0.0, %v836
      %v838 = vpop.f32.mrf.mxu0
      %839 = vdwg.mxu0
      %v840 = vadd.f32 %v696, %v837
      %s841 = scalar_lea.vmem %s242, 4
      %v842 = vld [vmem:[%s841] ss:$16 sm:$0x3]
      %s843 = scalar_lea.vmem %s242, 68
      %v844 = vld [vmem:[%s843] ss:$16 sm:$0x3]
      %s845 = scalar_lea.vmem %s242, 132
      %v846 = vld [vmem:[%s845] ss:$16 sm:$0x3]
      %s847 = scalar_lea.vmem %s242, 196
      %v848 = vld [vmem:[%s847] ss:$16 sm:$0x3]
      %s849 = scalar_lea.vmem %s242, 260
      %v850 = vld [vmem:[%s849] ss:$16 sm:$0x3]
      %s851 = scalar_lea.vmem %s242, 324
      %v852 = vld [vmem:[%s851] ss:$16 sm:$0x3]
      %s853 = scalar_lea.vmem %s242, 388
      %v854 = vld [vmem:[%s853] ss:$16 sm:$0x3]
      %s855 = scalar_lea.vmem %s242, 452
      %v856 = vld [vmem:[%s855] ss:$16 sm:$0x3]
      %v857 = vmul.f32 %v842, %v254
      %v858 = vmul.f32 %v844, %v254
      %v859 = vmul.f32 %v846, %v254
      %v860 = vmul.f32 %v848, %v254
      %v861 = vmul.f32 %v850, %v254
      %v862 = vmul.f32 %v852, %v254
      %v863 = vmul.f32 %v854, %v254
      %v864 = vmul.f32 %v856, %v254
      %v865 = vsel %vm282, %v857, 0.0
      %v866 = vrot.slane %v865, 4
      %v867 = vadd.f32 %v865, %v866
      %v868 = vrot.slane %v867, 2
      %v869 = vadd.f32 %v867, %v868
      %v870 = vrot.slane %v869, 1
      %v871 = vadd.f32 %v869, %v870
      %v872 = vsel %vm282, %v858, 0.0
      %v873 = vrot.slane %v872, 4
      %v874 = vadd.f32 %v872, %v873
      %v875 = vrot.slane %v874, 2
      %v876 = vadd.f32 %v874, %v875
      %v877 = vrot.slane %v876, 1
      %v878 = vadd.f32 %v876, %v877
      %v879 = vsel %vm282, %v859, 0.0
      %v880 = vrot.slane %v879, 4
      %v881 = vadd.f32 %v879, %v880
      %v882 = vrot.slane %v881, 2
      %v883 = vadd.f32 %v881, %v882
      %v884 = vrot.slane %v883, 1
      %v885 = vadd.f32 %v883, %v884
      %v886 = vsel %vm282, %v860, 0.0
      %v887 = vrot.slane %v886, 4
      %v888 = vadd.f32 %v886, %v887
      %v889 = vrot.slane %v888, 2
      %v890 = vadd.f32 %v888, %v889
      %v891 = vrot.slane %v890, 1
      %v892 = vadd.f32 %v890, %v891
      %v893 = vsel %vm282, %v861, 0.0
      %v894 = vrot.slane %v893, 4
      %v895 = vadd.f32 %v893, %v894
      %v896 = vrot.slane %v895, 2
      %v897 = vadd.f32 %v895, %v896
      %v898 = vrot.slane %v897, 1
      %v899 = vadd.f32 %v897, %v898
      %v900 = vsel %vm282, %v862, 0.0
      %v901 = vrot.slane %v900, 4
      %v902 = vadd.f32 %v900, %v901
      %v903 = vrot.slane %v902, 2
      %v904 = vadd.f32 %v902, %v903
      %v905 = vrot.slane %v904, 1
      %v906 = vadd.f32 %v904, %v905
      %v907 = vsel %vm282, %v863, 0.0
      %v908 = vrot.slane %v907, 4
      %v909 = vadd.f32 %v907, %v908
      %v910 = vrot.slane %v909, 2
      %v911 = vadd.f32 %v909, %v910
      %v912 = vrot.slane %v911, 1
      %v913 = vadd.f32 %v911, %v912
      %v914 = vsel %vm282, %v864, 0.0
      %v915 = vrot.slane %v914, 4
      %v916 = vadd.f32 %v914, %v915
      %v917 = vrot.slane %v916, 2
      %v918 = vadd.f32 %v916, %v917
      %v919 = vrot.slane %v918, 1
      %v920 = vadd.f32 %v918, %v919
      %v929 = vsel %vm347, %v878, %v871
      %v930 = vsel %vm349, %v885, %v929
      %v931 = vsel %vm351, %v892, %v930
      %v932 = vsel %vm353, %v899, %v931
      %v933 = vsel %vm355, %v906, %v932
      %v934 = vsel %vm357, %v913, %v933
      %v935 = vsel %vm359, %v920, %v934
      %v936 = vsel %vm361, %v935, 0
      %938 = vmatpush.msra.mxu0 0.0
      %939 = vmatpush.msra.mxu0 0.0
      %940 = vmatpush.msra.mxu0 0.0
      %941 = vmatpush.msra.mxu0 0.0
      %942 = vmatpush.msra.mxu0 0.0
      %943 = vmatpush.msra.mxu0 0.0
      %944 = vmatpush.msra.mxu0 0.0
      %945 = vmatpush.msra.mxu0 0.0
      %946 = vmatpush.msra.mxu0 0.0
      %947 = vmatpush.msra.mxu0 0.0
      %948 = vmatpush.msra.mxu0 0.0
      %949 = vmatpush.msra.mxu0 0.0
      %950 = vmatpush.msra.mxu0 %v258
      %951 = vmatpush.msra.mxu0 %v257
      %952 = vmatpush.msra.mxu0 %v256
      %953 = vmatpush.msra.mxu0 %v255
      %954 = vmatmul.f32.gmra.mxu0 %v936
      %v955 = vpop.f32.mrf.mxu0
      %v956 = vadd.f32 0.0, %v955
      %957 = vdwg.mxu0
      %v958 = vpack.c.bf16 %v956, %v956
      %s959 = scalar_lea.vmem %s3, 32
      %v960 = vld [vmem:[%s959] sm:$0xf]
      %v961 = vld [vmem:[%s959 + $0x4] sm:$0xf]
      %v964 = vunpack.c.l.b16 %v960
      %v965 = vunpack.c.l.b16 %v961
      %v966 = vpack.c.b16 %v965, %v964
      %v969 = vsel %vm514, %v958, 0
      %971 = vmatpush.bf16.msra.mxu0 0
      %972 = vmatpush.bf16.msra.mxu0 0
      %973 = vmatpush.bf16.msra.mxu0 0
      %974 = vmatpush.bf16.msra.mxu0 0
      %975 = vmatpush.bf16.msra.mxu0 0
      %976 = vmatpush.bf16.msra.mxu0 0
      %977 = vmatpush.bf16.msra.mxu0 0
      %978 = vmatpush.bf16.msra.mxu0 %v966
      %979 = vmatmul.bf16.gmra.mxu0 %v969
      %v980 = vpop.f32.mrf.mxu0
      %v981 = vadd.f32 0.0, %v980
      %v982 = vpop.f32.mrf.mxu0
      %983 = vdwg.mxu0
      %v984 = vadd.f32 %v840, %v981
      %s985 = scalar_lea.vmem %s242, 5
      %v986 = vld [vmem:[%s985] ss:$16 sm:$0x3]
      %s987 = scalar_lea.vmem %s242, 69
      %v988 = vld [vmem:[%s987] ss:$16 sm:$0x3]
      %s989 = scalar_lea.vmem %s242, 133
      %v990 = vld [vmem:[%s989] ss:$16 sm:$0x3]
      %s991 = scalar_lea.vmem %s242, 197
      %v992 = vld [vmem:[%s991] ss:$16 sm:$0x3]
      %s993 = scalar_lea.vmem %s242, 261
      %v994 = vld [vmem:[%s993] ss:$16 sm:$0x3]
      %s995 = scalar_lea.vmem %s242, 325
      %v996 = vld [vmem:[%s995] ss:$16 sm:$0x3]
      %s997 = scalar_lea.vmem %s242, 389
      %v998 = vld [vmem:[%s997] ss:$16 sm:$0x3]
      %s999 = scalar_lea.vmem %s242, 453
      %v1000 = vld [vmem:[%s999] ss:$16 sm:$0x3]
      %v1001 = vmul.f32 %v986, %v254
      %v1002 = vmul.f32 %v988, %v254
      %v1003 = vmul.f32 %v990, %v254
      %v1004 = vmul.f32 %v992, %v254
      %v1005 = vmul.f32 %v994, %v254
      %v1006 = vmul.f32 %v996, %v254
      %v1007 = vmul.f32 %v998, %v254
      %v1008 = vmul.f32 %v1000, %v254
      %v1009 = vsel %vm282, %v1001, 0.0
      %v1010 = vrot.slane %v1009, 4
      %v1011 = vadd.f32 %v1009, %v1010
      %v1012 = vrot.slane %v1011, 2
      %v1013 = vadd.f32 %v1011, %v1012
      %v1014 = vrot.slane %v1013, 1
      %v1015 = vadd.f32 %v1013, %v1014
      %v1016 = vsel %vm282, %v1002, 0.0
      %v1017 = vrot.slane %v1016, 4
      %v1018 = vadd.f32 %v1016, %v1017
      %v1019 = vrot.slane %v1018, 2
      %v1020 = vadd.f32 %v1018, %v1019
      %v1021 = vrot.slane %v1020, 1
      %v1022 = vadd.f32 %v1020, %v1021
      %v1023 = vsel %vm282, %v1003, 0.0
      %v1024 = vrot.slane %v1023, 4
      %v1025 = vadd.f32 %v1023, %v1024
      %v1026 = vrot.slane %v1025, 2
      %v1027 = vadd.f32 %v1025, %v1026
      %v1028 = vrot.slane %v1027, 1
      %v1029 = vadd.f32 %v1027, %v1028
      %v1030 = vsel %vm282, %v1004, 0.0
      %v1031 = vrot.slane %v1030, 4
      %v1032 = vadd.f32 %v1030, %v1031
      %v1033 = vrot.slane %v1032, 2
      %v1034 = vadd.f32 %v1032, %v1033
      %v1035 = vrot.slane %v1034, 1
      %v1036 = vadd.f32 %v1034, %v1035
      %v1037 = vsel %vm282, %v1005, 0.0
      %v1038 = vrot.slane %v1037, 4
      %v1039 = vadd.f32 %v1037, %v1038
      %v1040 = vrot.slane %v1039, 2
      %v1041 = vadd.f32 %v1039, %v1040
      %v1042 = vrot.slane %v1041, 1
      %v1043 = vadd.f32 %v1041, %v1042
      %v1044 = vsel %vm282, %v1006, 0.0
      %v1045 = vrot.slane %v1044, 4
      %v1046 = vadd.f32 %v1044, %v1045
      %v1047 = vrot.slane %v1046, 2
      %v1048 = vadd.f32 %v1046, %v1047
      %v1049 = vrot.slane %v1048, 1
      %v1050 = vadd.f32 %v1048, %v1049
      %v1051 = vsel %vm282, %v1007, 0.0
      %v1052 = vrot.slane %v1051, 4
      %v1053 = vadd.f32 %v1051, %v1052
      %v1054 = vrot.slane %v1053, 2
      %v1055 = vadd.f32 %v1053, %v1054
      %v1056 = vrot.slane %v1055, 1
      %v1057 = vadd.f32 %v1055, %v1056
      %v1058 = vsel %vm282, %v1008, 0.0
      %v1059 = vrot.slane %v1058, 4
      %v1060 = vadd.f32 %v1058, %v1059
      %v1061 = vrot.slane %v1060, 2
      %v1062 = vadd.f32 %v1060, %v1061
      %v1063 = vrot.slane %v1062, 1
      %v1064 = vadd.f32 %v1062, %v1063
      %v1073 = vsel %vm347, %v1022, %v1015
      %v1074 = vsel %vm349, %v1029, %v1073
      %v1075 = vsel %vm351, %v1036, %v1074
      %v1076 = vsel %vm353, %v1043, %v1075
      %v1077 = vsel %vm355, %v1050, %v1076
      %v1078 = vsel %vm357, %v1057, %v1077
      %v1079 = vsel %vm359, %v1064, %v1078
      %v1080 = vsel %vm361, %v1079, 0
      %1082 = vmatpush.msra.mxu0 0.0
      %1083 = vmatpush.msra.mxu0 0.0
      %1084 = vmatpush.msra.mxu0 0.0
      %1085 = vmatpush.msra.mxu0 0.0
      %1086 = vmatpush.msra.mxu0 0.0
      %1087 = vmatpush.msra.mxu0 0.0
      %1088 = vmatpush.msra.mxu0 0.0
      %1089 = vmatpush.msra.mxu0 0.0
      %1090 = vmatpush.msra.mxu0 0.0
      %1091 = vmatpush.msra.mxu0 0.0
      %1092 = vmatpush.msra.mxu0 0.0
      %1093 = vmatpush.msra.mxu0 0.0
      %1094 = vmatpush.msra.mxu0 %v258
      %1095 = vmatpush.msra.mxu0 %v257
      %1096 = vmatpush.msra.mxu0 %v256
      %1097 = vmatpush.msra.mxu0 %v255
      %1098 = vmatmul.f32.gmra.mxu0 %v1080
      %v1099 = vpop.f32.mrf.mxu0
      %v1100 = vadd.f32 0.0, %v1099
      %1101 = vdwg.mxu0
      %v1102 = vpack.c.bf16 %v1100, %v1100
      %s1103 = scalar_lea.vmem %s3, 40
      %v1104 = vld [vmem:[%s1103] sm:$0xf]
      %v1105 = vld [vmem:[%s1103 + $0x4] sm:$0xf]
      %v1108 = vunpack.c.l.b16 %v1104
      %v1109 = vunpack.c.l.b16 %v1105
      %v1110 = vpack.c.b16 %v1109, %v1108
      %v1113 = vsel %vm514, %v1102, 0
      %1115 = vmatpush.bf16.msra.mxu0 0
      %1116 = vmatpush.bf16.msra.mxu0 0
      %1117 = vmatpush.bf16.msra.mxu0 0
      %1118 = vmatpush.bf16.msra.mxu0 0
      %1119 = vmatpush.bf16.msra.mxu0 0
      %1120 = vmatpush.bf16.msra.mxu0 0
      %1121 = vmatpush.bf16.msra.mxu0 0
      %1122 = vmatpush.bf16.msra.mxu0 %v1110
      %1123 = vmatmul.bf16.gmra.mxu0 %v1113
      %v1124 = vpop.f32.mrf.mxu0
      %v1125 = vadd.f32 0.0, %v1124
      %v1126 = vpop.f32.mrf.mxu0
      %1127 = vdwg.mxu0
      %v1128 = vadd.f32 %v984, %v1125
      %s1129 = scalar_lea.vmem %s242, 6
      %v1130 = vld [vmem:[%s1129] ss:$16 sm:$0x3]
      %s1131 = scalar_lea.vmem %s242, 70
      %v1132 = vld [vmem:[%s1131] ss:$16 sm:$0x3]
      %s1133 = scalar_lea.vmem %s242, 134
      %v1134 = vld [vmem:[%s1133] ss:$16 sm:$0x3]
      %s1135 = scalar_lea.vmem %s242, 198
      %v1136 = vld [vmem:[%s1135] ss:$16 sm:$0x3]
      %s1137 = scalar_lea.vmem %s242, 262
      %v1138 = vld [vmem:[%s1137] ss:$16 sm:$0x3]
      %s1139 = scalar_lea.vmem %s242, 326
      %v1140 = vld [vmem:[%s1139] ss:$16 sm:$0x3]
      %s1141 = scalar_lea.vmem %s242, 390
      %v1142 = vld [vmem:[%s1141] ss:$16 sm:$0x3]
      %s1143 = scalar_lea.vmem %s242, 454
      %v1144 = vld [vmem:[%s1143] ss:$16 sm:$0x3]
      %v1145 = vmul.f32 %v1130, %v254
      %v1146 = vmul.f32 %v1132, %v254
      %v1147 = vmul.f32 %v1134, %v254
      %v1148 = vmul.f32 %v1136, %v254
      %v1149 = vmul.f32 %v1138, %v254
      %v1150 = vmul.f32 %v1140, %v254
      %v1151 = vmul.f32 %v1142, %v254
      %v1152 = vmul.f32 %v1144, %v254
      %v1153 = vsel %vm282, %v1145, 0.0
      %v1154 = vrot.slane %v1153, 4
      %v1155 = vadd.f32 %v1153, %v1154
      %v1156 = vrot.slane %v1155, 2
      %v1157 = vadd.f32 %v1155, %v1156
      %v1158 = vrot.slane %v1157, 1
      %v1159 = vadd.f32 %v1157, %v1158
      %v1160 = vsel %vm282, %v1146, 0.0
      %v1161 = vrot.slane %v1160, 4
      %v1162 = vadd.f32 %v1160, %v1161
      %v1163 = vrot.slane %v1162, 2
      %v1164 = vadd.f32 %v1162, %v1163
      %v1165 = vrot.slane %v1164, 1
      %v1166 = vadd.f32 %v1164, %v1165
      %v1167 = vsel %vm282, %v1147, 0.0
      %v1168 = vrot.slane %v1167, 4
      %v1169 = vadd.f32 %v1167, %v1168
      %v1170 = vrot.slane %v1169, 2
      %v1171 = vadd.f32 %v1169, %v1170
      %v1172 = vrot.slane %v1171, 1
      %v1173 = vadd.f32 %v1171, %v1172
      %v1174 = vsel %vm282, %v1148, 0.0
      %v1175 = vrot.slane %v1174, 4
      %v1176 = vadd.f32 %v1174, %v1175
      %v1177 = vrot.slane %v1176, 2
      %v1178 = vadd.f32 %v1176, %v1177
      %v1179 = vrot.slane %v1178, 1
      %v1180 = vadd.f32 %v1178, %v1179
      %v1181 = vsel %vm282, %v1149, 0.0
      %v1182 = vrot.slane %v1181, 4
      %v1183 = vadd.f32 %v1181, %v1182
      %v1184 = vrot.slane %v1183, 2
      %v1185 = vadd.f32 %v1183, %v1184
      %v1186 = vrot.slane %v1185, 1
      %v1187 = vadd.f32 %v1185, %v1186
      %v1188 = vsel %vm282, %v1150, 0.0
      %v1189 = vrot.slane %v1188, 4
      %v1190 = vadd.f32 %v1188, %v1189
      %v1191 = vrot.slane %v1190, 2
      %v1192 = vadd.f32 %v1190, %v1191
      %v1193 = vrot.slane %v1192, 1
      %v1194 = vadd.f32 %v1192, %v1193
      %v1195 = vsel %vm282, %v1151, 0.0
      %v1196 = vrot.slane %v1195, 4
      %v1197 = vadd.f32 %v1195, %v1196
      %v1198 = vrot.slane %v1197, 2
      %v1199 = vadd.f32 %v1197, %v1198
      %v1200 = vrot.slane %v1199, 1
      %v1201 = vadd.f32 %v1199, %v1200
      %v1202 = vsel %vm282, %v1152, 0.0
      %v1203 = vrot.slane %v1202, 4
      %v1204 = vadd.f32 %v1202, %v1203
      %v1205 = vrot.slane %v1204, 2
      %v1206 = vadd.f32 %v1204, %v1205
      %v1207 = vrot.slane %v1206, 1
      %v1208 = vadd.f32 %v1206, %v1207
      %v1217 = vsel %vm347, %v1166, %v1159
      %v1218 = vsel %vm349, %v1173, %v1217
      %v1219 = vsel %vm351, %v1180, %v1218
      %v1220 = vsel %vm353, %v1187, %v1219
      %v1221 = vsel %vm355, %v1194, %v1220
      %v1222 = vsel %vm357, %v1201, %v1221
      %v1223 = vsel %vm359, %v1208, %v1222
      %v1224 = vsel %vm361, %v1223, 0
      %1226 = vmatpush.msra.mxu0 0.0
      %1227 = vmatpush.msra.mxu0 0.0
      %1228 = vmatpush.msra.mxu0 0.0
      %1229 = vmatpush.msra.mxu0 0.0
      %1230 = vmatpush.msra.mxu0 0.0
      %1231 = vmatpush.msra.mxu0 0.0
      %1232 = vmatpush.msra.mxu0 0.0
      %1233 = vmatpush.msra.mxu0 0.0
      %1234 = vmatpush.msra.mxu0 0.0
      %1235 = vmatpush.msra.mxu0 0.0
      %1236 = vmatpush.msra.mxu0 0.0
      %1237 = vmatpush.msra.mxu0 0.0
      %1238 = vmatpush.msra.mxu0 %v258
      %1239 = vmatpush.msra.mxu0 %v257
      %1240 = vmatpush.msra.mxu0 %v256
      %1241 = vmatpush.msra.mxu0 %v255
      %1242 = vmatmul.f32.gmra.mxu0 %v1224
      %v1243 = vpop.f32.mrf.mxu0
      %v1244 = vadd.f32 0.0, %v1243
      %1245 = vdwg.mxu0
      %v1246 = vpack.c.bf16 %v1244, %v1244
      %s1247 = scalar_lea.vmem %s3, 48
      %v1248 = vld [vmem:[%s1247] sm:$0xf]
      %v1249 = vld [vmem:[%s1247 + $0x4] sm:$0xf]
      %v1252 = vunpack.c.l.b16 %v1248
      %v1253 = vunpack.c.l.b16 %v1249
      %v1254 = vpack.c.b16 %v1253, %v1252
      %v1257 = vsel %vm514, %v1246, 0
      %1259 = vmatpush.bf16.msra.mxu0 0
      %1260 = vmatpush.bf16.msra.mxu0 0
      %1261 = vmatpush.bf16.msra.mxu0 0
      %1262 = vmatpush.bf16.msra.mxu0 0
      %1263 = vmatpush.bf16.msra.mxu0 0
      %1264 = vmatpush.bf16.msra.mxu0 0
      %1265 = vmatpush.bf16.msra.mxu0 0
      %1266 = vmatpush.bf16.msra.mxu0 %v1254
      %1267 = vmatmul.bf16.gmra.mxu0 %v1257
      %v1268 = vpop.f32.mrf.mxu0
      %v1269 = vadd.f32 0.0, %v1268
      %v1270 = vpop.f32.mrf.mxu0
      %1271 = vdwg.mxu0
      %v1272 = vadd.f32 %v1128, %v1269
      %s1273 = scalar_lea.vmem %s242, 7
      %v1274 = vld [vmem:[%s1273] ss:$16 sm:$0x3]
      %s1275 = scalar_lea.vmem %s242, 71
      %v1276 = vld [vmem:[%s1275] ss:$16 sm:$0x3]
      %s1277 = scalar_lea.vmem %s242, 135
      %v1278 = vld [vmem:[%s1277] ss:$16 sm:$0x3]
      %s1279 = scalar_lea.vmem %s242, 199
      %v1280 = vld [vmem:[%s1279] ss:$16 sm:$0x3]
      %s1281 = scalar_lea.vmem %s242, 263
      %v1282 = vld [vmem:[%s1281] ss:$16 sm:$0x3]
      %s1283 = scalar_lea.vmem %s242, 327
      %v1284 = vld [vmem:[%s1283] ss:$16 sm:$0x3]
      %s1285 = scalar_lea.vmem %s242, 391
      %v1286 = vld [vmem:[%s1285] ss:$16 sm:$0x3]
      %s1287 = scalar_lea.vmem %s242, 455
      %v1288 = vld [vmem:[%s1287] ss:$16 sm:$0x3]
      %v1289 = vmul.f32 %v1274, %v254
      %v1290 = vmul.f32 %v1276, %v254
      %v1291 = vmul.f32 %v1278, %v254
      %v1292 = vmul.f32 %v1280, %v254
      %v1293 = vmul.f32 %v1282, %v254
      %v1294 = vmul.f32 %v1284, %v254
      %v1295 = vmul.f32 %v1286, %v254
      %v1296 = vmul.f32 %v1288, %v254
      %v1297 = vsel %vm282, %v1289, 0.0
      %v1298 = vrot.slane %v1297, 4
      %v1299 = vadd.f32 %v1297, %v1298
      %v1300 = vrot.slane %v1299, 2
      %v1301 = vadd.f32 %v1299, %v1300
      %v1302 = vrot.slane %v1301, 1
      %v1303 = vadd.f32 %v1301, %v1302
      %v1304 = vsel %vm282, %v1290, 0.0
      %v1305 = vrot.slane %v1304, 4
      %v1306 = vadd.f32 %v1304, %v1305
      %v1307 = vrot.slane %v1306, 2
      %v1308 = vadd.f32 %v1306, %v1307
      %v1309 = vrot.slane %v1308, 1
      %v1310 = vadd.f32 %v1308, %v1309
      %v1311 = vsel %vm282, %v1291, 0.0
      %v1312 = vrot.slane %v1311, 4
      %v1313 = vadd.f32 %v1311, %v1312
      %v1314 = vrot.slane %v1313, 2
      %v1315 = vadd.f32 %v1313, %v1314
      %v1316 = vrot.slane %v1315, 1
      %v1317 = vadd.f32 %v1315, %v1316
      %v1318 = vsel %vm282, %v1292, 0.0
      %v1319 = vrot.slane %v1318, 4
      %v1320 = vadd.f32 %v1318, %v1319
      %v1321 = vrot.slane %v1320, 2
      %v1322 = vadd.f32 %v1320, %v1321
      %v1323 = vrot.slane %v1322, 1
      %v1324 = vadd.f32 %v1322, %v1323
      %v1325 = vsel %vm282, %v1293, 0.0
      %v1326 = vrot.slane %v1325, 4
      %v1327 = vadd.f32 %v1325, %v1326
      %v1328 = vrot.slane %v1327, 2
      %v1329 = vadd.f32 %v1327, %v1328
      %v1330 = vrot.slane %v1329, 1
      %v1331 = vadd.f32 %v1329, %v1330
      %v1332 = vsel %vm282, %v1294, 0.0
      %v1333 = vrot.slane %v1332, 4
      %v1334 = vadd.f32 %v1332, %v1333
      %v1335 = vrot.slane %v1334, 2
      %v1336 = vadd.f32 %v1334, %v1335
      %v1337 = vrot.slane %v1336, 1
      %v1338 = vadd.f32 %v1336, %v1337
      %v1339 = vsel %vm282, %v1295, 0.0
      %v1340 = vrot.slane %v1339, 4
      %v1341 = vadd.f32 %v1339, %v1340
      %v1342 = vrot.slane %v1341, 2
      %v1343 = vadd.f32 %v1341, %v1342
      %v1344 = vrot.slane %v1343, 1
      %v1345 = vadd.f32 %v1343, %v1344
      %v1346 = vsel %vm282, %v1296, 0.0
      %v1347 = vrot.slane %v1346, 4
      %v1348 = vadd.f32 %v1346, %v1347
      %v1349 = vrot.slane %v1348, 2
      %v1350 = vadd.f32 %v1348, %v1349
      %v1351 = vrot.slane %v1350, 1
      %v1352 = vadd.f32 %v1350, %v1351
      %v1361 = vsel %vm347, %v1310, %v1303
      %v1362 = vsel %vm349, %v1317, %v1361
      %v1363 = vsel %vm351, %v1324, %v1362
      %v1364 = vsel %vm353, %v1331, %v1363
      %v1365 = vsel %vm355, %v1338, %v1364
      %v1366 = vsel %vm357, %v1345, %v1365
      %v1367 = vsel %vm359, %v1352, %v1366
      %v1368 = vsel %vm361, %v1367, 0
      %1370 = vmatpush.msra.mxu0 0.0
      %1371 = vmatpush.msra.mxu0 0.0
      %1372 = vmatpush.msra.mxu0 0.0
      %1373 = vmatpush.msra.mxu0 0.0
      %1374 = vmatpush.msra.mxu0 0.0
      %1375 = vmatpush.msra.mxu0 0.0
      %1376 = vmatpush.msra.mxu0 0.0
      %1377 = vmatpush.msra.mxu0 0.0
      %1378 = vmatpush.msra.mxu0 0.0
      %1379 = vmatpush.msra.mxu0 0.0
      %1380 = vmatpush.msra.mxu0 0.0
      %1381 = vmatpush.msra.mxu0 0.0
      %1382 = vmatpush.msra.mxu0 %v258
      %1383 = vmatpush.msra.mxu0 %v257
      %1384 = vmatpush.msra.mxu0 %v256
      %1385 = vmatpush.msra.mxu0 %v255
      %1386 = vmatmul.f32.gmra.mxu0 %v1368
      %v1387 = vpop.f32.mrf.mxu0
      %v1388 = vadd.f32 0.0, %v1387
      %1389 = vdwg.mxu0
      %v1390 = vpack.c.bf16 %v1388, %v1388
      %s1391 = scalar_lea.vmem %s3, 56
      %v1392 = vld [vmem:[%s1391] sm:$0xf]
      %v1393 = vld [vmem:[%s1391 + $0x4] sm:$0xf]
      %v1396 = vunpack.c.l.b16 %v1392
      %v1397 = vunpack.c.l.b16 %v1393
      %v1398 = vpack.c.b16 %v1397, %v1396
      %v1401 = vsel %vm514, %v1390, 0
      %1403 = vmatpush.bf16.msra.mxu0 0
      %1404 = vmatpush.bf16.msra.mxu0 0
      %1405 = vmatpush.bf16.msra.mxu0 0
      %1406 = vmatpush.bf16.msra.mxu0 0
      %1407 = vmatpush.bf16.msra.mxu0 0
      %1408 = vmatpush.bf16.msra.mxu0 0
      %1409 = vmatpush.bf16.msra.mxu0 0
      %1410 = vmatpush.bf16.msra.mxu0 %v1398
      %1411 = vmatmul.bf16.gmra.mxu0 %v1401
      %v1412 = vpop.f32.mrf.mxu0
      %v1413 = vadd.f32 0.0, %v1412
      %v1414 = vpop.f32.mrf.mxu0
      %1415 = vdwg.mxu0
      %v1416 = vadd.f32 %v1272, %v1413
      %s1417 = scalar_lea.vmem %s242, 8
      %v1418 = vld [vmem:[%s1417] ss:$16 sm:$0x3]
      %s1419 = scalar_lea.vmem %s242, 72
      %v1420 = vld [vmem:[%s1419] ss:$16 sm:$0x3]
      %s1421 = scalar_lea.vmem %s242, 136
      %v1422 = vld [vmem:[%s1421] ss:$16 sm:$0x3]
      %s1423 = scalar_lea.vmem %s242, 200
      %v1424 = vld [vmem:[%s1423] ss:$16 sm:$0x3]
      %s1425 = scalar_lea.vmem %s242, 264
      %v1426 = vld [vmem:[%s1425] ss:$16 sm:$0x3]
      %s1427 = scalar_lea.vmem %s242, 328
      %v1428 = vld [vmem:[%s1427] ss:$16 sm:$0x3]
      %s1429 = scalar_lea.vmem %s242, 392
      %v1430 = vld [vmem:[%s1429] ss:$16 sm:$0x3]
      %s1431 = scalar_lea.vmem %s242, 456
      %v1432 = vld [vmem:[%s1431] ss:$16 sm:$0x3]
      %v1433 = vmul.f32 %v1418, %v254
      %v1434 = vmul.f32 %v1420, %v254
      %v1435 = vmul.f32 %v1422, %v254
      %v1436 = vmul.f32 %v1424, %v254
      %v1437 = vmul.f32 %v1426, %v254
      %v1438 = vmul.f32 %v1428, %v254
      %v1439 = vmul.f32 %v1430, %v254
      %v1440 = vmul.f32 %v1432, %v254
      %v1441 = vsel %vm282, %v1433, 0.0
      %v1442 = vrot.slane %v1441, 4
      %v1443 = vadd.f32 %v1441, %v1442
      %v1444 = vrot.slane %v1443, 2
      %v1445 = vadd.f32 %v1443, %v1444
      %v1446 = vrot.slane %v1445, 1
      %v1447 = vadd.f32 %v1445, %v1446
      %v1448 = vsel %vm282, %v1434, 0.0
      %v1449 = vrot.slane %v1448, 4
      %v1450 = vadd.f32 %v1448, %v1449
      %v1451 = vrot.slane %v1450, 2
      %v1452 = vadd.f32 %v1450, %v1451
      %v1453 = vrot.slane %v1452, 1
      %v1454 = vadd.f32 %v1452, %v1453
      %v1455 = vsel %vm282, %v1435, 0.0
      %v1456 = vrot.slane %v1455, 4
      %v1457 = vadd.f32 %v1455, %v1456
      %v1458 = vrot.slane %v1457, 2
      %v1459 = vadd.f32 %v1457, %v1458
      %v1460 = vrot.slane %v1459, 1
      %v1461 = vadd.f32 %v1459, %v1460
      %v1462 = vsel %vm282, %v1436, 0.0
      %v1463 = vrot.slane %v1462, 4
      %v1464 = vadd.f32 %v1462, %v1463
      %v1465 = vrot.slane %v1464, 2
      %v1466 = vadd.f32 %v1464, %v1465
      %v1467 = vrot.slane %v1466, 1
      %v1468 = vadd.f32 %v1466, %v1467
      %v1469 = vsel %vm282, %v1437, 0.0
      %v1470 = vrot.slane %v1469, 4
      %v1471 = vadd.f32 %v1469, %v1470
      %v1472 = vrot.slane %v1471, 2
      %v1473 = vadd.f32 %v1471, %v1472
      %v1474 = vrot.slane %v1473, 1
      %v1475 = vadd.f32 %v1473, %v1474
      %v1476 = vsel %vm282, %v1438, 0.0
      %v1477 = vrot.slane %v1476, 4
      %v1478 = vadd.f32 %v1476, %v1477
      %v1479 = vrot.slane %v1478, 2
      %v1480 = vadd.f32 %v1478, %v1479
      %v1481 = vrot.slane %v1480, 1
      %v1482 = vadd.f32 %v1480, %v1481
      %v1483 = vsel %vm282, %v1439, 0.0
      %v1484 = vrot.slane %v1483, 4
      %v1485 = vadd.f32 %v1483, %v1484
      %v1486 = vrot.slane %v1485, 2
      %v1487 = vadd.f32 %v1485, %v1486
      %v1488 = vrot.slane %v1487, 1
      %v1489 = vadd.f32 %v1487, %v1488
      %v1490 = vsel %vm282, %v1440, 0.0
      %v1491 = vrot.slane %v1490, 4
      %v1492 = vadd.f32 %v1490, %v1491
      %v1493 = vrot.slane %v1492, 2
      %v1494 = vadd.f32 %v1492, %v1493
      %v1495 = vrot.slane %v1494, 1
      %v1496 = vadd.f32 %v1494, %v1495
      %v1505 = vsel %vm347, %v1454, %v1447
      %v1506 = vsel %vm349, %v1461, %v1505
      %v1507 = vsel %vm351, %v1468, %v1506
      %v1508 = vsel %vm353, %v1475, %v1507
      %v1509 = vsel %vm355, %v1482, %v1508
      %v1510 = vsel %vm357, %v1489, %v1509
      %v1511 = vsel %vm359, %v1496, %v1510
      %v1512 = vsel %vm361, %v1511, 0
      %1514 = vmatpush.msra.mxu0 0.0
      %1515 = vmatpush.msra.mxu0 0.0
      %1516 = vmatpush.msra.mxu0 0.0
      %1517 = vmatpush.msra.mxu0 0.0
      %1518 = vmatpush.msra.mxu0 0.0
      %1519 = vmatpush.msra.mxu0 0.0
      %1520 = vmatpush.msra.mxu0 0.0
      %1521 = vmatpush.msra.mxu0 0.0
      %1522 = vmatpush.msra.mxu0 0.0
      %1523 = vmatpush.msra.mxu0 0.0
      %1524 = vmatpush.msra.mxu0 0.0
      %1525 = vmatpush.msra.mxu0 0.0
      %1526 = vmatpush.msra.mxu0 %v258
      %1527 = vmatpush.msra.mxu0 %v257
      %1528 = vmatpush.msra.mxu0 %v256
      %1529 = vmatpush.msra.mxu0 %v255
      %1530 = vmatmul.f32.gmra.mxu0 %v1512
      %v1531 = vpop.f32.mrf.mxu0
      %v1532 = vadd.f32 0.0, %v1531
      %1533 = vdwg.mxu0
      %v1534 = vpack.c.bf16 %v1532, %v1532
      %s1535 = scalar_lea.vmem %s3, 64
      %v1536 = vld [vmem:[%s1535] sm:$0xf]
      %v1537 = vld [vmem:[%s1535 + $0x4] sm:$0xf]
      %v1540 = vunpack.c.l.b16 %v1536
      %v1541 = vunpack.c.l.b16 %v1537
      %v1542 = vpack.c.b16 %v1541, %v1540
      %v1545 = vsel %vm514, %v1534, 0
      %1547 = vmatpush.bf16.msra.mxu0 0
      %1548 = vmatpush.bf16.msra.mxu0 0
      %1549 = vmatpush.bf16.msra.mxu0 0
      %1550 = vmatpush.bf16.msra.mxu0 0
      %1551 = vmatpush.bf16.msra.mxu0 0
      %1552 = vmatpush.bf16.msra.mxu0 0
      %1553 = vmatpush.bf16.msra.mxu0 0
      %1554 = vmatpush.bf16.msra.mxu0 %v1542
      %1555 = vmatmul.bf16.gmra.mxu0 %v1545
      %v1556 = vpop.f32.mrf.mxu0
      %v1557 = vadd.f32 0.0, %v1556
      %v1558 = vpop.f32.mrf.mxu0
      %1559 = vdwg.mxu0
      %v1560 = vadd.f32 %v1416, %v1557
      %s1561 = scalar_lea.vmem %s242, 9
      %v1562 = vld [vmem:[%s1561] ss:$16 sm:$0x3]
      %s1563 = scalar_lea.vmem %s242, 73
      %v1564 = vld [vmem:[%s1563] ss:$16 sm:$0x3]
      %s1565 = scalar_lea.vmem %s242, 137
      %v1566 = vld [vmem:[%s1565] ss:$16 sm:$0x3]
      %s1567 = scalar_lea.vmem %s242, 201
      %v1568 = vld [vmem:[%s1567] ss:$16 sm:$0x3]
      %s1569 = scalar_lea.vmem %s242, 265
      %v1570 = vld [vmem:[%s1569] ss:$16 sm:$0x3]
      %s1571 = scalar_lea.vmem %s242, 329
      %v1572 = vld [vmem:[%s1571] ss:$16 sm:$0x3]
      %s1573 = scalar_lea.vmem %s242, 393
      %v1574 = vld [vmem:[%s1573] ss:$16 sm:$0x3]
      %s1575 = scalar_lea.vmem %s242, 457
      %v1576 = vld [vmem:[%s1575] ss:$16 sm:$0x3]
      %v1577 = vmul.f32 %v1562, %v254
      %v1578 = vmul.f32 %v1564, %v254
      %v1579 = vmul.f32 %v1566, %v254
      %v1580 = vmul.f32 %v1568, %v254
      %v1581 = vmul.f32 %v1570, %v254
      %v1582 = vmul.f32 %v1572, %v254
      %v1583 = vmul.f32 %v1574, %v254
      %v1584 = vmul.f32 %v1576, %v254
      %v1585 = vsel %vm282, %v1577, 0.0
      %v1586 = vrot.slane %v1585, 4
      %v1587 = vadd.f32 %v1585, %v1586
      %v1588 = vrot.slane %v1587, 2
      %v1589 = vadd.f32 %v1587, %v1588
      %v1590 = vrot.slane %v1589, 1
      %v1591 = vadd.f32 %v1589, %v1590
      %v1592 = vsel %vm282, %v1578, 0.0
      %v1593 = vrot.slane %v1592, 4
      %v1594 = vadd.f32 %v1592, %v1593
      %v1595 = vrot.slane %v1594, 2
      %v1596 = vadd.f32 %v1594, %v1595
      %v1597 = vrot.slane %v1596, 1
      %v1598 = vadd.f32 %v1596, %v1597
      %v1599 = vsel %vm282, %v1579, 0.0
      %v1600 = vrot.slane %v1599, 4
      %v1601 = vadd.f32 %v1599, %v1600
      %v1602 = vrot.slane %v1601, 2
      %v1603 = vadd.f32 %v1601, %v1602
      %v1604 = vrot.slane %v1603, 1
      %v1605 = vadd.f32 %v1603, %v1604
      %v1606 = vsel %vm282, %v1580, 0.0
      %v1607 = vrot.slane %v1606, 4
      %v1608 = vadd.f32 %v1606, %v1607
      %v1609 = vrot.slane %v1608, 2
      %v1610 = vadd.f32 %v1608, %v1609
      %v1611 = vrot.slane %v1610, 1
      %v1612 = vadd.f32 %v1610, %v1611
      %v1613 = vsel %vm282, %v1581, 0.0
      %v1614 = vrot.slane %v1613, 4
      %v1615 = vadd.f32 %v1613, %v1614
      %v1616 = vrot.slane %v1615, 2
      %v1617 = vadd.f32 %v1615, %v1616
      %v1618 = vrot.slane %v1617, 1
      %v1619 = vadd.f32 %v1617, %v1618
      %v1620 = vsel %vm282, %v1582, 0.0
      %v1621 = vrot.slane %v1620, 4
      %v1622 = vadd.f32 %v1620, %v1621
      %v1623 = vrot.slane %v1622, 2
      %v1624 = vadd.f32 %v1622, %v1623
      %v1625 = vrot.slane %v1624, 1
      %v1626 = vadd.f32 %v1624, %v1625
      %v1627 = vsel %vm282, %v1583, 0.0
      %v1628 = vrot.slane %v1627, 4
      %v1629 = vadd.f32 %v1627, %v1628
      %v1630 = vrot.slane %v1629, 2
      %v1631 = vadd.f32 %v1629, %v1630
      %v1632 = vrot.slane %v1631, 1
      %v1633 = vadd.f32 %v1631, %v1632
      %v1634 = vsel %vm282, %v1584, 0.0
      %v1635 = vrot.slane %v1634, 4
      %v1636 = vadd.f32 %v1634, %v1635
      %v1637 = vrot.slane %v1636, 2
      %v1638 = vadd.f32 %v1636, %v1637
      %v1639 = vrot.slane %v1638, 1
      %v1640 = vadd.f32 %v1638, %v1639
      %v1649 = vsel %vm347, %v1598, %v1591
      %v1650 = vsel %vm349, %v1605, %v1649
      %v1651 = vsel %vm351, %v1612, %v1650
      %v1652 = vsel %vm353, %v1619, %v1651
      %v1653 = vsel %vm355, %v1626, %v1652
      %v1654 = vsel %vm357, %v1633, %v1653
      %v1655 = vsel %vm359, %v1640, %v1654
      %v1656 = vsel %vm361, %v1655, 0
      %1658 = vmatpush.msra.mxu0 0.0
      %1659 = vmatpush.msra.mxu0 0.0
      %1660 = vmatpush.msra.mxu0 0.0
      %1661 = vmatpush.msra.mxu0 0.0
      %1662 = vmatpush.msra.mxu0 0.0
      %1663 = vmatpush.msra.mxu0 0.0
      %1664 = vmatpush.msra.mxu0 0.0
      %1665 = vmatpush.msra.mxu0 0.0
      %1666 = vmatpush.msra.mxu0 0.0
      %1667 = vmatpush.msra.mxu0 0.0
      %1668 = vmatpush.msra.mxu0 0.0
      %1669 = vmatpush.msra.mxu0 0.0
      %1670 = vmatpush.msra.mxu0 %v258
      %1671 = vmatpush.msra.mxu0 %v257
      %1672 = vmatpush.msra.mxu0 %v256
      %1673 = vmatpush.msra.mxu0 %v255
      %1674 = vmatmul.f32.gmra.mxu0 %v1656
      %v1675 = vpop.f32.mrf.mxu0
      %v1676 = vadd.f32 0.0, %v1675
      %1677 = vdwg.mxu0
      %v1678 = vpack.c.bf16 %v1676, %v1676
      %s1679 = scalar_lea.vmem %s3, 72
      %v1680 = vld [vmem:[%s1679] sm:$0xf]
      %v1681 = vld [vmem:[%s1679 + $0x4] sm:$0xf]
      %v1684 = vunpack.c.l.b16 %v1680
      %v1685 = vunpack.c.l.b16 %v1681
      %v1686 = vpack.c.b16 %v1685, %v1684
      %v1689 = vsel %vm514, %v1678, 0
      %1691 = vmatpush.bf16.msra.mxu0 0
      %1692 = vmatpush.bf16.msra.mxu0 0
      %1693 = vmatpush.bf16.msra.mxu0 0
      %1694 = vmatpush.bf16.msra.mxu0 0
      %1695 = vmatpush.bf16.msra.mxu0 0
      %1696 = vmatpush.bf16.msra.mxu0 0
      %1697 = vmatpush.bf16.msra.mxu0 0
      %1698 = vmatpush.bf16.msra.mxu0 %v1686
      %1699 = vmatmul.bf16.gmra.mxu0 %v1689
      %v1700 = vpop.f32.mrf.mxu0
      %v1701 = vadd.f32 0.0, %v1700
      %v1702 = vpop.f32.mrf.mxu0
      %1703 = vdwg.mxu0
      %v1704 = vadd.f32 %v1560, %v1701
      %s1705 = scalar_lea.vmem %s242, 10
      %v1706 = vld [vmem:[%s1705] ss:$16 sm:$0x3]
      %s1707 = scalar_lea.vmem %s242, 74
      %v1708 = vld [vmem:[%s1707] ss:$16 sm:$0x3]
      %s1709 = scalar_lea.vmem %s242, 138
      %v1710 = vld [vmem:[%s1709] ss:$16 sm:$0x3]
      %s1711 = scalar_lea.vmem %s242, 202
      %v1712 = vld [vmem:[%s1711] ss:$16 sm:$0x3]
      %s1713 = scalar_lea.vmem %s242, 266
      %v1714 = vld [vmem:[%s1713] ss:$16 sm:$0x3]
      %s1715 = scalar_lea.vmem %s242, 330
      %v1716 = vld [vmem:[%s1715] ss:$16 sm:$0x3]
      %s1717 = scalar_lea.vmem %s242, 394
      %v1718 = vld [vmem:[%s1717] ss:$16 sm:$0x3]
      %s1719 = scalar_lea.vmem %s242, 458
      %v1720 = vld [vmem:[%s1719] ss:$16 sm:$0x3]
      %v1721 = vmul.f32 %v1706, %v254
      %v1722 = vmul.f32 %v1708, %v254
      %v1723 = vmul.f32 %v1710, %v254
      %v1724 = vmul.f32 %v1712, %v254
      %v1725 = vmul.f32 %v1714, %v254
      %v1726 = vmul.f32 %v1716, %v254
      %v1727 = vmul.f32 %v1718, %v254
      %v1728 = vmul.f32 %v1720, %v254
      %v1729 = vsel %vm282, %v1721, 0.0
      %v1730 = vrot.slane %v1729, 4
      %v1731 = vadd.f32 %v1729, %v1730
      %v1732 = vrot.slane %v1731, 2
      %v1733 = vadd.f32 %v1731, %v1732
      %v1734 = vrot.slane %v1733, 1
      %v1735 = vadd.f32 %v1733, %v1734
      %v1736 = vsel %vm282, %v1722, 0.0
      %v1737 = vrot.slane %v1736, 4
      %v1738 = vadd.f32 %v1736, %v1737
      %v1739 = vrot.slane %v1738, 2
      %v1740 = vadd.f32 %v1738, %v1739
      %v1741 = vrot.slane %v1740, 1
      %v1742 = vadd.f32 %v1740, %v1741
      %v1743 = vsel %vm282, %v1723, 0.0
      %v1744 = vrot.slane %v1743, 4
      %v1745 = vadd.f32 %v1743, %v1744
      %v1746 = vrot.slane %v1745, 2
      %v1747 = vadd.f32 %v1745, %v1746
      %v1748 = vrot.slane %v1747, 1
      %v1749 = vadd.f32 %v1747, %v1748
      %v1750 = vsel %vm282, %v1724, 0.0
      %v1751 = vrot.slane %v1750, 4
      %v1752 = vadd.f32 %v1750, %v1751
      %v1753 = vrot.slane %v1752, 2
      %v1754 = vadd.f32 %v1752, %v1753
      %v1755 = vrot.slane %v1754, 1
      %v1756 = vadd.f32 %v1754, %v1755
      %v1757 = vsel %vm282, %v1725, 0.0
      %v1758 = vrot.slane %v1757, 4
      %v1759 = vadd.f32 %v1757, %v1758
      %v1760 = vrot.slane %v1759, 2
      %v1761 = vadd.f32 %v1759, %v1760
      %v1762 = vrot.slane %v1761, 1
      %v1763 = vadd.f32 %v1761, %v1762
      %v1764 = vsel %vm282, %v1726, 0.0
      %v1765 = vrot.slane %v1764, 4
      %v1766 = vadd.f32 %v1764, %v1765
      %v1767 = vrot.slane %v1766, 2
      %v1768 = vadd.f32 %v1766, %v1767
      %v1769 = vrot.slane %v1768, 1
      %v1770 = vadd.f32 %v1768, %v1769
      %v1771 = vsel %vm282, %v1727, 0.0
      %v1772 = vrot.slane %v1771, 4
      %v1773 = vadd.f32 %v1771, %v1772
      %v1774 = vrot.slane %v1773, 2
      %v1775 = vadd.f32 %v1773, %v1774
      %v1776 = vrot.slane %v1775, 1
      %v1777 = vadd.f32 %v1775, %v1776
      %v1778 = vsel %vm282, %v1728, 0.0
      %v1779 = vrot.slane %v1778, 4
      %v1780 = vadd.f32 %v1778, %v1779
      %v1781 = vrot.slane %v1780, 2
      %v1782 = vadd.f32 %v1780, %v1781
      %v1783 = vrot.slane %v1782, 1
      %v1784 = vadd.f32 %v1782, %v1783
      %v1793 = vsel %vm347, %v1742, %v1735
      %v1794 = vsel %vm349, %v1749, %v1793
      %v1795 = vsel %vm351, %v1756, %v1794
      %v1796 = vsel %vm353, %v1763, %v1795
      %v1797 = vsel %vm355, %v1770, %v1796
      %v1798 = vsel %vm357, %v1777, %v1797
      %v1799 = vsel %vm359, %v1784, %v1798
      %v1800 = vsel %vm361, %v1799, 0
      %1802 = vmatpush.msra.mxu0 0.0
      %1803 = vmatpush.msra.mxu0 0.0
      %1804 = vmatpush.msra.mxu0 0.0
      %1805 = vmatpush.msra.mxu0 0.0
      %1806 = vmatpush.msra.mxu0 0.0
      %1807 = vmatpush.msra.mxu0 0.0
      %1808 = vmatpush.msra.mxu0 0.0
      %1809 = vmatpush.msra.mxu0 0.0
      %1810 = vmatpush.msra.mxu0 0.0
      %1811 = vmatpush.msra.mxu0 0.0
      %1812 = vmatpush.msra.mxu0 0.0
      %1813 = vmatpush.msra.mxu0 0.0
      %1814 = vmatpush.msra.mxu0 %v258
      %1815 = vmatpush.msra.mxu0 %v257
      %1816 = vmatpush.msra.mxu0 %v256
      %1817 = vmatpush.msra.mxu0 %v255
      %1818 = vmatmul.f32.gmra.mxu0 %v1800
      %v1819 = vpop.f32.mrf.mxu0
      %v1820 = vadd.f32 0.0, %v1819
      %1821 = vdwg.mxu0
      %v1822 = vpack.c.bf16 %v1820, %v1820
      %s1823 = scalar_lea.vmem %s3, 80
      %v1824 = vld [vmem:[%s1823] sm:$0xf]
      %v1825 = vld [vmem:[%s1823 + $0x4] sm:$0xf]
      %v1828 = vunpack.c.l.b16 %v1824
      %v1829 = vunpack.c.l.b16 %v1825
      %v1830 = vpack.c.b16 %v1829, %v1828
      %v1833 = vsel %vm514, %v1822, 0
      %1835 = vmatpush.bf16.msra.mxu0 0
      %1836 = vmatpush.bf16.msra.mxu0 0
      %1837 = vmatpush.bf16.msra.mxu0 0
      %1838 = vmatpush.bf16.msra.mxu0 0
      %1839 = vmatpush.bf16.msra.mxu0 0
      %1840 = vmatpush.bf16.msra.mxu0 0
      %1841 = vmatpush.bf16.msra.mxu0 0
      %1842 = vmatpush.bf16.msra.mxu0 %v1830
      %1843 = vmatmul.bf16.gmra.mxu0 %v1833
      %v1844 = vpop.f32.mrf.mxu0
      %v1845 = vadd.f32 0.0, %v1844
      %v1846 = vpop.f32.mrf.mxu0
      %1847 = vdwg.mxu0
      %v1848 = vadd.f32 %v1704, %v1845
      %s1849 = scalar_lea.vmem %s242, 11
      %v1850 = vld [vmem:[%s1849] ss:$16 sm:$0x3]
      %s1851 = scalar_lea.vmem %s242, 75
      %v1852 = vld [vmem:[%s1851] ss:$16 sm:$0x3]
      %s1853 = scalar_lea.vmem %s242, 139
      %v1854 = vld [vmem:[%s1853] ss:$16 sm:$0x3]
      %s1855 = scalar_lea.vmem %s242, 203
      %v1856 = vld [vmem:[%s1855] ss:$16 sm:$0x3]
      %s1857 = scalar_lea.vmem %s242, 267
      %v1858 = vld [vmem:[%s1857] ss:$16 sm:$0x3]
      %s1859 = scalar_lea.vmem %s242, 331
      %v1860 = vld [vmem:[%s1859] ss:$16 sm:$0x3]
      %s1861 = scalar_lea.vmem %s242, 395
      %v1862 = vld [vmem:[%s1861] ss:$16 sm:$0x3]
      %s1863 = scalar_lea.vmem %s242, 459
      %v1864 = vld [vmem:[%s1863] ss:$16 sm:$0x3]
      %v1865 = vmul.f32 %v1850, %v254
      %v1866 = vmul.f32 %v1852, %v254
      %v1867 = vmul.f32 %v1854, %v254
      %v1868 = vmul.f32 %v1856, %v254
      %v1869 = vmul.f32 %v1858, %v254
      %v1870 = vmul.f32 %v1860, %v254
      %v1871 = vmul.f32 %v1862, %v254
      %v1872 = vmul.f32 %v1864, %v254
      %v1873 = vsel %vm282, %v1865, 0.0
      %v1874 = vrot.slane %v1873, 4
      %v1875 = vadd.f32 %v1873, %v1874
      %v1876 = vrot.slane %v1875, 2
      %v1877 = vadd.f32 %v1875, %v1876
      %v1878 = vrot.slane %v1877, 1
      %v1879 = vadd.f32 %v1877, %v1878
      %v1880 = vsel %vm282, %v1866, 0.0
      %v1881 = vrot.slane %v1880, 4
      %v1882 = vadd.f32 %v1880, %v1881
      %v1883 = vrot.slane %v1882, 2
      %v1884 = vadd.f32 %v1882, %v1883
      %v1885 = vrot.slane %v1884, 1
      %v1886 = vadd.f32 %v1884, %v1885
      %v1887 = vsel %vm282, %v1867, 0.0
      %v1888 = vrot.slane %v1887, 4
      %v1889 = vadd.f32 %v1887, %v1888
      %v1890 = vrot.slane %v1889, 2
      %v1891 = vadd.f32 %v1889, %v1890
      %v1892 = vrot.slane %v1891, 1
      %v1893 = vadd.f32 %v1891, %v1892
      %v1894 = vsel %vm282, %v1868, 0.0
      %v1895 = vrot.slane %v1894, 4
      %v1896 = vadd.f32 %v1894, %v1895
      %v1897 = vrot.slane %v1896, 2
      %v1898 = vadd.f32 %v1896, %v1897
      %v1899 = vrot.slane %v1898, 1
      %v1900 = vadd.f32 %v1898, %v1899
      %v1901 = vsel %vm282, %v1869, 0.0
      %v1902 = vrot.slane %v1901, 4
      %v1903 = vadd.f32 %v1901, %v1902
      %v1904 = vrot.slane %v1903, 2
      %v1905 = vadd.f32 %v1903, %v1904
      %v1906 = vrot.slane %v1905, 1
      %v1907 = vadd.f32 %v1905, %v1906
      %v1908 = vsel %vm282, %v1870, 0.0
      %v1909 = vrot.slane %v1908, 4
      %v1910 = vadd.f32 %v1908, %v1909
      %v1911 = vrot.slane %v1910, 2
      %v1912 = vadd.f32 %v1910, %v1911
      %v1913 = vrot.slane %v1912, 1
      %v1914 = vadd.f32 %v1912, %v1913
      %v1915 = vsel %vm282, %v1871, 0.0
      %v1916 = vrot.slane %v1915, 4
      %v1917 = vadd.f32 %v1915, %v1916
      %v1918 = vrot.slane %v1917, 2
      %v1919 = vadd.f32 %v1917, %v1918
      %v1920 = vrot.slane %v1919, 1
      %v1921 = vadd.f32 %v1919, %v1920
      %v1922 = vsel %vm282, %v1872, 0.0
      %v1923 = vrot.slane %v1922, 4
      %v1924 = vadd.f32 %v1922, %v1923
      %v1925 = vrot.slane %v1924, 2
      %v1926 = vadd.f32 %v1924, %v1925
      %v1927 = vrot.slane %v1926, 1
      %v1928 = vadd.f32 %v1926, %v1927
      %v1937 = vsel %vm347, %v1886, %v1879
      %v1938 = vsel %vm349, %v1893, %v1937
      %v1939 = vsel %vm351, %v1900, %v1938
      %v1940 = vsel %vm353, %v1907, %v1939
      %v1941 = vsel %vm355, %v1914, %v1940
      %v1942 = vsel %vm357, %v1921, %v1941
      %v1943 = vsel %vm359, %v1928, %v1942
      %v1944 = vsel %vm361, %v1943, 0
      %1946 = vmatpush.msra.mxu0 0.0
      %1947 = vmatpush.msra.mxu0 0.0
      %1948 = vmatpush.msra.mxu0 0.0
      %1949 = vmatpush.msra.mxu0 0.0
      %1950 = vmatpush.msra.mxu0 0.0
      %1951 = vmatpush.msra.mxu0 0.0
      %1952 = vmatpush.msra.mxu0 0.0
      %1953 = vmatpush.msra.mxu0 0.0
      %1954 = vmatpush.msra.mxu0 0.0
      %1955 = vmatpush.msra.mxu0 0.0
      %1956 = vmatpush.msra.mxu0 0.0
      %1957 = vmatpush.msra.mxu0 0.0
      %1958 = vmatpush.msra.mxu0 %v258
      %1959 = vmatpush.msra.mxu0 %v257
      %1960 = vmatpush.msra.mxu0 %v256
      %1961 = vmatpush.msra.mxu0 %v255
      %1962 = vmatmul.f32.gmra.mxu0 %v1944
      %v1963 = vpop.f32.mrf.mxu0
      %v1964 = vadd.f32 0.0, %v1963
      %1965 = vdwg.mxu0
      %v1966 = vpack.c.bf16 %v1964, %v1964
      %s1967 = scalar_lea.vmem %s3, 88
      %v1968 = vld [vmem:[%s1967] sm:$0xf]
      %v1969 = vld [vmem:[%s1967 + $0x4] sm:$0xf]
      %v1972 = vunpack.c.l.b16 %v1968
      %v1973 = vunpack.c.l.b16 %v1969
      %v1974 = vpack.c.b16 %v1973, %v1972
      %v1977 = vsel %vm514, %v1966, 0
      %1979 = vmatpush.bf16.msra.mxu0 0
      %1980 = vmatpush.bf16.msra.mxu0 0
      %1981 = vmatpush.bf16.msra.mxu0 0
      %1982 = vmatpush.bf16.msra.mxu0 0
      %1983 = vmatpush.bf16.msra.mxu0 0
      %1984 = vmatpush.bf16.msra.mxu0 0
      %1985 = vmatpush.bf16.msra.mxu0 0
      %1986 = vmatpush.bf16.msra.mxu0 %v1974
      %1987 = vmatmul.bf16.gmra.mxu0 %v1977
      %v1988 = vpop.f32.mrf.mxu0
      %v1989 = vadd.f32 0.0, %v1988
      %v1990 = vpop.f32.mrf.mxu0
      %1991 = vdwg.mxu0
      %v1992 = vadd.f32 %v1848, %v1989
      %s1993 = scalar_lea.vmem %s242, 12
      %v1994 = vld [vmem:[%s1993] ss:$16 sm:$0x3]
      %s1995 = scalar_lea.vmem %s242, 76
      %v1996 = vld [vmem:[%s1995] ss:$16 sm:$0x3]
      %s1997 = scalar_lea.vmem %s242, 140
      %v1998 = vld [vmem:[%s1997] ss:$16 sm:$0x3]
      %s1999 = scalar_lea.vmem %s242, 204
      %v2000 = vld [vmem:[%s1999] ss:$16 sm:$0x3]
      %s2001 = scalar_lea.vmem %s242, 268
      %v2002 = vld [vmem:[%s2001] ss:$16 sm:$0x3]
      %s2003 = scalar_lea.vmem %s242, 332
      %v2004 = vld [vmem:[%s2003] ss:$16 sm:$0x3]
      %s2005 = scalar_lea.vmem %s242, 396
      %v2006 = vld [vmem:[%s2005] ss:$16 sm:$0x3]
      %s2007 = scalar_lea.vmem %s242, 460
      %v2008 = vld [vmem:[%s2007] ss:$16 sm:$0x3]
      %v2009 = vmul.f32 %v1994, %v254
      %v2010 = vmul.f32 %v1996, %v254
      %v2011 = vmul.f32 %v1998, %v254
      %v2012 = vmul.f32 %v2000, %v254
      %v2013 = vmul.f32 %v2002, %v254
      %v2014 = vmul.f32 %v2004, %v254
      %v2015 = vmul.f32 %v2006, %v254
      %v2016 = vmul.f32 %v2008, %v254
      %v2017 = vsel %vm282, %v2009, 0.0
      %v2018 = vrot.slane %v2017, 4
      %v2019 = vadd.f32 %v2017, %v2018
      %v2020 = vrot.slane %v2019, 2
      %v2021 = vadd.f32 %v2019, %v2020
      %v2022 = vrot.slane %v2021, 1
      %v2023 = vadd.f32 %v2021, %v2022
      %v2024 = vsel %vm282, %v2010, 0.0
      %v2025 = vrot.slane %v2024, 4
      %v2026 = vadd.f32 %v2024, %v2025
      %v2027 = vrot.slane %v2026, 2
      %v2028 = vadd.f32 %v2026, %v2027
      %v2029 = vrot.slane %v2028, 1
      %v2030 = vadd.f32 %v2028, %v2029
      %v2031 = vsel %vm282, %v2011, 0.0
      %v2032 = vrot.slane %v2031, 4
      %v2033 = vadd.f32 %v2031, %v2032
      %v2034 = vrot.slane %v2033, 2
      %v2035 = vadd.f32 %v2033, %v2034
      %v2036 = vrot.slane %v2035, 1
      %v2037 = vadd.f32 %v2035, %v2036
      %v2038 = vsel %vm282, %v2012, 0.0
      %v2039 = vrot.slane %v2038, 4
      %v2040 = vadd.f32 %v2038, %v2039
      %v2041 = vrot.slane %v2040, 2
      %v2042 = vadd.f32 %v2040, %v2041
      %v2043 = vrot.slane %v2042, 1
      %v2044 = vadd.f32 %v2042, %v2043
      %v2045 = vsel %vm282, %v2013, 0.0
      %v2046 = vrot.slane %v2045, 4
      %v2047 = vadd.f32 %v2045, %v2046
      %v2048 = vrot.slane %v2047, 2
      %v2049 = vadd.f32 %v2047, %v2048
      %v2050 = vrot.slane %v2049, 1
      %v2051 = vadd.f32 %v2049, %v2050
      %v2052 = vsel %vm282, %v2014, 0.0
      %v2053 = vrot.slane %v2052, 4
      %v2054 = vadd.f32 %v2052, %v2053
      %v2055 = vrot.slane %v2054, 2
      %v2056 = vadd.f32 %v2054, %v2055
      %v2057 = vrot.slane %v2056, 1
      %v2058 = vadd.f32 %v2056, %v2057
      %v2059 = vsel %vm282, %v2015, 0.0
      %v2060 = vrot.slane %v2059, 4
      %v2061 = vadd.f32 %v2059, %v2060
      %v2062 = vrot.slane %v2061, 2
      %v2063 = vadd.f32 %v2061, %v2062
      %v2064 = vrot.slane %v2063, 1
      %v2065 = vadd.f32 %v2063, %v2064
      %v2066 = vsel %vm282, %v2016, 0.0
      %v2067 = vrot.slane %v2066, 4
      %v2068 = vadd.f32 %v2066, %v2067
      %v2069 = vrot.slane %v2068, 2
      %v2070 = vadd.f32 %v2068, %v2069
      %v2071 = vrot.slane %v2070, 1
      %v2072 = vadd.f32 %v2070, %v2071
      %v2081 = vsel %vm347, %v2030, %v2023
      %v2082 = vsel %vm349, %v2037, %v2081
      %v2083 = vsel %vm351, %v2044, %v2082
      %v2084 = vsel %vm353, %v2051, %v2083
      %v2085 = vsel %vm355, %v2058, %v2084
      %v2086 = vsel %vm357, %v2065, %v2085
      %v2087 = vsel %vm359, %v2072, %v2086
      %v2088 = vsel %vm361, %v2087, 0
      %2090 = vmatpush.msra.mxu0 0.0
      %2091 = vmatpush.msra.mxu0 0.0
      %2092 = vmatpush.msra.mxu0 0.0
      %2093 = vmatpush.msra.mxu0 0.0
      %2094 = vmatpush.msra.mxu0 0.0
      %2095 = vmatpush.msra.mxu0 0.0
      %2096 = vmatpush.msra.mxu0 0.0
      %2097 = vmatpush.msra.mxu0 0.0
      %2098 = vmatpush.msra.mxu0 0.0
      %2099 = vmatpush.msra.mxu0 0.0
      %2100 = vmatpush.msra.mxu0 0.0
      %2101 = vmatpush.msra.mxu0 0.0
      %2102 = vmatpush.msra.mxu0 %v258
      %2103 = vmatpush.msra.mxu0 %v257
      %2104 = vmatpush.msra.mxu0 %v256
      %2105 = vmatpush.msra.mxu0 %v255
      %2106 = vmatmul.f32.gmra.mxu0 %v2088
      %v2107 = vpop.f32.mrf.mxu0
      %v2108 = vadd.f32 0.0, %v2107
      %2109 = vdwg.mxu0
      %v2110 = vpack.c.bf16 %v2108, %v2108
      %s2111 = scalar_lea.vmem %s3, 96
      %v2112 = vld [vmem:[%s2111] sm:$0xf]
      %v2113 = vld [vmem:[%s2111 + $0x4] sm:$0xf]
      %v2116 = vunpack.c.l.b16 %v2112
      %v2117 = vunpack.c.l.b16 %v2113
      %v2118 = vpack.c.b16 %v2117, %v2116
      %v2121 = vsel %vm514, %v2110, 0
      %2123 = vmatpush.bf16.msra.mxu0 0
      %2124 = vmatpush.bf16.msra.mxu0 0
      %2125 = vmatpush.bf16.msra.mxu0 0
      %2126 = vmatpush.bf16.msra.mxu0 0
      %2127 = vmatpush.bf16.msra.mxu0 0
      %2128 = vmatpush.bf16.msra.mxu0 0
      %2129 = vmatpush.bf16.msra.mxu0 0
      %2130 = vmatpush.bf16.msra.mxu0 %v2118
      %2131 = vmatmul.bf16.gmra.mxu0 %v2121
      %v2132 = vpop.f32.mrf.mxu0
      %v2133 = vadd.f32 0.0, %v2132
      %v2134 = vpop.f32.mrf.mxu0
      %2135 = vdwg.mxu0
      %v2136 = vadd.f32 %v1992, %v2133
      %s2137 = scalar_lea.vmem %s242, 13
      %v2138 = vld [vmem:[%s2137] ss:$16 sm:$0x3]
      %s2139 = scalar_lea.vmem %s242, 77
      %v2140 = vld [vmem:[%s2139] ss:$16 sm:$0x3]
      %s2141 = scalar_lea.vmem %s242, 141
      %v2142 = vld [vmem:[%s2141] ss:$16 sm:$0x3]
      %s2143 = scalar_lea.vmem %s242, 205
      %v2144 = vld [vmem:[%s2143] ss:$16 sm:$0x3]
      %s2145 = scalar_lea.vmem %s242, 269
      %v2146 = vld [vmem:[%s2145] ss:$16 sm:$0x3]
      %s2147 = scalar_lea.vmem %s242, 333
      %v2148 = vld [vmem:[%s2147] ss:$16 sm:$0x3]
      %s2149 = scalar_lea.vmem %s242, 397
      %v2150 = vld [vmem:[%s2149] ss:$16 sm:$0x3]
      %s2151 = scalar_lea.vmem %s242, 461
      %v2152 = vld [vmem:[%s2151] ss:$16 sm:$0x3]
      %v2153 = vmul.f32 %v2138, %v254
      %v2154 = vmul.f32 %v2140, %v254
      %v2155 = vmul.f32 %v2142, %v254
      %v2156 = vmul.f32 %v2144, %v254
      %v2157 = vmul.f32 %v2146, %v254
      %v2158 = vmul.f32 %v2148, %v254
      %v2159 = vmul.f32 %v2150, %v254
      %v2160 = vmul.f32 %v2152, %v254
      %v2161 = vsel %vm282, %v2153, 0.0
      %v2162 = vrot.slane %v2161, 4
      %v2163 = vadd.f32 %v2161, %v2162
      %v2164 = vrot.slane %v2163, 2
      %v2165 = vadd.f32 %v2163, %v2164
      %v2166 = vrot.slane %v2165, 1
      %v2167 = vadd.f32 %v2165, %v2166
      %v2168 = vsel %vm282, %v2154, 0.0
      %v2169 = vrot.slane %v2168, 4
      %v2170 = vadd.f32 %v2168, %v2169
      %v2171 = vrot.slane %v2170, 2
      %v2172 = vadd.f32 %v2170, %v2171
      %v2173 = vrot.slane %v2172, 1
      %v2174 = vadd.f32 %v2172, %v2173
      %v2175 = vsel %vm282, %v2155, 0.0
      %v2176 = vrot.slane %v2175, 4
      %v2177 = vadd.f32 %v2175, %v2176
      %v2178 = vrot.slane %v2177, 2
      %v2179 = vadd.f32 %v2177, %v2178
      %v2180 = vrot.slane %v2179, 1
      %v2181 = vadd.f32 %v2179, %v2180
      %v2182 = vsel %vm282, %v2156, 0.0
      %v2183 = vrot.slane %v2182, 4
      %v2184 = vadd.f32 %v2182, %v2183
      %v2185 = vrot.slane %v2184, 2
      %v2186 = vadd.f32 %v2184, %v2185
      %v2187 = vrot.slane %v2186, 1
      %v2188 = vadd.f32 %v2186, %v2187
      %v2189 = vsel %vm282, %v2157, 0.0
      %v2190 = vrot.slane %v2189, 4
      %v2191 = vadd.f32 %v2189, %v2190
      %v2192 = vrot.slane %v2191, 2
      %v2193 = vadd.f32 %v2191, %v2192
      %v2194 = vrot.slane %v2193, 1
      %v2195 = vadd.f32 %v2193, %v2194
      %v2196 = vsel %vm282, %v2158, 0.0
      %v2197 = vrot.slane %v2196, 4
      %v2198 = vadd.f32 %v2196, %v2197
      %v2199 = vrot.slane %v2198, 2
      %v2200 = vadd.f32 %v2198, %v2199
      %v2201 = vrot.slane %v2200, 1
      %v2202 = vadd.f32 %v2200, %v2201
      %v2203 = vsel %vm282, %v2159, 0.0
      %v2204 = vrot.slane %v2203, 4
      %v2205 = vadd.f32 %v2203, %v2204
      %v2206 = vrot.slane %v2205, 2
      %v2207 = vadd.f32 %v2205, %v2206
      %v2208 = vrot.slane %v2207, 1
      %v2209 = vadd.f32 %v2207, %v2208
      %v2210 = vsel %vm282, %v2160, 0.0
      %v2211 = vrot.slane %v2210, 4
      %v2212 = vadd.f32 %v2210, %v2211
      %v2213 = vrot.slane %v2212, 2
      %v2214 = vadd.f32 %v2212, %v2213
      %v2215 = vrot.slane %v2214, 1
      %v2216 = vadd.f32 %v2214, %v2215
      %v2225 = vsel %vm347, %v2174, %v2167
      %v2226 = vsel %vm349, %v2181, %v2225
      %v2227 = vsel %vm351, %v2188, %v2226
      %v2228 = vsel %vm353, %v2195, %v2227
      %v2229 = vsel %vm355, %v2202, %v2228
      %v2230 = vsel %vm357, %v2209, %v2229
      %v2231 = vsel %vm359, %v2216, %v2230
      %v2232 = vsel %vm361, %v2231, 0
      %2234 = vmatpush.msra.mxu0 0.0
      %2235 = vmatpush.msra.mxu0 0.0
      %2236 = vmatpush.msra.mxu0 0.0
      %2237 = vmatpush.msra.mxu0 0.0
      %2238 = vmatpush.msra.mxu0 0.0
      %2239 = vmatpush.msra.mxu0 0.0
      %2240 = vmatpush.msra.mxu0 0.0
      %2241 = vmatpush.msra.mxu0 0.0
      %2242 = vmatpush.msra.mxu0 0.0
      %2243 = vmatpush.msra.mxu0 0.0
      %2244 = vmatpush.msra.mxu0 0.0
      %2245 = vmatpush.msra.mxu0 0.0
      %2246 = vmatpush.msra.mxu0 %v258
      %2247 = vmatpush.msra.mxu0 %v257
      %2248 = vmatpush.msra.mxu0 %v256
      %2249 = vmatpush.msra.mxu0 %v255
      %2250 = vmatmul.f32.gmra.mxu0 %v2232
      %v2251 = vpop.f32.mrf.mxu0
      %v2252 = vadd.f32 0.0, %v2251
      %2253 = vdwg.mxu0
      %v2254 = vpack.c.bf16 %v2252, %v2252
      %s2255 = scalar_lea.vmem %s3, 104
      %v2256 = vld [vmem:[%s2255] sm:$0xf]
      %v2257 = vld [vmem:[%s2255 + $0x4] sm:$0xf]
      %v2260 = vunpack.c.l.b16 %v2256
      %v2261 = vunpack.c.l.b16 %v2257
      %v2262 = vpack.c.b16 %v2261, %v2260
      %v2265 = vsel %vm514, %v2254, 0
      %2267 = vmatpush.bf16.msra.mxu0 0
      %2268 = vmatpush.bf16.msra.mxu0 0
      %2269 = vmatpush.bf16.msra.mxu0 0
      %2270 = vmatpush.bf16.msra.mxu0 0
      %2271 = vmatpush.bf16.msra.mxu0 0
      %2272 = vmatpush.bf16.msra.mxu0 0
      %2273 = vmatpush.bf16.msra.mxu0 0
      %2274 = vmatpush.bf16.msra.mxu0 %v2262
      %2275 = vmatmul.bf16.gmra.mxu0 %v2265
      %v2276 = vpop.f32.mrf.mxu0
      %v2277 = vadd.f32 0.0, %v2276
      %v2278 = vpop.f32.mrf.mxu0
      %2279 = vdwg.mxu0
      %v2280 = vadd.f32 %v2136, %v2277
      %s2281 = scalar_lea.vmem %s242, 14
      %v2282 = vld [vmem:[%s2281] ss:$16 sm:$0x3]
      %s2283 = scalar_lea.vmem %s242, 78
      %v2284 = vld [vmem:[%s2283] ss:$16 sm:$0x3]
      %s2285 = scalar_lea.vmem %s242, 142
      %v2286 = vld [vmem:[%s2285] ss:$16 sm:$0x3]
      %s2287 = scalar_lea.vmem %s242, 206
      %v2288 = vld [vmem:[%s2287] ss:$16 sm:$0x3]
      %s2289 = scalar_lea.vmem %s242, 270
      %v2290 = vld [vmem:[%s2289] ss:$16 sm:$0x3]
      %s2291 = scalar_lea.vmem %s242, 334
      %v2292 = vld [vmem:[%s2291] ss:$16 sm:$0x3]
      %s2293 = scalar_lea.vmem %s242, 398
      %v2294 = vld [vmem:[%s2293] ss:$16 sm:$0x3]
      %s2295 = scalar_lea.vmem %s242, 462
      %v2296 = vld [vmem:[%s2295] ss:$16 sm:$0x3]
      %v2297 = vmul.f32 %v2282, %v254
      %v2298 = vmul.f32 %v2284, %v254
      %v2299 = vmul.f32 %v2286, %v254
      %v2300 = vmul.f32 %v2288, %v254
      %v2301 = vmul.f32 %v2290, %v254
      %v2302 = vmul.f32 %v2292, %v254
      %v2303 = vmul.f32 %v2294, %v254
      %v2304 = vmul.f32 %v2296, %v254
      %v2305 = vsel %vm282, %v2297, 0.0
      %v2306 = vrot.slane %v2305, 4
      %v2307 = vadd.f32 %v2305, %v2306
      %v2308 = vrot.slane %v2307, 2
      %v2309 = vadd.f32 %v2307, %v2308
      %v2310 = vrot.slane %v2309, 1
      %v2311 = vadd.f32 %v2309, %v2310
      %v2312 = vsel %vm282, %v2298, 0.0
      %v2313 = vrot.slane %v2312, 4
      %v2314 = vadd.f32 %v2312, %v2313
      %v2315 = vrot.slane %v2314, 2
      %v2316 = vadd.f32 %v2314, %v2315
      %v2317 = vrot.slane %v2316, 1
      %v2318 = vadd.f32 %v2316, %v2317
      %v2319 = vsel %vm282, %v2299, 0.0
      %v2320 = vrot.slane %v2319, 4
      %v2321 = vadd.f32 %v2319, %v2320
      %v2322 = vrot.slane %v2321, 2
      %v2323 = vadd.f32 %v2321, %v2322
      %v2324 = vrot.slane %v2323, 1
      %v2325 = vadd.f32 %v2323, %v2324
      %v2326 = vsel %vm282, %v2300, 0.0
      %v2327 = vrot.slane %v2326, 4
      %v2328 = vadd.f32 %v2326, %v2327
      %v2329 = vrot.slane %v2328, 2
      %v2330 = vadd.f32 %v2328, %v2329
      %v2331 = vrot.slane %v2330, 1
      %v2332 = vadd.f32 %v2330, %v2331
      %v2333 = vsel %vm282, %v2301, 0.0
      %v2334 = vrot.slane %v2333, 4
      %v2335 = vadd.f32 %v2333, %v2334
      %v2336 = vrot.slane %v2335, 2
      %v2337 = vadd.f32 %v2335, %v2336
      %v2338 = vrot.slane %v2337, 1
      %v2339 = vadd.f32 %v2337, %v2338
      %v2340 = vsel %vm282, %v2302, 0.0
      %v2341 = vrot.slane %v2340, 4
      %v2342 = vadd.f32 %v2340, %v2341
      %v2343 = vrot.slane %v2342, 2
      %v2344 = vadd.f32 %v2342, %v2343
      %v2345 = vrot.slane %v2344, 1
      %v2346 = vadd.f32 %v2344, %v2345
      %v2347 = vsel %vm282, %v2303, 0.0
      %v2348 = vrot.slane %v2347, 4
      %v2349 = vadd.f32 %v2347, %v2348
      %v2350 = vrot.slane %v2349, 2
      %v2351 = vadd.f32 %v2349, %v2350
      %v2352 = vrot.slane %v2351, 1
      %v2353 = vadd.f32 %v2351, %v2352
      %v2354 = vsel %vm282, %v2304, 0.0
      %v2355 = vrot.slane %v2354, 4
      %v2356 = vadd.f32 %v2354, %v2355
      %v2357 = vrot.slane %v2356, 2
      %v2358 = vadd.f32 %v2356, %v2357
      %v2359 = vrot.slane %v2358, 1
      %v2360 = vadd.f32 %v2358, %v2359
      %v2369 = vsel %vm347, %v2318, %v2311
      %v2370 = vsel %vm349, %v2325, %v2369
      %v2371 = vsel %vm351, %v2332, %v2370
      %v2372 = vsel %vm353, %v2339, %v2371
      %v2373 = vsel %vm355, %v2346, %v2372
      %v2374 = vsel %vm357, %v2353, %v2373
      %v2375 = vsel %vm359, %v2360, %v2374
      %v2376 = vsel %vm361, %v2375, 0
      %2378 = vmatpush.msra.mxu0 0.0
      %2379 = vmatpush.msra.mxu0 0.0
      %2380 = vmatpush.msra.mxu0 0.0
      %2381 = vmatpush.msra.mxu0 0.0
      %2382 = vmatpush.msra.mxu0 0.0
      %2383 = vmatpush.msra.mxu0 0.0
      %2384 = vmatpush.msra.mxu0 0.0
      %2385 = vmatpush.msra.mxu0 0.0
      %2386 = vmatpush.msra.mxu0 0.0
      %2387 = vmatpush.msra.mxu0 0.0
      %2388 = vmatpush.msra.mxu0 0.0
      %2389 = vmatpush.msra.mxu0 0.0
      %2390 = vmatpush.msra.mxu0 %v258
      %2391 = vmatpush.msra.mxu0 %v257
      %2392 = vmatpush.msra.mxu0 %v256
      %2393 = vmatpush.msra.mxu0 %v255
      %2394 = vmatmul.f32.gmra.mxu0 %v2376
      %v2395 = vpop.f32.mrf.mxu0
      %v2396 = vadd.f32 0.0, %v2395
      %2397 = vdwg.mxu0
      %v2398 = vpack.c.bf16 %v2396, %v2396
      %s2399 = scalar_lea.vmem %s3, 112
      %v2400 = vld [vmem:[%s2399] sm:$0xf]
      %v2401 = vld [vmem:[%s2399 + $0x4] sm:$0xf]
      %v2404 = vunpack.c.l.b16 %v2400
      %v2405 = vunpack.c.l.b16 %v2401
      %v2406 = vpack.c.b16 %v2405, %v2404
      %v2409 = vsel %vm514, %v2398, 0
      %2411 = vmatpush.bf16.msra.mxu0 0
      %2412 = vmatpush.bf16.msra.mxu0 0
      %2413 = vmatpush.bf16.msra.mxu0 0
      %2414 = vmatpush.bf16.msra.mxu0 0
      %2415 = vmatpush.bf16.msra.mxu0 0
      %2416 = vmatpush.bf16.msra.mxu0 0
      %2417 = vmatpush.bf16.msra.mxu0 0
      %2418 = vmatpush.bf16.msra.mxu0 %v2406
      %2419 = vmatmul.bf16.gmra.mxu0 %v2409
      %v2420 = vpop.f32.mrf.mxu0
      %v2421 = vadd.f32 0.0, %v2420
      %v2422 = vpop.f32.mrf.mxu0
      %2423 = vdwg.mxu0
      %v2424 = vadd.f32 %v2280, %v2421
      %s2425 = scalar_lea.vmem %s242, 15
      %v2426 = vld [vmem:[%s2425] ss:$16 sm:$0x3]
      %s2427 = scalar_lea.vmem %s242, 79
      %v2428 = vld [vmem:[%s2427] ss:$16 sm:$0x3]
      %s2429 = scalar_lea.vmem %s242, 143
      %v2430 = vld [vmem:[%s2429] ss:$16 sm:$0x3]
      %s2431 = scalar_lea.vmem %s242, 207
      %v2432 = vld [vmem:[%s2431] ss:$16 sm:$0x3]
      %s2433 = scalar_lea.vmem %s242, 271
      %v2434 = vld [vmem:[%s2433] ss:$16 sm:$0x3]
      %s2435 = scalar_lea.vmem %s242, 335
      %v2436 = vld [vmem:[%s2435] ss:$16 sm:$0x3]
      %s2437 = scalar_lea.vmem %s242, 399
      %v2438 = vld [vmem:[%s2437] ss:$16 sm:$0x3]
      %s2439 = scalar_lea.vmem %s242, 463
      %v2440 = vld [vmem:[%s2439] ss:$16 sm:$0x3]
      %v2441 = vmul.f32 %v2426, %v254
      %v2442 = vmul.f32 %v2428, %v254
      %v2443 = vmul.f32 %v2430, %v254
      %v2444 = vmul.f32 %v2432, %v254
      %v2445 = vmul.f32 %v2434, %v254
      %v2446 = vmul.f32 %v2436, %v254
      %v2447 = vmul.f32 %v2438, %v254
      %v2448 = vmul.f32 %v2440, %v254
      %v2449 = vsel %vm282, %v2441, 0.0
      %v2450 = vrot.slane %v2449, 4
      %v2451 = vadd.f32 %v2449, %v2450
      %v2452 = vrot.slane %v2451, 2
      %v2453 = vadd.f32 %v2451, %v2452
      %v2454 = vrot.slane %v2453, 1
      %v2455 = vadd.f32 %v2453, %v2454
      %v2456 = vsel %vm282, %v2442, 0.0
      %v2457 = vrot.slane %v2456, 4
      %v2458 = vadd.f32 %v2456, %v2457
      %v2459 = vrot.slane %v2458, 2
      %v2460 = vadd.f32 %v2458, %v2459
      %v2461 = vrot.slane %v2460, 1
      %v2462 = vadd.f32 %v2460, %v2461
      %v2463 = vsel %vm282, %v2443, 0.0
      %v2464 = vrot.slane %v2463, 4
      %v2465 = vadd.f32 %v2463, %v2464
      %v2466 = vrot.slane %v2465, 2
      %v2467 = vadd.f32 %v2465, %v2466
      %v2468 = vrot.slane %v2467, 1
      %v2469 = vadd.f32 %v2467, %v2468
      %v2470 = vsel %vm282, %v2444, 0.0
      %v2471 = vrot.slane %v2470, 4
      %v2472 = vadd.f32 %v2470, %v2471
      %v2473 = vrot.slane %v2472, 2
      %v2474 = vadd.f32 %v2472, %v2473
      %v2475 = vrot.slane %v2474, 1
      %v2476 = vadd.f32 %v2474, %v2475
      %v2477 = vsel %vm282, %v2445, 0.0
      %v2478 = vrot.slane %v2477, 4
      %v2479 = vadd.f32 %v2477, %v2478
      %v2480 = vrot.slane %v2479, 2
      %v2481 = vadd.f32 %v2479, %v2480
      %v2482 = vrot.slane %v2481, 1
      %v2483 = vadd.f32 %v2481, %v2482
      %v2484 = vsel %vm282, %v2446, 0.0
      %v2485 = vrot.slane %v2484, 4
      %v2486 = vadd.f32 %v2484, %v2485
      %v2487 = vrot.slane %v2486, 2
      %v2488 = vadd.f32 %v2486, %v2487
      %v2489 = vrot.slane %v2488, 1
      %v2490 = vadd.f32 %v2488, %v2489
      %v2491 = vsel %vm282, %v2447, 0.0
      %v2492 = vrot.slane %v2491, 4
      %v2493 = vadd.f32 %v2491, %v2492
      %v2494 = vrot.slane %v2493, 2
      %v2495 = vadd.f32 %v2493, %v2494
      %v2496 = vrot.slane %v2495, 1
      %v2497 = vadd.f32 %v2495, %v2496
      %v2498 = vsel %vm282, %v2448, 0.0
      %v2499 = vrot.slane %v2498, 4
      %v2500 = vadd.f32 %v2498, %v2499
      %v2501 = vrot.slane %v2500, 2
      %v2502 = vadd.f32 %v2500, %v2501
      %v2503 = vrot.slane %v2502, 1
      %v2504 = vadd.f32 %v2502, %v2503
      %v2513 = vsel %vm347, %v2462, %v2455
      %v2514 = vsel %vm349, %v2469, %v2513
      %v2515 = vsel %vm351, %v2476, %v2514
      %v2516 = vsel %vm353, %v2483, %v2515
      %v2517 = vsel %vm355, %v2490, %v2516
      %v2518 = vsel %vm357, %v2497, %v2517
      %v2519 = vsel %vm359, %v2504, %v2518
      %v2520 = vsel %vm361, %v2519, 0
      %2522 = vmatpush.msra.mxu0 0.0
      %2523 = vmatpush.msra.mxu0 0.0
      %2524 = vmatpush.msra.mxu0 0.0
      %2525 = vmatpush.msra.mxu0 0.0
      %2526 = vmatpush.msra.mxu0 0.0
      %2527 = vmatpush.msra.mxu0 0.0
      %2528 = vmatpush.msra.mxu0 0.0
      %2529 = vmatpush.msra.mxu0 0.0
      %2530 = vmatpush.msra.mxu0 0.0
      %2531 = vmatpush.msra.mxu0 0.0
      %2532 = vmatpush.msra.mxu0 0.0
      %2533 = vmatpush.msra.mxu0 0.0
      %2534 = vmatpush.msra.mxu0 %v258
      %2535 = vmatpush.msra.mxu0 %v257
      %2536 = vmatpush.msra.mxu0 %v256
      %2537 = vmatpush.msra.mxu0 %v255
      %2538 = vmatmul.f32.gmra.mxu0 %v2520
      %v2539 = vpop.f32.mrf.mxu0
      %v2540 = vadd.f32 0.0, %v2539
      %2541 = vdwg.mxu0
      %v2542 = vpack.c.bf16 %v2540, %v2540
      %s2543 = scalar_lea.vmem %s3, 120
      %v2544 = vld [vmem:[%s2543] sm:$0xf]
      %v2545 = vld [vmem:[%s2543 + $0x4] sm:$0xf]
      %v2548 = vunpack.c.l.b16 %v2544
      %v2549 = vunpack.c.l.b16 %v2545
      %v2550 = vpack.c.b16 %v2549, %v2548
      %v2553 = vsel %vm514, %v2542, 0
      %2555 = vmatpush.bf16.msra.mxu0 0
      %2556 = vmatpush.bf16.msra.mxu0 0
      %2557 = vmatpush.bf16.msra.mxu0 0
      %2558 = vmatpush.bf16.msra.mxu0 0
      %2559 = vmatpush.bf16.msra.mxu0 0
      %2560 = vmatpush.bf16.msra.mxu0 0
      %2561 = vmatpush.bf16.msra.mxu0 0
      %2562 = vmatpush.bf16.msra.mxu0 %v2550
      %2563 = vmatmul.bf16.gmra.mxu0 %v2553
      %v2564 = vpop.f32.mrf.mxu0
      %v2565 = vadd.f32 0.0, %v2564
      %v2566 = vpop.f32.mrf.mxu0
      %2567 = vdwg.mxu0
      %v2568 = vadd.f32 %v2424, %v2565
      %s2569 = scalar_lea.vmem %s242, 32
      %v2570 = vld [vmem:[%s2569] ss:$16 sm:$0x3]
      %s2571 = scalar_lea.vmem %s242, 96
      %v2572 = vld [vmem:[%s2571] ss:$16 sm:$0x3]
      %s2573 = scalar_lea.vmem %s242, 160
      %v2574 = vld [vmem:[%s2573] ss:$16 sm:$0x3]
      %s2575 = scalar_lea.vmem %s242, 224
      %v2576 = vld [vmem:[%s2575] ss:$16 sm:$0x3]
      %s2577 = scalar_lea.vmem %s242, 288
      %v2578 = vld [vmem:[%s2577] ss:$16 sm:$0x3]
      %s2579 = scalar_lea.vmem %s242, 352
      %v2580 = vld [vmem:[%s2579] ss:$16 sm:$0x3]
      %s2581 = scalar_lea.vmem %s242, 416
      %v2582 = vld [vmem:[%s2581] ss:$16 sm:$0x3]
      %s2583 = scalar_lea.vmem %s242, 480
      %v2584 = vld [vmem:[%s2583] ss:$16 sm:$0x3]
      %v2585 = vmul.f32 %v2570, %v254
      %v2586 = vmul.f32 %v2572, %v254
      %v2587 = vmul.f32 %v2574, %v254
      %v2588 = vmul.f32 %v2576, %v254
      %v2589 = vmul.f32 %v2578, %v254
      %v2590 = vmul.f32 %v2580, %v254
      %v2591 = vmul.f32 %v2582, %v254
      %v2592 = vmul.f32 %v2584, %v254
      %v2593 = vsel %vm282, %v2585, 0.0
      %v2594 = vrot.slane %v2593, 4
      %v2595 = vadd.f32 %v2593, %v2594
      %v2596 = vrot.slane %v2595, 2
      %v2597 = vadd.f32 %v2595, %v2596
      %v2598 = vrot.slane %v2597, 1
      %v2599 = vadd.f32 %v2597, %v2598
      %v2600 = vsel %vm282, %v2586, 0.0
      %v2601 = vrot.slane %v2600, 4
      %v2602 = vadd.f32 %v2600, %v2601
      %v2603 = vrot.slane %v2602, 2
      %v2604 = vadd.f32 %v2602, %v2603
      %v2605 = vrot.slane %v2604, 1
      %v2606 = vadd.f32 %v2604, %v2605
      %v2607 = vsel %vm282, %v2587, 0.0
      %v2608 = vrot.slane %v2607, 4
      %v2609 = vadd.f32 %v2607, %v2608
      %v2610 = vrot.slane %v2609, 2
      %v2611 = vadd.f32 %v2609, %v2610
      %v2612 = vrot.slane %v2611, 1
      %v2613 = vadd.f32 %v2611, %v2612
      %v2614 = vsel %vm282, %v2588, 0.0
      %v2615 = vrot.slane %v2614, 4
      %v2616 = vadd.f32 %v2614, %v2615
      %v2617 = vrot.slane %v2616, 2
      %v2618 = vadd.f32 %v2616, %v2617
      %v2619 = vrot.slane %v2618, 1
      %v2620 = vadd.f32 %v2618, %v2619
      %v2621 = vsel %vm282, %v2589, 0.0
      %v2622 = vrot.slane %v2621, 4
      %v2623 = vadd.f32 %v2621, %v2622
      %v2624 = vrot.slane %v2623, 2
      %v2625 = vadd.f32 %v2623, %v2624
      %v2626 = vrot.slane %v2625, 1
      %v2627 = vadd.f32 %v2625, %v2626
      %v2628 = vsel %vm282, %v2590, 0.0
      %v2629 = vrot.slane %v2628, 4
      %v2630 = vadd.f32 %v2628, %v2629
      %v2631 = vrot.slane %v2630, 2
      %v2632 = vadd.f32 %v2630, %v2631
      %v2633 = vrot.slane %v2632, 1
      %v2634 = vadd.f32 %v2632, %v2633
      %v2635 = vsel %vm282, %v2591, 0.0
      %v2636 = vrot.slane %v2635, 4
      %v2637 = vadd.f32 %v2635, %v2636
      %v2638 = vrot.slane %v2637, 2
      %v2639 = vadd.f32 %v2637, %v2638
      %v2640 = vrot.slane %v2639, 1
      %v2641 = vadd.f32 %v2639, %v2640
      %v2642 = vsel %vm282, %v2592, 0.0
      %v2643 = vrot.slane %v2642, 4
      %v2644 = vadd.f32 %v2642, %v2643
      %v2645 = vrot.slane %v2644, 2
      %v2646 = vadd.f32 %v2644, %v2645
      %v2647 = vrot.slane %v2646, 1
      %v2648 = vadd.f32 %v2646, %v2647
      %v2657 = vsel %vm347, %v2606, %v2599
      %v2658 = vsel %vm349, %v2613, %v2657
      %v2659 = vsel %vm351, %v2620, %v2658
      %v2660 = vsel %vm353, %v2627, %v2659
      %v2661 = vsel %vm355, %v2634, %v2660
      %v2662 = vsel %vm357, %v2641, %v2661
      %v2663 = vsel %vm359, %v2648, %v2662
      %v2664 = vsel %vm361, %v2663, 0
      %2666 = vmatpush.msra.mxu0 0.0
      %2667 = vmatpush.msra.mxu0 0.0
      %2668 = vmatpush.msra.mxu0 0.0
      %2669 = vmatpush.msra.mxu0 0.0
      %2670 = vmatpush.msra.mxu0 0.0
      %2671 = vmatpush.msra.mxu0 0.0
      %2672 = vmatpush.msra.mxu0 0.0
      %2673 = vmatpush.msra.mxu0 0.0
      %2674 = vmatpush.msra.mxu0 0.0
      %2675 = vmatpush.msra.mxu0 0.0
      %2676 = vmatpush.msra.mxu0 0.0
      %2677 = vmatpush.msra.mxu0 0.0
      %2678 = vmatpush.msra.mxu0 %v258
      %2679 = vmatpush.msra.mxu0 %v257
      %2680 = vmatpush.msra.mxu0 %v256
      %2681 = vmatpush.msra.mxu0 %v255
      %2682 = vmatmul.f32.gmra.mxu0 %v2664
      %v2683 = vpop.f32.mrf.mxu0
      %v2684 = vadd.f32 0.0, %v2683
      %2685 = vdwg.mxu0
      %v2686 = vpack.c.bf16 %v2684, %v2684
      %s2687 = scalar_lea.vmem %s3, 128
      %v2688 = vld [vmem:[%s2687] sm:$0xf]
      %v2689 = vld [vmem:[%s2687 + $0x4] sm:$0xf]
      %v2692 = vunpack.c.l.b16 %v2688
      %v2693 = vunpack.c.l.b16 %v2689
      %v2694 = vpack.c.b16 %v2693, %v2692
      %v2697 = vsel %vm514, %v2686, 0
      %2699 = vmatpush.bf16.msra.mxu0 0
      %2700 = vmatpush.bf16.msra.mxu0 0
      %2701 = vmatpush.bf16.msra.mxu0 0
      %2702 = vmatpush.bf16.msra.mxu0 0
      %2703 = vmatpush.bf16.msra.mxu0 0
      %2704 = vmatpush.bf16.msra.mxu0 0
      %2705 = vmatpush.bf16.msra.mxu0 0
      %2706 = vmatpush.bf16.msra.mxu0 %v2694
      %2707 = vmatmul.bf16.gmra.mxu0 %v2697
      %v2708 = vpop.f32.mrf.mxu0
      %v2709 = vadd.f32 0.0, %v2708
      %v2710 = vpop.f32.mrf.mxu0
      %2711 = vdwg.mxu0
      %v2712 = vadd.f32 %v2568, %v2709
      %s2713 = scalar_lea.vmem %s242, 33
      %v2714 = vld [vmem:[%s2713] ss:$16 sm:$0x3]
      %s2715 = scalar_lea.vmem %s242, 97
      %v2716 = vld [vmem:[%s2715] ss:$16 sm:$0x3]
      %s2717 = scalar_lea.vmem %s242, 161
      %v2718 = vld [vmem:[%s2717] ss:$16 sm:$0x3]
      %s2719 = scalar_lea.vmem %s242, 225
      %v2720 = vld [vmem:[%s2719] ss:$16 sm:$0x3]
      %s2721 = scalar_lea.vmem %s242, 289
      %v2722 = vld [vmem:[%s2721] ss:$16 sm:$0x3]
      %s2723 = scalar_lea.vmem %s242, 353
      %v2724 = vld [vmem:[%s2723] ss:$16 sm:$0x3]
      %s2725 = scalar_lea.vmem %s242, 417
      %v2726 = vld [vmem:[%s2725] ss:$16 sm:$0x3]
      %s2727 = scalar_lea.vmem %s242, 481
      %v2728 = vld [vmem:[%s2727] ss:$16 sm:$0x3]
      %v2729 = vmul.f32 %v2714, %v254
      %v2730 = vmul.f32 %v2716, %v254
      %v2731 = vmul.f32 %v2718, %v254
      %v2732 = vmul.f32 %v2720, %v254
      %v2733 = vmul.f32 %v2722, %v254
      %v2734 = vmul.f32 %v2724, %v254
      %v2735 = vmul.f32 %v2726, %v254
      %v2736 = vmul.f32 %v2728, %v254
      %v2737 = vsel %vm282, %v2729, 0.0
      %v2738 = vrot.slane %v2737, 4
      %v2739 = vadd.f32 %v2737, %v2738
      %v2740 = vrot.slane %v2739, 2
      %v2741 = vadd.f32 %v2739, %v2740
      %v2742 = vrot.slane %v2741, 1
      %v2743 = vadd.f32 %v2741, %v2742
      %v2744 = vsel %vm282, %v2730, 0.0
      %v2745 = vrot.slane %v2744, 4
      %v2746 = vadd.f32 %v2744, %v2745
      %v2747 = vrot.slane %v2746, 2
      %v2748 = vadd.f32 %v2746, %v2747
      %v2749 = vrot.slane %v2748, 1
      %v2750 = vadd.f32 %v2748, %v2749
      %v2751 = vsel %vm282, %v2731, 0.0
      %v2752 = vrot.slane %v2751, 4
      %v2753 = vadd.f32 %v2751, %v2752
      %v2754 = vrot.slane %v2753, 2
      %v2755 = vadd.f32 %v2753, %v2754
      %v2756 = vrot.slane %v2755, 1
      %v2757 = vadd.f32 %v2755, %v2756
      %v2758 = vsel %vm282, %v2732, 0.0
      %v2759 = vrot.slane %v2758, 4
      %v2760 = vadd.f32 %v2758, %v2759
      %v2761 = vrot.slane %v2760, 2
      %v2762 = vadd.f32 %v2760, %v2761
      %v2763 = vrot.slane %v2762, 1
      %v2764 = vadd.f32 %v2762, %v2763
      %v2765 = vsel %vm282, %v2733, 0.0
      %v2766 = vrot.slane %v2765, 4
      %v2767 = vadd.f32 %v2765, %v2766
      %v2768 = vrot.slane %v2767, 2
      %v2769 = vadd.f32 %v2767, %v2768
      %v2770 = vrot.slane %v2769, 1
      %v2771 = vadd.f32 %v2769, %v2770
      %v2772 = vsel %vm282, %v2734, 0.0
      %v2773 = vrot.slane %v2772, 4
      %v2774 = vadd.f32 %v2772, %v2773
      %v2775 = vrot.slane %v2774, 2
      %v2776 = vadd.f32 %v2774, %v2775
      %v2777 = vrot.slane %v2776, 1
      %v2778 = vadd.f32 %v2776, %v2777
      %v2779 = vsel %vm282, %v2735, 0.0
      %v2780 = vrot.slane %v2779, 4
      %v2781 = vadd.f32 %v2779, %v2780
      %v2782 = vrot.slane %v2781, 2
      %v2783 = vadd.f32 %v2781, %v2782
      %v2784 = vrot.slane %v2783, 1
      %v2785 = vadd.f32 %v2783, %v2784
      %v2786 = vsel %vm282, %v2736, 0.0
      %v2787 = vrot.slane %v2786, 4
      %v2788 = vadd.f32 %v2786, %v2787
      %v2789 = vrot.slane %v2788, 2
      %v2790 = vadd.f32 %v2788, %v2789
      %v2791 = vrot.slane %v2790, 1
      %v2792 = vadd.f32 %v2790, %v2791
      %v2801 = vsel %vm347, %v2750, %v2743
      %v2802 = vsel %vm349, %v2757, %v2801
      %v2803 = vsel %vm351, %v2764, %v2802
      %v2804 = vsel %vm353, %v2771, %v2803
      %v2805 = vsel %vm355, %v2778, %v2804
      %v2806 = vsel %vm357, %v2785, %v2805
      %v2807 = vsel %vm359, %v2792, %v2806
      %v2808 = vsel %vm361, %v2807, 0
      %2810 = vmatpush.msra.mxu0 0.0
      %2811 = vmatpush.msra.mxu0 0.0
      %2812 = vmatpush.msra.mxu0 0.0
      %2813 = vmatpush.msra.mxu0 0.0
      %2814 = vmatpush.msra.mxu0 0.0
      %2815 = vmatpush.msra.mxu0 0.0
      %2816 = vmatpush.msra.mxu0 0.0
      %2817 = vmatpush.msra.mxu0 0.0
      %2818 = vmatpush.msra.mxu0 0.0
      %2819 = vmatpush.msra.mxu0 0.0
      %2820 = vmatpush.msra.mxu0 0.0
      %2821 = vmatpush.msra.mxu0 0.0
      %2822 = vmatpush.msra.mxu0 %v258
      %2823 = vmatpush.msra.mxu0 %v257
      %2824 = vmatpush.msra.mxu0 %v256
      %2825 = vmatpush.msra.mxu0 %v255
      %2826 = vmatmul.f32.gmra.mxu0 %v2808
      %v2827 = vpop.f32.mrf.mxu0
      %v2828 = vadd.f32 0.0, %v2827
      %2829 = vdwg.mxu0
      %v2830 = vpack.c.bf16 %v2828, %v2828
      %s2831 = scalar_lea.vmem %s3, 136
      %v2832 = vld [vmem:[%s2831] sm:$0xf]
      %v2833 = vld [vmem:[%s2831 + $0x4] sm:$0xf]
      %v2836 = vunpack.c.l.b16 %v2832
      %v2837 = vunpack.c.l.b16 %v2833
      %v2838 = vpack.c.b16 %v2837, %v2836
      %v2841 = vsel %vm514, %v2830, 0
      %2843 = vmatpush.bf16.msra.mxu0 0
      %2844 = vmatpush.bf16.msra.mxu0 0
      %2845 = vmatpush.bf16.msra.mxu0 0
      %2846 = vmatpush.bf16.msra.mxu0 0
      %2847 = vmatpush.bf16.msra.mxu0 0
      %2848 = vmatpush.bf16.msra.mxu0 0
      %2849 = vmatpush.bf16.msra.mxu0 0
      %2850 = vmatpush.bf16.msra.mxu0 %v2838
      %2851 = vmatmul.bf16.gmra.mxu0 %v2841
      %v2852 = vpop.f32.mrf.mxu0
      %v2853 = vadd.f32 0.0, %v2852
      %v2854 = vpop.f32.mrf.mxu0
      %2855 = vdwg.mxu0
      %v2856 = vadd.f32 %v2712, %v2853
      %s2857 = scalar_lea.vmem %s242, 34
      %v2858 = vld [vmem:[%s2857] ss:$16 sm:$0x3]
      %s2859 = scalar_lea.vmem %s242, 98
      %v2860 = vld [vmem:[%s2859] ss:$16 sm:$0x3]
      %s2861 = scalar_lea.vmem %s242, 162
      %v2862 = vld [vmem:[%s2861] ss:$16 sm:$0x3]
      %s2863 = scalar_lea.vmem %s242, 226
      %v2864 = vld [vmem:[%s2863] ss:$16 sm:$0x3]
      %s2865 = scalar_lea.vmem %s242, 290
      %v2866 = vld [vmem:[%s2865] ss:$16 sm:$0x3]
      %s2867 = scalar_lea.vmem %s242, 354
      %v2868 = vld [vmem:[%s2867] ss:$16 sm:$0x3]
      %s2869 = scalar_lea.vmem %s242, 418
      %v2870 = vld [vmem:[%s2869] ss:$16 sm:$0x3]
      %s2871 = scalar_lea.vmem %s242, 482
      %v2872 = vld [vmem:[%s2871] ss:$16 sm:$0x3]
      %v2873 = vmul.f32 %v2858, %v254
      %v2874 = vmul.f32 %v2860, %v254
      %v2875 = vmul.f32 %v2862, %v254
      %v2876 = vmul.f32 %v2864, %v254
      %v2877 = vmul.f32 %v2866, %v254
      %v2878 = vmul.f32 %v2868, %v254
      %v2879 = vmul.f32 %v2870, %v254
      %v2880 = vmul.f32 %v2872, %v254
      %v2881 = vsel %vm282, %v2873, 0.0
      %v2882 = vrot.slane %v2881, 4
      %v2883 = vadd.f32 %v2881, %v2882
      %v2884 = vrot.slane %v2883, 2
      %v2885 = vadd.f32 %v2883, %v2884
      %v2886 = vrot.slane %v2885, 1
      %v2887 = vadd.f32 %v2885, %v2886
      %v2888 = vsel %vm282, %v2874, 0.0
      %v2889 = vrot.slane %v2888, 4
      %v2890 = vadd.f32 %v2888, %v2889
      %v2891 = vrot.slane %v2890, 2
      %v2892 = vadd.f32 %v2890, %v2891
      %v2893 = vrot.slane %v2892, 1
      %v2894 = vadd.f32 %v2892, %v2893
      %v2895 = vsel %vm282, %v2875, 0.0
      %v2896 = vrot.slane %v2895, 4
      %v2897 = vadd.f32 %v2895, %v2896
      %v2898 = vrot.slane %v2897, 2
      %v2899 = vadd.f32 %v2897, %v2898
      %v2900 = vrot.slane %v2899, 1
      %v2901 = vadd.f32 %v2899, %v2900
      %v2902 = vsel %vm282, %v2876, 0.0
      %v2903 = vrot.slane %v2902, 4
      %v2904 = vadd.f32 %v2902, %v2903
      %v2905 = vrot.slane %v2904, 2
      %v2906 = vadd.f32 %v2904, %v2905
      %v2907 = vrot.slane %v2906, 1
      %v2908 = vadd.f32 %v2906, %v2907
      %v2909 = vsel %vm282, %v2877, 0.0
      %v2910 = vrot.slane %v2909, 4
      %v2911 = vadd.f32 %v2909, %v2910
      %v2912 = vrot.slane %v2911, 2
      %v2913 = vadd.f32 %v2911, %v2912
      %v2914 = vrot.slane %v2913, 1
      %v2915 = vadd.f32 %v2913, %v2914
      %v2916 = vsel %vm282, %v2878, 0.0
      %v2917 = vrot.slane %v2916, 4
      %v2918 = vadd.f32 %v2916, %v2917
      %v2919 = vrot.slane %v2918, 2
      %v2920 = vadd.f32 %v2918, %v2919
      %v2921 = vrot.slane %v2920, 1
      %v2922 = vadd.f32 %v2920, %v2921
      %v2923 = vsel %vm282, %v2879, 0.0
      %v2924 = vrot.slane %v2923, 4
      %v2925 = vadd.f32 %v2923, %v2924
      %v2926 = vrot.slane %v2925, 2
      %v2927 = vadd.f32 %v2925, %v2926
      %v2928 = vrot.slane %v2927, 1
      %v2929 = vadd.f32 %v2927, %v2928
      %v2930 = vsel %vm282, %v2880, 0.0
      %v2931 = vrot.slane %v2930, 4
      %v2932 = vadd.f32 %v2930, %v2931
      %v2933 = vrot.slane %v2932, 2
      %v2934 = vadd.f32 %v2932, %v2933
      %v2935 = vrot.slane %v2934, 1
      %v2936 = vadd.f32 %v2934, %v2935
      %v2945 = vsel %vm347, %v2894, %v2887
      %v2946 = vsel %vm349, %v2901, %v2945
      %v2947 = vsel %vm351, %v2908, %v2946
      %v2948 = vsel %vm353, %v2915, %v2947
      %v2949 = vsel %vm355, %v2922, %v2948
      %v2950 = vsel %vm357, %v2929, %v2949
      %v2951 = vsel %vm359, %v2936, %v2950
      %v2952 = vsel %vm361, %v2951, 0
      %2954 = vmatpush.msra.mxu0 0.0
      %2955 = vmatpush.msra.mxu0 0.0
      %2956 = vmatpush.msra.mxu0 0.0
      %2957 = vmatpush.msra.mxu0 0.0
      %2958 = vmatpush.msra.mxu0 0.0
      %2959 = vmatpush.msra.mxu0 0.0
      %2960 = vmatpush.msra.mxu0 0.0
      %2961 = vmatpush.msra.mxu0 0.0
      %2962 = vmatpush.msra.mxu0 0.0
      %2963 = vmatpush.msra.mxu0 0.0
      %2964 = vmatpush.msra.mxu0 0.0
      %2965 = vmatpush.msra.mxu0 0.0
      %2966 = vmatpush.msra.mxu0 %v258
      %2967 = vmatpush.msra.mxu0 %v257
      %2968 = vmatpush.msra.mxu0 %v256
      %2969 = vmatpush.msra.mxu0 %v255
      %2970 = vmatmul.f32.gmra.mxu0 %v2952
      %v2971 = vpop.f32.mrf.mxu0
      %v2972 = vadd.f32 0.0, %v2971
      %2973 = vdwg.mxu0
      %v2974 = vpack.c.bf16 %v2972, %v2972
      %s2975 = scalar_lea.vmem %s3, 144
      %v2976 = vld [vmem:[%s2975] sm:$0xf]
      %v2977 = vld [vmem:[%s2975 + $0x4] sm:$0xf]
      %v2980 = vunpack.c.l.b16 %v2976
      %v2981 = vunpack.c.l.b16 %v2977
      %v2982 = vpack.c.b16 %v2981, %v2980
      %v2985 = vsel %vm514, %v2974, 0
      %2987 = vmatpush.bf16.msra.mxu0 0
      %2988 = vmatpush.bf16.msra.mxu0 0
      %2989 = vmatpush.bf16.msra.mxu0 0
      %2990 = vmatpush.bf16.msra.mxu0 0
      %2991 = vmatpush.bf16.msra.mxu0 0
      %2992 = vmatpush.bf16.msra.mxu0 0
      %2993 = vmatpush.bf16.msra.mxu0 0
      %2994 = vmatpush.bf16.msra.mxu0 %v2982
      %2995 = vmatmul.bf16.gmra.mxu0 %v2985
      %v2996 = vpop.f32.mrf.mxu0
      %v2997 = vadd.f32 0.0, %v2996
      %v2998 = vpop.f32.mrf.mxu0
      %2999 = vdwg.mxu0
      %v3000 = vadd.f32 %v2856, %v2997
      %s3001 = scalar_lea.vmem %s242, 35
      %v3002 = vld [vmem:[%s3001] ss:$16 sm:$0x3]
      %s3003 = scalar_lea.vmem %s242, 99
      %v3004 = vld [vmem:[%s3003] ss:$16 sm:$0x3]
      %s3005 = scalar_lea.vmem %s242, 163
      %v3006 = vld [vmem:[%s3005] ss:$16 sm:$0x3]
      %s3007 = scalar_lea.vmem %s242, 227
      %v3008 = vld [vmem:[%s3007] ss:$16 sm:$0x3]
      %s3009 = scalar_lea.vmem %s242, 291
      %v3010 = vld [vmem:[%s3009] ss:$16 sm:$0x3]
      %s3011 = scalar_lea.vmem %s242, 355
      %v3012 = vld [vmem:[%s3011] ss:$16 sm:$0x3]
      %s3013 = scalar_lea.vmem %s242, 419
      %v3014 = vld [vmem:[%s3013] ss:$16 sm:$0x3]
      %s3015 = scalar_lea.vmem %s242, 483
      %v3016 = vld [vmem:[%s3015] ss:$16 sm:$0x3]
      %v3017 = vmul.f32 %v3002, %v254
      %v3018 = vmul.f32 %v3004, %v254
      %v3019 = vmul.f32 %v3006, %v254
      %v3020 = vmul.f32 %v3008, %v254
      %v3021 = vmul.f32 %v3010, %v254
      %v3022 = vmul.f32 %v3012, %v254
      %v3023 = vmul.f32 %v3014, %v254
      %v3024 = vmul.f32 %v3016, %v254
      %v3025 = vsel %vm282, %v3017, 0.0
      %v3026 = vrot.slane %v3025, 4
      %v3027 = vadd.f32 %v3025, %v3026
      %v3028 = vrot.slane %v3027, 2
      %v3029 = vadd.f32 %v3027, %v3028
      %v3030 = vrot.slane %v3029, 1
      %v3031 = vadd.f32 %v3029, %v3030
      %v3032 = vsel %vm282, %v3018, 0.0
      %v3033 = vrot.slane %v3032, 4
      %v3034 = vadd.f32 %v3032, %v3033
      %v3035 = vrot.slane %v3034, 2
      %v3036 = vadd.f32 %v3034, %v3035
      %v3037 = vrot.slane %v3036, 1
      %v3038 = vadd.f32 %v3036, %v3037
      %v3039 = vsel %vm282, %v3019, 0.0
      %v3040 = vrot.slane %v3039, 4
      %v3041 = vadd.f32 %v3039, %v3040
      %v3042 = vrot.slane %v3041, 2
      %v3043 = vadd.f32 %v3041, %v3042
      %v3044 = vrot.slane %v3043, 1
      %v3045 = vadd.f32 %v3043, %v3044
      %v3046 = vsel %vm282, %v3020, 0.0
      %v3047 = vrot.slane %v3046, 4
      %v3048 = vadd.f32 %v3046, %v3047
      %v3049 = vrot.slane %v3048, 2
      %v3050 = vadd.f32 %v3048, %v3049
      %v3051 = vrot.slane %v3050, 1
      %v3052 = vadd.f32 %v3050, %v3051
      %v3053 = vsel %vm282, %v3021, 0.0
      %v3054 = vrot.slane %v3053, 4
      %v3055 = vadd.f32 %v3053, %v3054
      %v3056 = vrot.slane %v3055, 2
      %v3057 = vadd.f32 %v3055, %v3056
      %v3058 = vrot.slane %v3057, 1
      %v3059 = vadd.f32 %v3057, %v3058
      %v3060 = vsel %vm282, %v3022, 0.0
      %v3061 = vrot.slane %v3060, 4
      %v3062 = vadd.f32 %v3060, %v3061
      %v3063 = vrot.slane %v3062, 2
      %v3064 = vadd.f32 %v3062, %v3063
      %v3065 = vrot.slane %v3064, 1
      %v3066 = vadd.f32 %v3064, %v3065
      %v3067 = vsel %vm282, %v3023, 0.0
      %v3068 = vrot.slane %v3067, 4
      %v3069 = vadd.f32 %v3067, %v3068
      %v3070 = vrot.slane %v3069, 2
      %v3071 = vadd.f32 %v3069, %v3070
      %v3072 = vrot.slane %v3071, 1
      %v3073 = vadd.f32 %v3071, %v3072
      %v3074 = vsel %vm282, %v3024, 0.0
      %v3075 = vrot.slane %v3074, 4
      %v3076 = vadd.f32 %v3074, %v3075
      %v3077 = vrot.slane %v3076, 2
      %v3078 = vadd.f32 %v3076, %v3077
      %v3079 = vrot.slane %v3078, 1
      %v3080 = vadd.f32 %v3078, %v3079
      %v3089 = vsel %vm347, %v3038, %v3031
      %v3090 = vsel %vm349, %v3045, %v3089
      %v3091 = vsel %vm351, %v3052, %v3090
      %v3092 = vsel %vm353, %v3059, %v3091
      %v3093 = vsel %vm355, %v3066, %v3092
      %v3094 = vsel %vm357, %v3073, %v3093
      %v3095 = vsel %vm359, %v3080, %v3094
      %v3096 = vsel %vm361, %v3095, 0
      %3098 = vmatpush.msra.mxu0 0.0
      %3099 = vmatpush.msra.mxu0 0.0
      %3100 = vmatpush.msra.mxu0 0.0
      %3101 = vmatpush.msra.mxu0 0.0
      %3102 = vmatpush.msra.mxu0 0.0
      %3103 = vmatpush.msra.mxu0 0.0
      %3104 = vmatpush.msra.mxu0 0.0
      %3105 = vmatpush.msra.mxu0 0.0
      %3106 = vmatpush.msra.mxu0 0.0
      %3107 = vmatpush.msra.mxu0 0.0
      %3108 = vmatpush.msra.mxu0 0.0
      %3109 = vmatpush.msra.mxu0 0.0
      %3110 = vmatpush.msra.mxu0 %v258
      %3111 = vmatpush.msra.mxu0 %v257
      %3112 = vmatpush.msra.mxu0 %v256
      %3113 = vmatpush.msra.mxu0 %v255
      %3114 = vmatmul.f32.gmra.mxu0 %v3096
      %v3115 = vpop.f32.mrf.mxu0
      %v3116 = vadd.f32 0.0, %v3115
      %3117 = vdwg.mxu0
      %v3118 = vpack.c.bf16 %v3116, %v3116
      %s3119 = scalar_lea.vmem %s3, 152
      %v3120 = vld [vmem:[%s3119] sm:$0xf]
      %v3121 = vld [vmem:[%s3119 + $0x4] sm:$0xf]
      %v3124 = vunpack.c.l.b16 %v3120
      %v3125 = vunpack.c.l.b16 %v3121
      %v3126 = vpack.c.b16 %v3125, %v3124
      %v3129 = vsel %vm514, %v3118, 0
      %3131 = vmatpush.bf16.msra.mxu0 0
      %3132 = vmatpush.bf16.msra.mxu0 0
      %3133 = vmatpush.bf16.msra.mxu0 0
      %3134 = vmatpush.bf16.msra.mxu0 0
      %3135 = vmatpush.bf16.msra.mxu0 0
      %3136 = vmatpush.bf16.msra.mxu0 0
      %3137 = vmatpush.bf16.msra.mxu0 0
      %3138 = vmatpush.bf16.msra.mxu0 %v3126
      %3139 = vmatmul.bf16.gmra.mxu0 %v3129
      %v3140 = vpop.f32.mrf.mxu0
      %v3141 = vadd.f32 0.0, %v3140
      %v3142 = vpop.f32.mrf.mxu0
      %3143 = vdwg.mxu0
      %v3144 = vadd.f32 %v3000, %v3141
      %s3145 = scalar_lea.vmem %s242, 36
      %v3146 = vld [vmem:[%s3145] ss:$16 sm:$0x3]
      %s3147 = scalar_lea.vmem %s242, 100
      %v3148 = vld [vmem:[%s3147] ss:$16 sm:$0x3]
      %s3149 = scalar_lea.vmem %s242, 164
      %v3150 = vld [vmem:[%s3149] ss:$16 sm:$0x3]
      %s3151 = scalar_lea.vmem %s242, 228
      %v3152 = vld [vmem:[%s3151] ss:$16 sm:$0x3]
      %s3153 = scalar_lea.vmem %s242, 292
      %v3154 = vld [vmem:[%s3153] ss:$16 sm:$0x3]
      %s3155 = scalar_lea.vmem %s242, 356
      %v3156 = vld [vmem:[%s3155] ss:$16 sm:$0x3]
      %s3157 = scalar_lea.vmem %s242, 420
      %v3158 = vld [vmem:[%s3157] ss:$16 sm:$0x3]
      %s3159 = scalar_lea.vmem %s242, 484
      %v3160 = vld [vmem:[%s3159] ss:$16 sm:$0x3]
      %v3161 = vmul.f32 %v3146, %v254
      %v3162 = vmul.f32 %v3148, %v254
      %v3163 = vmul.f32 %v3150, %v254
      %v3164 = vmul.f32 %v3152, %v254
      %v3165 = vmul.f32 %v3154, %v254
      %v3166 = vmul.f32 %v3156, %v254
      %v3167 = vmul.f32 %v3158, %v254
      %v3168 = vmul.f32 %v3160, %v254
      %v3169 = vsel %vm282, %v3161, 0.0
      %v3170 = vrot.slane %v3169, 4
      %v3171 = vadd.f32 %v3169, %v3170
      %v3172 = vrot.slane %v3171, 2
      %v3173 = vadd.f32 %v3171, %v3172
      %v3174 = vrot.slane %v3173, 1
      %v3175 = vadd.f32 %v3173, %v3174
      %v3176 = vsel %vm282, %v3162, 0.0
      %v3177 = vrot.slane %v3176, 4
      %v3178 = vadd.f32 %v3176, %v3177
      %v3179 = vrot.slane %v3178, 2
      %v3180 = vadd.f32 %v3178, %v3179
      %v3181 = vrot.slane %v3180, 1
      %v3182 = vadd.f32 %v3180, %v3181
      %v3183 = vsel %vm282, %v3163, 0.0
      %v3184 = vrot.slane %v3183, 4
      %v3185 = vadd.f32 %v3183, %v3184
      %v3186 = vrot.slane %v3185, 2
      %v3187 = vadd.f32 %v3185, %v3186
      %v3188 = vrot.slane %v3187, 1
      %v3189 = vadd.f32 %v3187, %v3188
      %v3190 = vsel %vm282, %v3164, 0.0
      %v3191 = vrot.slane %v3190, 4
      %v3192 = vadd.f32 %v3190, %v3191
      %v3193 = vrot.slane %v3192, 2
      %v3194 = vadd.f32 %v3192, %v3193
      %v3195 = vrot.slane %v3194, 1
      %v3196 = vadd.f32 %v3194, %v3195
      %v3197 = vsel %vm282, %v3165, 0.0
      %v3198 = vrot.slane %v3197, 4
      %v3199 = vadd.f32 %v3197, %v3198
      %v3200 = vrot.slane %v3199, 2
      %v3201 = vadd.f32 %v3199, %v3200
      %v3202 = vrot.slane %v3201, 1
      %v3203 = vadd.f32 %v3201, %v3202
      %v3204 = vsel %vm282, %v3166, 0.0
      %v3205 = vrot.slane %v3204, 4
      %v3206 = vadd.f32 %v3204, %v3205
      %v3207 = vrot.slane %v3206, 2
      %v3208 = vadd.f32 %v3206, %v3207
      %v3209 = vrot.slane %v3208, 1
      %v3210 = vadd.f32 %v3208, %v3209
      %v3211 = vsel %vm282, %v3167, 0.0
      %v3212 = vrot.slane %v3211, 4
      %v3213 = vadd.f32 %v3211, %v3212
      %v3214 = vrot.slane %v3213, 2
      %v3215 = vadd.f32 %v3213, %v3214
      %v3216 = vrot.slane %v3215, 1
      %v3217 = vadd.f32 %v3215, %v3216
      %v3218 = vsel %vm282, %v3168, 0.0
      %v3219 = vrot.slane %v3218, 4
      %v3220 = vadd.f32 %v3218, %v3219
      %v3221 = vrot.slane %v3220, 2
      %v3222 = vadd.f32 %v3220, %v3221
      %v3223 = vrot.slane %v3222, 1
      %v3224 = vadd.f32 %v3222, %v3223
      %v3233 = vsel %vm347, %v3182, %v3175
      %v3234 = vsel %vm349, %v3189, %v3233
      %v3235 = vsel %vm351, %v3196, %v3234
      %v3236 = vsel %vm353, %v3203, %v3235
      %v3237 = vsel %vm355, %v3210, %v3236
      %v3238 = vsel %vm357, %v3217, %v3237
      %v3239 = vsel %vm359, %v3224, %v3238
      %v3240 = vsel %vm361, %v3239, 0
      %3242 = vmatpush.msra.mxu0 0.0
      %3243 = vmatpush.msra.mxu0 0.0
      %3244 = vmatpush.msra.mxu0 0.0
      %3245 = vmatpush.msra.mxu0 0.0
      %3246 = vmatpush.msra.mxu0 0.0
      %3247 = vmatpush.msra.mxu0 0.0
      %3248 = vmatpush.msra.mxu0 0.0
      %3249 = vmatpush.msra.mxu0 0.0
      %3250 = vmatpush.msra.mxu0 0.0
      %3251 = vmatpush.msra.mxu0 0.0
      %3252 = vmatpush.msra.mxu0 0.0
      %3253 = vmatpush.msra.mxu0 0.0
      %3254 = vmatpush.msra.mxu0 %v258
      %3255 = vmatpush.msra.mxu0 %v257
      %3256 = vmatpush.msra.mxu0 %v256
      %3257 = vmatpush.msra.mxu0 %v255
      %3258 = vmatmul.f32.gmra.mxu0 %v3240
      %v3259 = vpop.f32.mrf.mxu0
      %v3260 = vadd.f32 0.0, %v3259
      %3261 = vdwg.mxu0
      %v3262 = vpack.c.bf16 %v3260, %v3260
      %s3263 = scalar_lea.vmem %s3, 160
      %v3264 = vld [vmem:[%s3263] sm:$0xf]
      %v3265 = vld [vmem:[%s3263 + $0x4] sm:$0xf]
      %v3268 = vunpack.c.l.b16 %v3264
      %v3269 = vunpack.c.l.b16 %v3265
      %v3270 = vpack.c.b16 %v3269, %v3268
      %v3273 = vsel %vm514, %v3262, 0
      %3275 = vmatpush.bf16.msra.mxu0 0
      %3276 = vmatpush.bf16.msra.mxu0 0
      %3277 = vmatpush.bf16.msra.mxu0 0
      %3278 = vmatpush.bf16.msra.mxu0 0
      %3279 = vmatpush.bf16.msra.mxu0 0
      %3280 = vmatpush.bf16.msra.mxu0 0
      %3281 = vmatpush.bf16.msra.mxu0 0
      %3282 = vmatpush.bf16.msra.mxu0 %v3270
      %3283 = vmatmul.bf16.gmra.mxu0 %v3273
      %v3284 = vpop.f32.mrf.mxu0
      %v3285 = vadd.f32 0.0, %v3284
      %v3286 = vpop.f32.mrf.mxu0
      %3287 = vdwg.mxu0
      %v3288 = vadd.f32 %v3144, %v3285
      %s3289 = scalar_lea.vmem %s242, 37
      %v3290 = vld [vmem:[%s3289] ss:$16 sm:$0x3]
      %s3291 = scalar_lea.vmem %s242, 101
      %v3292 = vld [vmem:[%s3291] ss:$16 sm:$0x3]
      %s3293 = scalar_lea.vmem %s242, 165
      %v3294 = vld [vmem:[%s3293] ss:$16 sm:$0x3]
      %s3295 = scalar_lea.vmem %s242, 229
      %v3296 = vld [vmem:[%s3295] ss:$16 sm:$0x3]
      %s3297 = scalar_lea.vmem %s242, 293
      %v3298 = vld [vmem:[%s3297] ss:$16 sm:$0x3]
      %s3299 = scalar_lea.vmem %s242, 357
      %v3300 = vld [vmem:[%s3299] ss:$16 sm:$0x3]
      %s3301 = scalar_lea.vmem %s242, 421
      %v3302 = vld [vmem:[%s3301] ss:$16 sm:$0x3]
      %s3303 = scalar_lea.vmem %s242, 485
      %v3304 = vld [vmem:[%s3303] ss:$16 sm:$0x3]
      %v3305 = vmul.f32 %v3290, %v254
      %v3306 = vmul.f32 %v3292, %v254
      %v3307 = vmul.f32 %v3294, %v254
      %v3308 = vmul.f32 %v3296, %v254
      %v3309 = vmul.f32 %v3298, %v254
      %v3310 = vmul.f32 %v3300, %v254
      %v3311 = vmul.f32 %v3302, %v254
      %v3312 = vmul.f32 %v3304, %v254
      %v3313 = vsel %vm282, %v3305, 0.0
      %v3314 = vrot.slane %v3313, 4
      %v3315 = vadd.f32 %v3313, %v3314
      %v3316 = vrot.slane %v3315, 2
      %v3317 = vadd.f32 %v3315, %v3316
      %v3318 = vrot.slane %v3317, 1
      %v3319 = vadd.f32 %v3317, %v3318
      %v3320 = vsel %vm282, %v3306, 0.0
      %v3321 = vrot.slane %v3320, 4
      %v3322 = vadd.f32 %v3320, %v3321
      %v3323 = vrot.slane %v3322, 2
      %v3324 = vadd.f32 %v3322, %v3323
      %v3325 = vrot.slane %v3324, 1
      %v3326 = vadd.f32 %v3324, %v3325
      %v3327 = vsel %vm282, %v3307, 0.0
      %v3328 = vrot.slane %v3327, 4
      %v3329 = vadd.f32 %v3327, %v3328
      %v3330 = vrot.slane %v3329, 2
      %v3331 = vadd.f32 %v3329, %v3330
      %v3332 = vrot.slane %v3331, 1
      %v3333 = vadd.f32 %v3331, %v3332
      %v3334 = vsel %vm282, %v3308, 0.0
      %v3335 = vrot.slane %v3334, 4
      %v3336 = vadd.f32 %v3334, %v3335
      %v3337 = vrot.slane %v3336, 2
      %v3338 = vadd.f32 %v3336, %v3337
      %v3339 = vrot.slane %v3338, 1
      %v3340 = vadd.f32 %v3338, %v3339
      %v3341 = vsel %vm282, %v3309, 0.0
      %v3342 = vrot.slane %v3341, 4
      %v3343 = vadd.f32 %v3341, %v3342
      %v3344 = vrot.slane %v3343, 2
      %v3345 = vadd.f32 %v3343, %v3344
      %v3346 = vrot.slane %v3345, 1
      %v3347 = vadd.f32 %v3345, %v3346
      %v3348 = vsel %vm282, %v3310, 0.0
      %v3349 = vrot.slane %v3348, 4
      %v3350 = vadd.f32 %v3348, %v3349
      %v3351 = vrot.slane %v3350, 2
      %v3352 = vadd.f32 %v3350, %v3351
      %v3353 = vrot.slane %v3352, 1
      %v3354 = vadd.f32 %v3352, %v3353
      %v3355 = vsel %vm282, %v3311, 0.0
      %v3356 = vrot.slane %v3355, 4
      %v3357 = vadd.f32 %v3355, %v3356
      %v3358 = vrot.slane %v3357, 2
      %v3359 = vadd.f32 %v3357, %v3358
      %v3360 = vrot.slane %v3359, 1
      %v3361 = vadd.f32 %v3359, %v3360
      %v3362 = vsel %vm282, %v3312, 0.0
      %v3363 = vrot.slane %v3362, 4
      %v3364 = vadd.f32 %v3362, %v3363
      %v3365 = vrot.slane %v3364, 2
      %v3366 = vadd.f32 %v3364, %v3365
      %v3367 = vrot.slane %v3366, 1
      %v3368 = vadd.f32 %v3366, %v3367
      %v3377 = vsel %vm347, %v3326, %v3319
      %v3378 = vsel %vm349, %v3333, %v3377
      %v3379 = vsel %vm351, %v3340, %v3378
      %v3380 = vsel %vm353, %v3347, %v3379
      %v3381 = vsel %vm355, %v3354, %v3380
      %v3382 = vsel %vm357, %v3361, %v3381
      %v3383 = vsel %vm359, %v3368, %v3382
      %v3384 = vsel %vm361, %v3383, 0
      %3386 = vmatpush.msra.mxu0 0.0
      %3387 = vmatpush.msra.mxu0 0.0
      %3388 = vmatpush.msra.mxu0 0.0
      %3389 = vmatpush.msra.mxu0 0.0
      %3390 = vmatpush.msra.mxu0 0.0
      %3391 = vmatpush.msra.mxu0 0.0
      %3392 = vmatpush.msra.mxu0 0.0
      %3393 = vmatpush.msra.mxu0 0.0
      %3394 = vmatpush.msra.mxu0 0.0
      %3395 = vmatpush.msra.mxu0 0.0
      %3396 = vmatpush.msra.mxu0 0.0
      %3397 = vmatpush.msra.mxu0 0.0
      %3398 = vmatpush.msra.mxu0 %v258
      %3399 = vmatpush.msra.mxu0 %v257
      %3400 = vmatpush.msra.mxu0 %v256
      %3401 = vmatpush.msra.mxu0 %v255
      %3402 = vmatmul.f32.gmra.mxu0 %v3384
      %v3403 = vpop.f32.mrf.mxu0
      %v3404 = vadd.f32 0.0, %v3403
      %3405 = vdwg.mxu0
      %v3406 = vpack.c.bf16 %v3404, %v3404
      %s3407 = scalar_lea.vmem %s3, 168
      %v3408 = vld [vmem:[%s3407] sm:$0xf]
      %v3409 = vld [vmem:[%s3407 + $0x4] sm:$0xf]
      %v3412 = vunpack.c.l.b16 %v3408
      %v3413 = vunpack.c.l.b16 %v3409
      %v3414 = vpack.c.b16 %v3413, %v3412
      %v3417 = vsel %vm514, %v3406, 0
      %3419 = vmatpush.bf16.msra.mxu0 0
      %3420 = vmatpush.bf16.msra.mxu0 0
      %3421 = vmatpush.bf16.msra.mxu0 0
      %3422 = vmatpush.bf16.msra.mxu0 0
      %3423 = vmatpush.bf16.msra.mxu0 0
      %3424 = vmatpush.bf16.msra.mxu0 0
      %3425 = vmatpush.bf16.msra.mxu0 0
      %3426 = vmatpush.bf16.msra.mxu0 %v3414
      %3427 = vmatmul.bf16.gmra.mxu0 %v3417
      %v3428 = vpop.f32.mrf.mxu0
      %v3429 = vadd.f32 0.0, %v3428
      %v3430 = vpop.f32.mrf.mxu0
      %3431 = vdwg.mxu0
      %v3432 = vadd.f32 %v3288, %v3429
      %s3433 = scalar_lea.vmem %s242, 38
      %v3434 = vld [vmem:[%s3433] ss:$16 sm:$0x3]
      %s3435 = scalar_lea.vmem %s242, 102
      %v3436 = vld [vmem:[%s3435] ss:$16 sm:$0x3]
      %s3437 = scalar_lea.vmem %s242, 166
      %v3438 = vld [vmem:[%s3437] ss:$16 sm:$0x3]
      %s3439 = scalar_lea.vmem %s242, 230
      %v3440 = vld [vmem:[%s3439] ss:$16 sm:$0x3]
      %s3441 = scalar_lea.vmem %s242, 294
      %v3442 = vld [vmem:[%s3441] ss:$16 sm:$0x3]
      %s3443 = scalar_lea.vmem %s242, 358
      %v3444 = vld [vmem:[%s3443] ss:$16 sm:$0x3]
      %s3445 = scalar_lea.vmem %s242, 422
      %v3446 = vld [vmem:[%s3445] ss:$16 sm:$0x3]
      %s3447 = scalar_lea.vmem %s242, 486
      %v3448 = vld [vmem:[%s3447] ss:$16 sm:$0x3]
      %v3449 = vmul.f32 %v3434, %v254
      %v3450 = vmul.f32 %v3436, %v254
      %v3451 = vmul.f32 %v3438, %v254
      %v3452 = vmul.f32 %v3440, %v254
      %v3453 = vmul.f32 %v3442, %v254
      %v3454 = vmul.f32 %v3444, %v254
      %v3455 = vmul.f32 %v3446, %v254
      %v3456 = vmul.f32 %v3448, %v254
      %v3457 = vsel %vm282, %v3449, 0.0
      %v3458 = vrot.slane %v3457, 4
      %v3459 = vadd.f32 %v3457, %v3458
      %v3460 = vrot.slane %v3459, 2
      %v3461 = vadd.f32 %v3459, %v3460
      %v3462 = vrot.slane %v3461, 1
      %v3463 = vadd.f32 %v3461, %v3462
      %v3464 = vsel %vm282, %v3450, 0.0
      %v3465 = vrot.slane %v3464, 4
      %v3466 = vadd.f32 %v3464, %v3465
      %v3467 = vrot.slane %v3466, 2
      %v3468 = vadd.f32 %v3466, %v3467
      %v3469 = vrot.slane %v3468, 1
      %v3470 = vadd.f32 %v3468, %v3469
      %v3471 = vsel %vm282, %v3451, 0.0
      %v3472 = vrot.slane %v3471, 4
      %v3473 = vadd.f32 %v3471, %v3472
      %v3474 = vrot.slane %v3473, 2
      %v3475 = vadd.f32 %v3473, %v3474
      %v3476 = vrot.slane %v3475, 1
      %v3477 = vadd.f32 %v3475, %v3476
      %v3478 = vsel %vm282, %v3452, 0.0
      %v3479 = vrot.slane %v3478, 4
      %v3480 = vadd.f32 %v3478, %v3479
      %v3481 = vrot.slane %v3480, 2
      %v3482 = vadd.f32 %v3480, %v3481
      %v3483 = vrot.slane %v3482, 1
      %v3484 = vadd.f32 %v3482, %v3483
      %v3485 = vsel %vm282, %v3453, 0.0
      %v3486 = vrot.slane %v3485, 4
      %v3487 = vadd.f32 %v3485, %v3486
      %v3488 = vrot.slane %v3487, 2
      %v3489 = vadd.f32 %v3487, %v3488
      %v3490 = vrot.slane %v3489, 1
      %v3491 = vadd.f32 %v3489, %v3490
      %v3492 = vsel %vm282, %v3454, 0.0
      %v3493 = vrot.slane %v3492, 4
      %v3494 = vadd.f32 %v3492, %v3493
      %v3495 = vrot.slane %v3494, 2
      %v3496 = vadd.f32 %v3494, %v3495
      %v3497 = vrot.slane %v3496, 1
      %v3498 = vadd.f32 %v3496, %v3497
      %v3499 = vsel %vm282, %v3455, 0.0
      %v3500 = vrot.slane %v3499, 4
      %v3501 = vadd.f32 %v3499, %v3500
      %v3502 = vrot.slane %v3501, 2
      %v3503 = vadd.f32 %v3501, %v3502
      %v3504 = vrot.slane %v3503, 1
      %v3505 = vadd.f32 %v3503, %v3504
      %v3506 = vsel %vm282, %v3456, 0.0
      %v3507 = vrot.slane %v3506, 4
      %v3508 = vadd.f32 %v3506, %v3507
      %v3509 = vrot.slane %v3508, 2
      %v3510 = vadd.f32 %v3508, %v3509
      %v3511 = vrot.slane %v3510, 1
      %v3512 = vadd.f32 %v3510, %v3511
      %v3521 = vsel %vm347, %v3470, %v3463
      %v3522 = vsel %vm349, %v3477, %v3521
      %v3523 = vsel %vm351, %v3484, %v3522
      %v3524 = vsel %vm353, %v3491, %v3523
      %v3525 = vsel %vm355, %v3498, %v3524
      %v3526 = vsel %vm357, %v3505, %v3525
      %v3527 = vsel %vm359, %v3512, %v3526
      %v3528 = vsel %vm361, %v3527, 0
      %3530 = vmatpush.msra.mxu0 0.0
      %3531 = vmatpush.msra.mxu0 0.0
      %3532 = vmatpush.msra.mxu0 0.0
      %3533 = vmatpush.msra.mxu0 0.0
      %3534 = vmatpush.msra.mxu0 0.0
      %3535 = vmatpush.msra.mxu0 0.0
      %3536 = vmatpush.msra.mxu0 0.0
      %3537 = vmatpush.msra.mxu0 0.0
      %3538 = vmatpush.msra.mxu0 0.0
      %3539 = vmatpush.msra.mxu0 0.0
      %3540 = vmatpush.msra.mxu0 0.0
      %3541 = vmatpush.msra.mxu0 0.0
      %3542 = vmatpush.msra.mxu0 %v258
      %3543 = vmatpush.msra.mxu0 %v257
      %3544 = vmatpush.msra.mxu0 %v256
      %3545 = vmatpush.msra.mxu0 %v255
      %3546 = vmatmul.f32.gmra.mxu0 %v3528
      %v3547 = vpop.f32.mrf.mxu0
      %v3548 = vadd.f32 0.0, %v3547
      %3549 = vdwg.mxu0
      %v3550 = vpack.c.bf16 %v3548, %v3548
      %s3551 = scalar_lea.vmem %s3, 176
      %v3552 = vld [vmem:[%s3551] sm:$0xf]
      %v3553 = vld [vmem:[%s3551 + $0x4] sm:$0xf]
      %v3556 = vunpack.c.l.b16 %v3552
      %v3557 = vunpack.c.l.b16 %v3553
      %v3558 = vpack.c.b16 %v3557, %v3556
      %v3561 = vsel %vm514, %v3550, 0
      %3563 = vmatpush.bf16.msra.mxu0 0
      %3564 = vmatpush.bf16.msra.mxu0 0
      %3565 = vmatpush.bf16.msra.mxu0 0
      %3566 = vmatpush.bf16.msra.mxu0 0
      %3567 = vmatpush.bf16.msra.mxu0 0
      %3568 = vmatpush.bf16.msra.mxu0 0
      %3569 = vmatpush.bf16.msra.mxu0 0
      %3570 = vmatpush.bf16.msra.mxu0 %v3558
      %3571 = vmatmul.bf16.gmra.mxu0 %v3561
      %v3572 = vpop.f32.mrf.mxu0
      %v3573 = vadd.f32 0.0, %v3572
      %v3574 = vpop.f32.mrf.mxu0
      %3575 = vdwg.mxu0
      %v3576 = vadd.f32 %v3432, %v3573
      %s3577 = scalar_lea.vmem %s242, 39
      %v3578 = vld [vmem:[%s3577] ss:$16 sm:$0x3]
      %s3579 = scalar_lea.vmem %s242, 103
      %v3580 = vld [vmem:[%s3579] ss:$16 sm:$0x3]
      %s3581 = scalar_lea.vmem %s242, 167
      %v3582 = vld [vmem:[%s3581] ss:$16 sm:$0x3]
      %s3583 = scalar_lea.vmem %s242, 231
      %v3584 = vld [vmem:[%s3583] ss:$16 sm:$0x3]
      %s3585 = scalar_lea.vmem %s242, 295
      %v3586 = vld [vmem:[%s3585] ss:$16 sm:$0x3]
      %s3587 = scalar_lea.vmem %s242, 359
      %v3588 = vld [vmem:[%s3587] ss:$16 sm:$0x3]
      %s3589 = scalar_lea.vmem %s242, 423
      %v3590 = vld [vmem:[%s3589] ss:$16 sm:$0x3]
      %s3591 = scalar_lea.vmem %s242, 487
      %v3592 = vld [vmem:[%s3591] ss:$16 sm:$0x3]
      %v3593 = vmul.f32 %v3578, %v254
      %v3594 = vmul.f32 %v3580, %v254
      %v3595 = vmul.f32 %v3582, %v254
      %v3596 = vmul.f32 %v3584, %v254
      %v3597 = vmul.f32 %v3586, %v254
      %v3598 = vmul.f32 %v3588, %v254
      %v3599 = vmul.f32 %v3590, %v254
      %v3600 = vmul.f32 %v3592, %v254
      %v3601 = vsel %vm282, %v3593, 0.0
      %v3602 = vrot.slane %v3601, 4
      %v3603 = vadd.f32 %v3601, %v3602
      %v3604 = vrot.slane %v3603, 2
      %v3605 = vadd.f32 %v3603, %v3604
      %v3606 = vrot.slane %v3605, 1
      %v3607 = vadd.f32 %v3605, %v3606
      %v3608 = vsel %vm282, %v3594, 0.0
      %v3609 = vrot.slane %v3608, 4
      %v3610 = vadd.f32 %v3608, %v3609
      %v3611 = vrot.slane %v3610, 2
      %v3612 = vadd.f32 %v3610, %v3611
      %v3613 = vrot.slane %v3612, 1
      %v3614 = vadd.f32 %v3612, %v3613
      %v3615 = vsel %vm282, %v3595, 0.0
      %v3616 = vrot.slane %v3615, 4
      %v3617 = vadd.f32 %v3615, %v3616
      %v3618 = vrot.slane %v3617, 2
      %v3619 = vadd.f32 %v3617, %v3618
      %v3620 = vrot.slane %v3619, 1
      %v3621 = vadd.f32 %v3619, %v3620
      %v3622 = vsel %vm282, %v3596, 0.0
      %v3623 = vrot.slane %v3622, 4
      %v3624 = vadd.f32 %v3622, %v3623
      %v3625 = vrot.slane %v3624, 2
      %v3626 = vadd.f32 %v3624, %v3625
      %v3627 = vrot.slane %v3626, 1
      %v3628 = vadd.f32 %v3626, %v3627
      %v3629 = vsel %vm282, %v3597, 0.0
      %v3630 = vrot.slane %v3629, 4
      %v3631 = vadd.f32 %v3629, %v3630
      %v3632 = vrot.slane %v3631, 2
      %v3633 = vadd.f32 %v3631, %v3632
      %v3634 = vrot.slane %v3633, 1
      %v3635 = vadd.f32 %v3633, %v3634
      %v3636 = vsel %vm282, %v3598, 0.0
      %v3637 = vrot.slane %v3636, 4
      %v3638 = vadd.f32 %v3636, %v3637
      %v3639 = vrot.slane %v3638, 2
      %v3640 = vadd.f32 %v3638, %v3639
      %v3641 = vrot.slane %v3640, 1
      %v3642 = vadd.f32 %v3640, %v3641
      %v3643 = vsel %vm282, %v3599, 0.0
      %v3644 = vrot.slane %v3643, 4
      %v3645 = vadd.f32 %v3643, %v3644
      %v3646 = vrot.slane %v3645, 2
      %v3647 = vadd.f32 %v3645, %v3646
      %v3648 = vrot.slane %v3647, 1
      %v3649 = vadd.f32 %v3647, %v3648
      %v3650 = vsel %vm282, %v3600, 0.0
      %v3651 = vrot.slane %v3650, 4
      %v3652 = vadd.f32 %v3650, %v3651
      %v3653 = vrot.slane %v3652, 2
      %v3654 = vadd.f32 %v3652, %v3653
      %v3655 = vrot.slane %v3654, 1
      %v3656 = vadd.f32 %v3654, %v3655
      %v3665 = vsel %vm347, %v3614, %v3607
      %v3666 = vsel %vm349, %v3621, %v3665
      %v3667 = vsel %vm351, %v3628, %v3666
      %v3668 = vsel %vm353, %v3635, %v3667
      %v3669 = vsel %vm355, %v3642, %v3668
      %v3670 = vsel %vm357, %v3649, %v3669
      %v3671 = vsel %vm359, %v3656, %v3670
      %v3672 = vsel %vm361, %v3671, 0
      %3674 = vmatpush.msra.mxu0 0.0
      %3675 = vmatpush.msra.mxu0 0.0
      %3676 = vmatpush.msra.mxu0 0.0
      %3677 = vmatpush.msra.mxu0 0.0
      %3678 = vmatpush.msra.mxu0 0.0
      %3679 = vmatpush.msra.mxu0 0.0
      %3680 = vmatpush.msra.mxu0 0.0
      %3681 = vmatpush.msra.mxu0 0.0
      %3682 = vmatpush.msra.mxu0 0.0
      %3683 = vmatpush.msra.mxu0 0.0
      %3684 = vmatpush.msra.mxu0 0.0
      %3685 = vmatpush.msra.mxu0 0.0
      %3686 = vmatpush.msra.mxu0 %v258
      %3687 = vmatpush.msra.mxu0 %v257
      %3688 = vmatpush.msra.mxu0 %v256
      %3689 = vmatpush.msra.mxu0 %v255
      %3690 = vmatmul.f32.gmra.mxu0 %v3672
      %v3691 = vpop.f32.mrf.mxu0
      %v3692 = vadd.f32 0.0, %v3691
      %3693 = vdwg.mxu0
      %v3694 = vpack.c.bf16 %v3692, %v3692
      %s3695 = scalar_lea.vmem %s3, 184
      %v3696 = vld [vmem:[%s3695] sm:$0xf]
      %v3697 = vld [vmem:[%s3695 + $0x4] sm:$0xf]
      %v3700 = vunpack.c.l.b16 %v3696
      %v3701 = vunpack.c.l.b16 %v3697
      %v3702 = vpack.c.b16 %v3701, %v3700
      %v3705 = vsel %vm514, %v3694, 0
      %3707 = vmatpush.bf16.msra.mxu0 0
      %3708 = vmatpush.bf16.msra.mxu0 0
      %3709 = vmatpush.bf16.msra.mxu0 0
      %3710 = vmatpush.bf16.msra.mxu0 0
      %3711 = vmatpush.bf16.msra.mxu0 0
      %3712 = vmatpush.bf16.msra.mxu0 0
      %3713 = vmatpush.bf16.msra.mxu0 0
      %3714 = vmatpush.bf16.msra.mxu0 %v3702
      %3715 = vmatmul.bf16.gmra.mxu0 %v3705
      %v3716 = vpop.f32.mrf.mxu0
      %v3717 = vadd.f32 0.0, %v3716
      %v3718 = vpop.f32.mrf.mxu0
      %3719 = vdwg.mxu0
      %v3720 = vadd.f32 %v3576, %v3717
      %s3721 = scalar_lea.vmem %s242, 40
      %v3722 = vld [vmem:[%s3721] ss:$16 sm:$0x3]
      %s3723 = scalar_lea.vmem %s242, 104
      %v3724 = vld [vmem:[%s3723] ss:$16 sm:$0x3]
      %s3725 = scalar_lea.vmem %s242, 168
      %v3726 = vld [vmem:[%s3725] ss:$16 sm:$0x3]
      %s3727 = scalar_lea.vmem %s242, 232
      %v3728 = vld [vmem:[%s3727] ss:$16 sm:$0x3]
      %s3729 = scalar_lea.vmem %s242, 296
      %v3730 = vld [vmem:[%s3729] ss:$16 sm:$0x3]
      %s3731 = scalar_lea.vmem %s242, 360
      %v3732 = vld [vmem:[%s3731] ss:$16 sm:$0x3]
      %s3733 = scalar_lea.vmem %s242, 424
      %v3734 = vld [vmem:[%s3733] ss:$16 sm:$0x3]
      %s3735 = scalar_lea.vmem %s242, 488
      %v3736 = vld [vmem:[%s3735] ss:$16 sm:$0x3]
      %v3737 = vmul.f32 %v3722, %v254
      %v3738 = vmul.f32 %v3724, %v254
      %v3739 = vmul.f32 %v3726, %v254
      %v3740 = vmul.f32 %v3728, %v254
      %v3741 = vmul.f32 %v3730, %v254
      %v3742 = vmul.f32 %v3732, %v254
      %v3743 = vmul.f32 %v3734, %v254
      %v3744 = vmul.f32 %v3736, %v254
      %v3745 = vsel %vm282, %v3737, 0.0
      %v3746 = vrot.slane %v3745, 4
      %v3747 = vadd.f32 %v3745, %v3746
      %v3748 = vrot.slane %v3747, 2
      %v3749 = vadd.f32 %v3747, %v3748
      %v3750 = vrot.slane %v3749, 1
      %v3751 = vadd.f32 %v3749, %v3750
      %v3752 = vsel %vm282, %v3738, 0.0
      %v3753 = vrot.slane %v3752, 4
      %v3754 = vadd.f32 %v3752, %v3753
      %v3755 = vrot.slane %v3754, 2
      %v3756 = vadd.f32 %v3754, %v3755
      %v3757 = vrot.slane %v3756, 1
      %v3758 = vadd.f32 %v3756, %v3757
      %v3759 = vsel %vm282, %v3739, 0.0
      %v3760 = vrot.slane %v3759, 4
      %v3761 = vadd.f32 %v3759, %v3760
      %v3762 = vrot.slane %v3761, 2
      %v3763 = vadd.f32 %v3761, %v3762
      %v3764 = vrot.slane %v3763, 1
      %v3765 = vadd.f32 %v3763, %v3764
      %v3766 = vsel %vm282, %v3740, 0.0
      %v3767 = vrot.slane %v3766, 4
      %v3768 = vadd.f32 %v3766, %v3767
      %v3769 = vrot.slane %v3768, 2
      %v3770 = vadd.f32 %v3768, %v3769
      %v3771 = vrot.slane %v3770, 1
      %v3772 = vadd.f32 %v3770, %v3771
      %v3773 = vsel %vm282, %v3741, 0.0
      %v3774 = vrot.slane %v3773, 4
      %v3775 = vadd.f32 %v3773, %v3774
      %v3776 = vrot.slane %v3775, 2
      %v3777 = vadd.f32 %v3775, %v3776
      %v3778 = vrot.slane %v3777, 1
      %v3779 = vadd.f32 %v3777, %v3778
      %v3780 = vsel %vm282, %v3742, 0.0
      %v3781 = vrot.slane %v3780, 4
      %v3782 = vadd.f32 %v3780, %v3781
      %v3783 = vrot.slane %v3782, 2
      %v3784 = vadd.f32 %v3782, %v3783
      %v3785 = vrot.slane %v3784, 1
      %v3786 = vadd.f32 %v3784, %v3785
      %v3787 = vsel %vm282, %v3743, 0.0
      %v3788 = vrot.slane %v3787, 4
      %v3789 = vadd.f32 %v3787, %v3788
      %v3790 = vrot.slane %v3789, 2
      %v3791 = vadd.f32 %v3789, %v3790
      %v3792 = vrot.slane %v3791, 1
      %v3793 = vadd.f32 %v3791, %v3792
      %v3794 = vsel %vm282, %v3744, 0.0
      %v3795 = vrot.slane %v3794, 4
      %v3796 = vadd.f32 %v3794, %v3795
      %v3797 = vrot.slane %v3796, 2
      %v3798 = vadd.f32 %v3796, %v3797
      %v3799 = vrot.slane %v3798, 1
      %v3800 = vadd.f32 %v3798, %v3799
      %v3809 = vsel %vm347, %v3758, %v3751
      %v3810 = vsel %vm349, %v3765, %v3809
      %v3811 = vsel %vm351, %v3772, %v3810
      %v3812 = vsel %vm353, %v3779, %v3811
      %v3813 = vsel %vm355, %v3786, %v3812
      %v3814 = vsel %vm357, %v3793, %v3813
      %v3815 = vsel %vm359, %v3800, %v3814
      %v3816 = vsel %vm361, %v3815, 0
      %3818 = vmatpush.msra.mxu0 0.0
      %3819 = vmatpush.msra.mxu0 0.0
      %3820 = vmatpush.msra.mxu0 0.0
      %3821 = vmatpush.msra.mxu0 0.0
      %3822 = vmatpush.msra.mxu0 0.0
      %3823 = vmatpush.msra.mxu0 0.0
      %3824 = vmatpush.msra.mxu0 0.0
      %3825 = vmatpush.msra.mxu0 0.0
      %3826 = vmatpush.msra.mxu0 0.0
      %3827 = vmatpush.msra.mxu0 0.0
      %3828 = vmatpush.msra.mxu0 0.0
      %3829 = vmatpush.msra.mxu0 0.0
      %3830 = vmatpush.msra.mxu0 %v258
      %3831 = vmatpush.msra.mxu0 %v257
      %3832 = vmatpush.msra.mxu0 %v256
      %3833 = vmatpush.msra.mxu0 %v255
      %3834 = vmatmul.f32.gmra.mxu0 %v3816
      %v3835 = vpop.f32.mrf.mxu0
      %v3836 = vadd.f32 0.0, %v3835
      %3837 = vdwg.mxu0
      %v3838 = vpack.c.bf16 %v3836, %v3836
      %s3839 = scalar_lea.vmem %s3, 192
      %v3840 = vld [vmem:[%s3839] sm:$0xf]
      %v3841 = vld [vmem:[%s3839 + $0x4] sm:$0xf]
      %v3844 = vunpack.c.l.b16 %v3840
      %v3845 = vunpack.c.l.b16 %v3841
      %v3846 = vpack.c.b16 %v3845, %v3844
      %v3849 = vsel %vm514, %v3838, 0
      %3851 = vmatpush.bf16.msra.mxu0 0
      %3852 = vmatpush.bf16.msra.mxu0 0
      %3853 = vmatpush.bf16.msra.mxu0 0
      %3854 = vmatpush.bf16.msra.mxu0 0
      %3855 = vmatpush.bf16.msra.mxu0 0
      %3856 = vmatpush.bf16.msra.mxu0 0
      %3857 = vmatpush.bf16.msra.mxu0 0
      %3858 = vmatpush.bf16.msra.mxu0 %v3846
      %3859 = vmatmul.bf16.gmra.mxu0 %v3849
      %v3860 = vpop.f32.mrf.mxu0
      %v3861 = vadd.f32 0.0, %v3860
      %v3862 = vpop.f32.mrf.mxu0
      %3863 = vdwg.mxu0
      %v3864 = vadd.f32 %v3720, %v3861
      %s3865 = scalar_lea.vmem %s242, 41
      %v3866 = vld [vmem:[%s3865] ss:$16 sm:$0x3]
      %s3867 = scalar_lea.vmem %s242, 105
      %v3868 = vld [vmem:[%s3867] ss:$16 sm:$0x3]
      %s3869 = scalar_lea.vmem %s242, 169
      %v3870 = vld [vmem:[%s3869] ss:$16 sm:$0x3]
      %s3871 = scalar_lea.vmem %s242, 233
      %v3872 = vld [vmem:[%s3871] ss:$16 sm:$0x3]
      %s3873 = scalar_lea.vmem %s242, 297
      %v3874 = vld [vmem:[%s3873] ss:$16 sm:$0x3]
      %s3875 = scalar_lea.vmem %s242, 361
      %v3876 = vld [vmem:[%s3875] ss:$16 sm:$0x3]
      %s3877 = scalar_lea.vmem %s242, 425
      %v3878 = vld [vmem:[%s3877] ss:$16 sm:$0x3]
      %s3879 = scalar_lea.vmem %s242, 489
      %v3880 = vld [vmem:[%s3879] ss:$16 sm:$0x3]
      %v3881 = vmul.f32 %v3866, %v254
      %v3882 = vmul.f32 %v3868, %v254
      %v3883 = vmul.f32 %v3870, %v254
      %v3884 = vmul.f32 %v3872, %v254
      %v3885 = vmul.f32 %v3874, %v254
      %v3886 = vmul.f32 %v3876, %v254
      %v3887 = vmul.f32 %v3878, %v254
      %v3888 = vmul.f32 %v3880, %v254
      %v3889 = vsel %vm282, %v3881, 0.0
      %v3890 = vrot.slane %v3889, 4
      %v3891 = vadd.f32 %v3889, %v3890
      %v3892 = vrot.slane %v3891, 2
      %v3893 = vadd.f32 %v3891, %v3892
      %v3894 = vrot.slane %v3893, 1
      %v3895 = vadd.f32 %v3893, %v3894
      %v3896 = vsel %vm282, %v3882, 0.0
      %v3897 = vrot.slane %v3896, 4
      %v3898 = vadd.f32 %v3896, %v3897
      %v3899 = vrot.slane %v3898, 2
      %v3900 = vadd.f32 %v3898, %v3899
      %v3901 = vrot.slane %v3900, 1
      %v3902 = vadd.f32 %v3900, %v3901
      %v3903 = vsel %vm282, %v3883, 0.0
      %v3904 = vrot.slane %v3903, 4
      %v3905 = vadd.f32 %v3903, %v3904
      %v3906 = vrot.slane %v3905, 2
      %v3907 = vadd.f32 %v3905, %v3906
      %v3908 = vrot.slane %v3907, 1
      %v3909 = vadd.f32 %v3907, %v3908
      %v3910 = vsel %vm282, %v3884, 0.0
      %v3911 = vrot.slane %v3910, 4
      %v3912 = vadd.f32 %v3910, %v3911
      %v3913 = vrot.slane %v3912, 2
      %v3914 = vadd.f32 %v3912, %v3913
      %v3915 = vrot.slane %v3914, 1
      %v3916 = vadd.f32 %v3914, %v3915
      %v3917 = vsel %vm282, %v3885, 0.0
      %v3918 = vrot.slane %v3917, 4
      %v3919 = vadd.f32 %v3917, %v3918
      %v3920 = vrot.slane %v3919, 2
      %v3921 = vadd.f32 %v3919, %v3920
      %v3922 = vrot.slane %v3921, 1
      %v3923 = vadd.f32 %v3921, %v3922
      %v3924 = vsel %vm282, %v3886, 0.0
      %v3925 = vrot.slane %v3924, 4
      %v3926 = vadd.f32 %v3924, %v3925
      %v3927 = vrot.slane %v3926, 2
      %v3928 = vadd.f32 %v3926, %v3927
      %v3929 = vrot.slane %v3928, 1
      %v3930 = vadd.f32 %v3928, %v3929
      %v3931 = vsel %vm282, %v3887, 0.0
      %v3932 = vrot.slane %v3931, 4
      %v3933 = vadd.f32 %v3931, %v3932
      %v3934 = vrot.slane %v3933, 2
      %v3935 = vadd.f32 %v3933, %v3934
      %v3936 = vrot.slane %v3935, 1
      %v3937 = vadd.f32 %v3935, %v3936
      %v3938 = vsel %vm282, %v3888, 0.0
      %v3939 = vrot.slane %v3938, 4
      %v3940 = vadd.f32 %v3938, %v3939
      %v3941 = vrot.slane %v3940, 2
      %v3942 = vadd.f32 %v3940, %v3941
      %v3943 = vrot.slane %v3942, 1
      %v3944 = vadd.f32 %v3942, %v3943
      %v3953 = vsel %vm347, %v3902, %v3895
      %v3954 = vsel %vm349, %v3909, %v3953
      %v3955 = vsel %vm351, %v3916, %v3954
      %v3956 = vsel %vm353, %v3923, %v3955
      %v3957 = vsel %vm355, %v3930, %v3956
      %v3958 = vsel %vm357, %v3937, %v3957
      %v3959 = vsel %vm359, %v3944, %v3958
      %v3960 = vsel %vm361, %v3959, 0
      %3962 = vmatpush.msra.mxu0 0.0
      %3963 = vmatpush.msra.mxu0 0.0
      %3964 = vmatpush.msra.mxu0 0.0
      %3965 = vmatpush.msra.mxu0 0.0
      %3966 = vmatpush.msra.mxu0 0.0
      %3967 = vmatpush.msra.mxu0 0.0
      %3968 = vmatpush.msra.mxu0 0.0
      %3969 = vmatpush.msra.mxu0 0.0
      %3970 = vmatpush.msra.mxu0 0.0
      %3971 = vmatpush.msra.mxu0 0.0
      %3972 = vmatpush.msra.mxu0 0.0
      %3973 = vmatpush.msra.mxu0 0.0
      %3974 = vmatpush.msra.mxu0 %v258
      %3975 = vmatpush.msra.mxu0 %v257
      %3976 = vmatpush.msra.mxu0 %v256
      %3977 = vmatpush.msra.mxu0 %v255
      %3978 = vmatmul.f32.gmra.mxu0 %v3960
      %v3979 = vpop.f32.mrf.mxu0
      %v3980 = vadd.f32 0.0, %v3979
      %3981 = vdwg.mxu0
      %v3982 = vpack.c.bf16 %v3980, %v3980
      %s3983 = scalar_lea.vmem %s3, 200
      %v3984 = vld [vmem:[%s3983] sm:$0xf]
      %v3985 = vld [vmem:[%s3983 + $0x4] sm:$0xf]
      %v3988 = vunpack.c.l.b16 %v3984
      %v3989 = vunpack.c.l.b16 %v3985
      %v3990 = vpack.c.b16 %v3989, %v3988
      %v3993 = vsel %vm514, %v3982, 0
      %3995 = vmatpush.bf16.msra.mxu0 0
      %3996 = vmatpush.bf16.msra.mxu0 0
      %3997 = vmatpush.bf16.msra.mxu0 0
      %3998 = vmatpush.bf16.msra.mxu0 0
      %3999 = vmatpush.bf16.msra.mxu0 0
      %4000 = vmatpush.bf16.msra.mxu0 0
      %4001 = vmatpush.bf16.msra.mxu0 0
      %4002 = vmatpush.bf16.msra.mxu0 %v3990
      %4003 = vmatmul.bf16.gmra.mxu0 %v3993
      %v4004 = vpop.f32.mrf.mxu0
      %v4005 = vadd.f32 0.0, %v4004
      %v4006 = vpop.f32.mrf.mxu0
      %4007 = vdwg.mxu0
      %v4008 = vadd.f32 %v3864, %v4005
      %s4009 = scalar_lea.vmem %s242, 42
      %v4010 = vld [vmem:[%s4009] ss:$16 sm:$0x3]
      %s4011 = scalar_lea.vmem %s242, 106
      %v4012 = vld [vmem:[%s4011] ss:$16 sm:$0x3]
      %s4013 = scalar_lea.vmem %s242, 170
      %v4014 = vld [vmem:[%s4013] ss:$16 sm:$0x3]
      %s4015 = scalar_lea.vmem %s242, 234
      %v4016 = vld [vmem:[%s4015] ss:$16 sm:$0x3]
      %s4017 = scalar_lea.vmem %s242, 298
      %v4018 = vld [vmem:[%s4017] ss:$16 sm:$0x3]
      %s4019 = scalar_lea.vmem %s242, 362
      %v4020 = vld [vmem:[%s4019] ss:$16 sm:$0x3]
      %s4021 = scalar_lea.vmem %s242, 426
      %v4022 = vld [vmem:[%s4021] ss:$16 sm:$0x3]
      %s4023 = scalar_lea.vmem %s242, 490
      %v4024 = vld [vmem:[%s4023] ss:$16 sm:$0x3]
      %v4025 = vmul.f32 %v4010, %v254
      %v4026 = vmul.f32 %v4012, %v254
      %v4027 = vmul.f32 %v4014, %v254
      %v4028 = vmul.f32 %v4016, %v254
      %v4029 = vmul.f32 %v4018, %v254
      %v4030 = vmul.f32 %v4020, %v254
      %v4031 = vmul.f32 %v4022, %v254
      %v4032 = vmul.f32 %v4024, %v254
      %v4033 = vsel %vm282, %v4025, 0.0
      %v4034 = vrot.slane %v4033, 4
      %v4035 = vadd.f32 %v4033, %v4034
      %v4036 = vrot.slane %v4035, 2
      %v4037 = vadd.f32 %v4035, %v4036
      %v4038 = vrot.slane %v4037, 1
      %v4039 = vadd.f32 %v4037, %v4038
      %v4040 = vsel %vm282, %v4026, 0.0
      %v4041 = vrot.slane %v4040, 4
      %v4042 = vadd.f32 %v4040, %v4041
      %v4043 = vrot.slane %v4042, 2
      %v4044 = vadd.f32 %v4042, %v4043
      %v4045 = vrot.slane %v4044, 1
      %v4046 = vadd.f32 %v4044, %v4045
      %v4047 = vsel %vm282, %v4027, 0.0
      %v4048 = vrot.slane %v4047, 4
      %v4049 = vadd.f32 %v4047, %v4048
      %v4050 = vrot.slane %v4049, 2
      %v4051 = vadd.f32 %v4049, %v4050
      %v4052 = vrot.slane %v4051, 1
      %v4053 = vadd.f32 %v4051, %v4052
      %v4054 = vsel %vm282, %v4028, 0.0
      %v4055 = vrot.slane %v4054, 4
      %v4056 = vadd.f32 %v4054, %v4055
      %v4057 = vrot.slane %v4056, 2
      %v4058 = vadd.f32 %v4056, %v4057
      %v4059 = vrot.slane %v4058, 1
      %v4060 = vadd.f32 %v4058, %v4059
      %v4061 = vsel %vm282, %v4029, 0.0
      %v4062 = vrot.slane %v4061, 4
      %v4063 = vadd.f32 %v4061, %v4062
      %v4064 = vrot.slane %v4063, 2
      %v4065 = vadd.f32 %v4063, %v4064
      %v4066 = vrot.slane %v4065, 1
      %v4067 = vadd.f32 %v4065, %v4066
      %v4068 = vsel %vm282, %v4030, 0.0
      %v4069 = vrot.slane %v4068, 4
      %v4070 = vadd.f32 %v4068, %v4069
      %v4071 = vrot.slane %v4070, 2
      %v4072 = vadd.f32 %v4070, %v4071
      %v4073 = vrot.slane %v4072, 1
      %v4074 = vadd.f32 %v4072, %v4073
      %v4075 = vsel %vm282, %v4031, 0.0
      %v4076 = vrot.slane %v4075, 4
      %v4077 = vadd.f32 %v4075, %v4076
      %v4078 = vrot.slane %v4077, 2
      %v4079 = vadd.f32 %v4077, %v4078
      %v4080 = vrot.slane %v4079, 1
      %v4081 = vadd.f32 %v4079, %v4080
      %v4082 = vsel %vm282, %v4032, 0.0
      %v4083 = vrot.slane %v4082, 4
      %v4084 = vadd.f32 %v4082, %v4083
      %v4085 = vrot.slane %v4084, 2
      %v4086 = vadd.f32 %v4084, %v4085
      %v4087 = vrot.slane %v4086, 1
      %v4088 = vadd.f32 %v4086, %v4087
      %v4097 = vsel %vm347, %v4046, %v4039
      %v4098 = vsel %vm349, %v4053, %v4097
      %v4099 = vsel %vm351, %v4060, %v4098
      %v4100 = vsel %vm353, %v4067, %v4099
      %v4101 = vsel %vm355, %v4074, %v4100
      %v4102 = vsel %vm357, %v4081, %v4101
      %v4103 = vsel %vm359, %v4088, %v4102
      %v4104 = vsel %vm361, %v4103, 0
      %4106 = vmatpush.msra.mxu0 0.0
      %4107 = vmatpush.msra.mxu0 0.0
      %4108 = vmatpush.msra.mxu0 0.0
      %4109 = vmatpush.msra.mxu0 0.0
      %4110 = vmatpush.msra.mxu0 0.0
      %4111 = vmatpush.msra.mxu0 0.0
      %4112 = vmatpush.msra.mxu0 0.0
      %4113 = vmatpush.msra.mxu0 0.0
      %4114 = vmatpush.msra.mxu0 0.0
      %4115 = vmatpush.msra.mxu0 0.0
      %4116 = vmatpush.msra.mxu0 0.0
      %4117 = vmatpush.msra.mxu0 0.0
      %4118 = vmatpush.msra.mxu0 %v258
      %4119 = vmatpush.msra.mxu0 %v257
      %4120 = vmatpush.msra.mxu0 %v256
      %4121 = vmatpush.msra.mxu0 %v255
      %4122 = vmatmul.f32.gmra.mxu0 %v4104
      %v4123 = vpop.f32.mrf.mxu0
      %v4124 = vadd.f32 0.0, %v4123
      %4125 = vdwg.mxu0
      %v4126 = vpack.c.bf16 %v4124, %v4124
      %s4127 = scalar_lea.vmem %s3, 208
      %v4128 = vld [vmem:[%s4127] sm:$0xf]
      %v4129 = vld [vmem:[%s4127 + $0x4] sm:$0xf]
      %v4132 = vunpack.c.l.b16 %v4128
      %v4133 = vunpack.c.l.b16 %v4129
      %v4134 = vpack.c.b16 %v4133, %v4132
      %v4137 = vsel %vm514, %v4126, 0
      %4139 = vmatpush.bf16.msra.mxu0 0
      %4140 = vmatpush.bf16.msra.mxu0 0
      %4141 = vmatpush.bf16.msra.mxu0 0
      %4142 = vmatpush.bf16.msra.mxu0 0
      %4143 = vmatpush.bf16.msra.mxu0 0
      %4144 = vmatpush.bf16.msra.mxu0 0
      %4145 = vmatpush.bf16.msra.mxu0 0
      %4146 = vmatpush.bf16.msra.mxu0 %v4134
      %4147 = vmatmul.bf16.gmra.mxu0 %v4137
      %v4148 = vpop.f32.mrf.mxu0
      %v4149 = vadd.f32 0.0, %v4148
      %v4150 = vpop.f32.mrf.mxu0
      %4151 = vdwg.mxu0
      %v4152 = vadd.f32 %v4008, %v4149
      %s4153 = scalar_lea.vmem %s242, 43
      %v4154 = vld [vmem:[%s4153] ss:$16 sm:$0x3]
      %s4155 = scalar_lea.vmem %s242, 107
      %v4156 = vld [vmem:[%s4155] ss:$16 sm:$0x3]
      %s4157 = scalar_lea.vmem %s242, 171
      %v4158 = vld [vmem:[%s4157] ss:$16 sm:$0x3]
      %s4159 = scalar_lea.vmem %s242, 235
      %v4160 = vld [vmem:[%s4159] ss:$16 sm:$0x3]
      %s4161 = scalar_lea.vmem %s242, 299
      %v4162 = vld [vmem:[%s4161] ss:$16 sm:$0x3]
      %s4163 = scalar_lea.vmem %s242, 363
      %v4164 = vld [vmem:[%s4163] ss:$16 sm:$0x3]
      %s4165 = scalar_lea.vmem %s242, 427
      %v4166 = vld [vmem:[%s4165] ss:$16 sm:$0x3]
      %s4167 = scalar_lea.vmem %s242, 491
      %v4168 = vld [vmem:[%s4167] ss:$16 sm:$0x3]
      %v4169 = vmul.f32 %v4154, %v254
      %v4170 = vmul.f32 %v4156, %v254
      %v4171 = vmul.f32 %v4158, %v254
      %v4172 = vmul.f32 %v4160, %v254
      %v4173 = vmul.f32 %v4162, %v254
      %v4174 = vmul.f32 %v4164, %v254
      %v4175 = vmul.f32 %v4166, %v254
      %v4176 = vmul.f32 %v4168, %v254
      %v4177 = vsel %vm282, %v4169, 0.0
      %v4178 = vrot.slane %v4177, 4
      %v4179 = vadd.f32 %v4177, %v4178
      %v4180 = vrot.slane %v4179, 2
      %v4181 = vadd.f32 %v4179, %v4180
      %v4182 = vrot.slane %v4181, 1
      %v4183 = vadd.f32 %v4181, %v4182
      %v4184 = vsel %vm282, %v4170, 0.0
      %v4185 = vrot.slane %v4184, 4
      %v4186 = vadd.f32 %v4184, %v4185
      %v4187 = vrot.slane %v4186, 2
      %v4188 = vadd.f32 %v4186, %v4187
      %v4189 = vrot.slane %v4188, 1
      %v4190 = vadd.f32 %v4188, %v4189
      %v4191 = vsel %vm282, %v4171, 0.0
      %v4192 = vrot.slane %v4191, 4
      %v4193 = vadd.f32 %v4191, %v4192
      %v4194 = vrot.slane %v4193, 2
      %v4195 = vadd.f32 %v4193, %v4194
      %v4196 = vrot.slane %v4195, 1
      %v4197 = vadd.f32 %v4195, %v4196
      %v4198 = vsel %vm282, %v4172, 0.0
      %v4199 = vrot.slane %v4198, 4
      %v4200 = vadd.f32 %v4198, %v4199
      %v4201 = vrot.slane %v4200, 2
      %v4202 = vadd.f32 %v4200, %v4201
      %v4203 = vrot.slane %v4202, 1
      %v4204 = vadd.f32 %v4202, %v4203
      %v4205 = vsel %vm282, %v4173, 0.0
      %v4206 = vrot.slane %v4205, 4
      %v4207 = vadd.f32 %v4205, %v4206
      %v4208 = vrot.slane %v4207, 2
      %v4209 = vadd.f32 %v4207, %v4208
      %v4210 = vrot.slane %v4209, 1
      %v4211 = vadd.f32 %v4209, %v4210
      %v4212 = vsel %vm282, %v4174, 0.0
      %v4213 = vrot.slane %v4212, 4
      %v4214 = vadd.f32 %v4212, %v4213
      %v4215 = vrot.slane %v4214, 2
      %v4216 = vadd.f32 %v4214, %v4215
      %v4217 = vrot.slane %v4216, 1
      %v4218 = vadd.f32 %v4216, %v4217
      %v4219 = vsel %vm282, %v4175, 0.0
      %v4220 = vrot.slane %v4219, 4
      %v4221 = vadd.f32 %v4219, %v4220
      %v4222 = vrot.slane %v4221, 2
      %v4223 = vadd.f32 %v4221, %v4222
      %v4224 = vrot.slane %v4223, 1
      %v4225 = vadd.f32 %v4223, %v4224
      %v4226 = vsel %vm282, %v4176, 0.0
      %v4227 = vrot.slane %v4226, 4
      %v4228 = vadd.f32 %v4226, %v4227
      %v4229 = vrot.slane %v4228, 2
      %v4230 = vadd.f32 %v4228, %v4229
      %v4231 = vrot.slane %v4230, 1
      %v4232 = vadd.f32 %v4230, %v4231
      %v4241 = vsel %vm347, %v4190, %v4183
      %v4242 = vsel %vm349, %v4197, %v4241
      %v4243 = vsel %vm351, %v4204, %v4242
      %v4244 = vsel %vm353, %v4211, %v4243
      %v4245 = vsel %vm355, %v4218, %v4244
      %v4246 = vsel %vm357, %v4225, %v4245
      %v4247 = vsel %vm359, %v4232, %v4246
      %v4248 = vsel %vm361, %v4247, 0
      %4250 = vmatpush.msra.mxu0 0.0
      %4251 = vmatpush.msra.mxu0 0.0
      %4252 = vmatpush.msra.mxu0 0.0
      %4253 = vmatpush.msra.mxu0 0.0
      %4254 = vmatpush.msra.mxu0 0.0
      %4255 = vmatpush.msra.mxu0 0.0
      %4256 = vmatpush.msra.mxu0 0.0
      %4257 = vmatpush.msra.mxu0 0.0
      %4258 = vmatpush.msra.mxu0 0.0
      %4259 = vmatpush.msra.mxu0 0.0
      %4260 = vmatpush.msra.mxu0 0.0
      %4261 = vmatpush.msra.mxu0 0.0
      %4262 = vmatpush.msra.mxu0 %v258
      %4263 = vmatpush.msra.mxu0 %v257
      %4264 = vmatpush.msra.mxu0 %v256
      %4265 = vmatpush.msra.mxu0 %v255
      %4266 = vmatmul.f32.gmra.mxu0 %v4248
      %v4267 = vpop.f32.mrf.mxu0
      %v4268 = vadd.f32 0.0, %v4267
      %4269 = vdwg.mxu0
      %v4270 = vpack.c.bf16 %v4268, %v4268
      %s4271 = scalar_lea.vmem %s3, 216
      %v4272 = vld [vmem:[%s4271] sm:$0xf]
      %v4273 = vld [vmem:[%s4271 + $0x4] sm:$0xf]
      %v4276 = vunpack.c.l.b16 %v4272
      %v4277 = vunpack.c.l.b16 %v4273
      %v4278 = vpack.c.b16 %v4277, %v4276
      %v4281 = vsel %vm514, %v4270, 0
      %4283 = vmatpush.bf16.msra.mxu0 0
      %4284 = vmatpush.bf16.msra.mxu0 0
      %4285 = vmatpush.bf16.msra.mxu0 0
      %4286 = vmatpush.bf16.msra.mxu0 0
      %4287 = vmatpush.bf16.msra.mxu0 0
      %4288 = vmatpush.bf16.msra.mxu0 0
      %4289 = vmatpush.bf16.msra.mxu0 0
      %4290 = vmatpush.bf16.msra.mxu0 %v4278
      %4291 = vmatmul.bf16.gmra.mxu0 %v4281
      %v4292 = vpop.f32.mrf.mxu0
      %v4293 = vadd.f32 0.0, %v4292
      %v4294 = vpop.f32.mrf.mxu0
      %4295 = vdwg.mxu0
      %v4296 = vadd.f32 %v4152, %v4293
      %s4297 = scalar_lea.vmem %s242, 44
      %v4298 = vld [vmem:[%s4297] ss:$16 sm:$0x3]
      %s4299 = scalar_lea.vmem %s242, 108
      %v4300 = vld [vmem:[%s4299] ss:$16 sm:$0x3]
      %s4301 = scalar_lea.vmem %s242, 172
      %v4302 = vld [vmem:[%s4301] ss:$16 sm:$0x3]
      %s4303 = scalar_lea.vmem %s242, 236
      %v4304 = vld [vmem:[%s4303] ss:$16 sm:$0x3]
      %s4305 = scalar_lea.vmem %s242, 300
      %v4306 = vld [vmem:[%s4305] ss:$16 sm:$0x3]
      %s4307 = scalar_lea.vmem %s242, 364
      %v4308 = vld [vmem:[%s4307] ss:$16 sm:$0x3]
      %s4309 = scalar_lea.vmem %s242, 428
      %v4310 = vld [vmem:[%s4309] ss:$16 sm:$0x3]
      %s4311 = scalar_lea.vmem %s242, 492
      %v4312 = vld [vmem:[%s4311] ss:$16 sm:$0x3]
      %v4313 = vmul.f32 %v4298, %v254
      %v4314 = vmul.f32 %v4300, %v254
      %v4315 = vmul.f32 %v4302, %v254
      %v4316 = vmul.f32 %v4304, %v254
      %v4317 = vmul.f32 %v4306, %v254
      %v4318 = vmul.f32 %v4308, %v254
      %v4319 = vmul.f32 %v4310, %v254
      %v4320 = vmul.f32 %v4312, %v254
      %v4321 = vsel %vm282, %v4313, 0.0
      %v4322 = vrot.slane %v4321, 4
      %v4323 = vadd.f32 %v4321, %v4322
      %v4324 = vrot.slane %v4323, 2
      %v4325 = vadd.f32 %v4323, %v4324
      %v4326 = vrot.slane %v4325, 1
      %v4327 = vadd.f32 %v4325, %v4326
      %v4328 = vsel %vm282, %v4314, 0.0
      %v4329 = vrot.slane %v4328, 4
      %v4330 = vadd.f32 %v4328, %v4329
      %v4331 = vrot.slane %v4330, 2
      %v4332 = vadd.f32 %v4330, %v4331
      %v4333 = vrot.slane %v4332, 1
      %v4334 = vadd.f32 %v4332, %v4333
      %v4335 = vsel %vm282, %v4315, 0.0
      %v4336 = vrot.slane %v4335, 4
      %v4337 = vadd.f32 %v4335, %v4336
      %v4338 = vrot.slane %v4337, 2
      %v4339 = vadd.f32 %v4337, %v4338
      %v4340 = vrot.slane %v4339, 1
      %v4341 = vadd.f32 %v4339, %v4340
      %v4342 = vsel %vm282, %v4316, 0.0
      %v4343 = vrot.slane %v4342, 4
      %v4344 = vadd.f32 %v4342, %v4343
      %v4345 = vrot.slane %v4344, 2
      %v4346 = vadd.f32 %v4344, %v4345
      %v4347 = vrot.slane %v4346, 1
      %v4348 = vadd.f32 %v4346, %v4347
      %v4349 = vsel %vm282, %v4317, 0.0
      %v4350 = vrot.slane %v4349, 4
      %v4351 = vadd.f32 %v4349, %v4350
      %v4352 = vrot.slane %v4351, 2
      %v4353 = vadd.f32 %v4351, %v4352
      %v4354 = vrot.slane %v4353, 1
      %v4355 = vadd.f32 %v4353, %v4354
      %v4356 = vsel %vm282, %v4318, 0.0
      %v4357 = vrot.slane %v4356, 4
      %v4358 = vadd.f32 %v4356, %v4357
      %v4359 = vrot.slane %v4358, 2
      %v4360 = vadd.f32 %v4358, %v4359
      %v4361 = vrot.slane %v4360, 1
      %v4362 = vadd.f32 %v4360, %v4361
      %v4363 = vsel %vm282, %v4319, 0.0
      %v4364 = vrot.slane %v4363, 4
      %v4365 = vadd.f32 %v4363, %v4364
      %v4366 = vrot.slane %v4365, 2
      %v4367 = vadd.f32 %v4365, %v4366
      %v4368 = vrot.slane %v4367, 1
      %v4369 = vadd.f32 %v4367, %v4368
      %v4370 = vsel %vm282, %v4320, 0.0
      %v4371 = vrot.slane %v4370, 4
      %v4372 = vadd.f32 %v4370, %v4371
      %v4373 = vrot.slane %v4372, 2
      %v4374 = vadd.f32 %v4372, %v4373
      %v4375 = vrot.slane %v4374, 1
      %v4376 = vadd.f32 %v4374, %v4375
      %v4385 = vsel %vm347, %v4334, %v4327
      %v4386 = vsel %vm349, %v4341, %v4385
      %v4387 = vsel %vm351, %v4348, %v4386
      %v4388 = vsel %vm353, %v4355, %v4387
      %v4389 = vsel %vm355, %v4362, %v4388
      %v4390 = vsel %vm357, %v4369, %v4389
      %v4391 = vsel %vm359, %v4376, %v4390
      %v4392 = vsel %vm361, %v4391, 0
      %4394 = vmatpush.msra.mxu0 0.0
      %4395 = vmatpush.msra.mxu0 0.0
      %4396 = vmatpush.msra.mxu0 0.0
      %4397 = vmatpush.msra.mxu0 0.0
      %4398 = vmatpush.msra.mxu0 0.0
      %4399 = vmatpush.msra.mxu0 0.0
      %4400 = vmatpush.msra.mxu0 0.0
      %4401 = vmatpush.msra.mxu0 0.0
      %4402 = vmatpush.msra.mxu0 0.0
      %4403 = vmatpush.msra.mxu0 0.0
      %4404 = vmatpush.msra.mxu0 0.0
      %4405 = vmatpush.msra.mxu0 0.0
      %4406 = vmatpush.msra.mxu0 %v258
      %4407 = vmatpush.msra.mxu0 %v257
      %4408 = vmatpush.msra.mxu0 %v256
      %4409 = vmatpush.msra.mxu0 %v255
      %4410 = vmatmul.f32.gmra.mxu0 %v4392
      %v4411 = vpop.f32.mrf.mxu0
      %v4412 = vadd.f32 0.0, %v4411
      %4413 = vdwg.mxu0
      %v4414 = vpack.c.bf16 %v4412, %v4412
      %s4415 = scalar_lea.vmem %s3, 224
      %v4416 = vld [vmem:[%s4415] sm:$0xf]
      %v4417 = vld [vmem:[%s4415 + $0x4] sm:$0xf]
      %v4420 = vunpack.c.l.b16 %v4416
      %v4421 = vunpack.c.l.b16 %v4417
      %v4422 = vpack.c.b16 %v4421, %v4420
      %v4425 = vsel %vm514, %v4414, 0
      %4427 = vmatpush.bf16.msra.mxu0 0
      %4428 = vmatpush.bf16.msra.mxu0 0
      %4429 = vmatpush.bf16.msra.mxu0 0
      %4430 = vmatpush.bf16.msra.mxu0 0
      %4431 = vmatpush.bf16.msra.mxu0 0
      %4432 = vmatpush.bf16.msra.mxu0 0
      %4433 = vmatpush.bf16.msra.mxu0 0
      %4434 = vmatpush.bf16.msra.mxu0 %v4422
      %4435 = vmatmul.bf16.gmra.mxu0 %v4425
      %v4436 = vpop.f32.mrf.mxu0
      %v4437 = vadd.f32 0.0, %v4436
      %v4438 = vpop.f32.mrf.mxu0
      %4439 = vdwg.mxu0
      %v4440 = vadd.f32 %v4296, %v4437
      %s4441 = scalar_lea.vmem %s242, 45
      %v4442 = vld [vmem:[%s4441] ss:$16 sm:$0x3]
      %s4443 = scalar_lea.vmem %s242, 109
      %v4444 = vld [vmem:[%s4443] ss:$16 sm:$0x3]
      %s4445 = scalar_lea.vmem %s242, 173
      %v4446 = vld [vmem:[%s4445] ss:$16 sm:$0x3]
      %s4447 = scalar_lea.vmem %s242, 237
      %v4448 = vld [vmem:[%s4447] ss:$16 sm:$0x3]
      %s4449 = scalar_lea.vmem %s242, 301
      %v4450 = vld [vmem:[%s4449] ss:$16 sm:$0x3]
      %s4451 = scalar_lea.vmem %s242, 365
      %v4452 = vld [vmem:[%s4451] ss:$16 sm:$0x3]
      %s4453 = scalar_lea.vmem %s242, 429
      %v4454 = vld [vmem:[%s4453] ss:$16 sm:$0x3]
      %s4455 = scalar_lea.vmem %s242, 493
      %v4456 = vld [vmem:[%s4455] ss:$16 sm:$0x3]
      %v4457 = vmul.f32 %v4442, %v254
      %v4458 = vmul.f32 %v4444, %v254
      %v4459 = vmul.f32 %v4446, %v254
      %v4460 = vmul.f32 %v4448, %v254
      %v4461 = vmul.f32 %v4450, %v254
      %v4462 = vmul.f32 %v4452, %v254
      %v4463 = vmul.f32 %v4454, %v254
      %v4464 = vmul.f32 %v4456, %v254
      %v4465 = vsel %vm282, %v4457, 0.0
      %v4466 = vrot.slane %v4465, 4
      %v4467 = vadd.f32 %v4465, %v4466
      %v4468 = vrot.slane %v4467, 2
      %v4469 = vadd.f32 %v4467, %v4468
      %v4470 = vrot.slane %v4469, 1
      %v4471 = vadd.f32 %v4469, %v4470
      %v4472 = vsel %vm282, %v4458, 0.0
      %v4473 = vrot.slane %v4472, 4
      %v4474 = vadd.f32 %v4472, %v4473
      %v4475 = vrot.slane %v4474, 2
      %v4476 = vadd.f32 %v4474, %v4475
      %v4477 = vrot.slane %v4476, 1
      %v4478 = vadd.f32 %v4476, %v4477
      %v4479 = vsel %vm282, %v4459, 0.0
      %v4480 = vrot.slane %v4479, 4
      %v4481 = vadd.f32 %v4479, %v4480
      %v4482 = vrot.slane %v4481, 2
      %v4483 = vadd.f32 %v4481, %v4482
      %v4484 = vrot.slane %v4483, 1
      %v4485 = vadd.f32 %v4483, %v4484
      %v4486 = vsel %vm282, %v4460, 0.0
      %v4487 = vrot.slane %v4486, 4
      %v4488 = vadd.f32 %v4486, %v4487
      %v4489 = vrot.slane %v4488, 2
      %v4490 = vadd.f32 %v4488, %v4489
      %v4491 = vrot.slane %v4490, 1
      %v4492 = vadd.f32 %v4490, %v4491
      %v4493 = vsel %vm282, %v4461, 0.0
      %v4494 = vrot.slane %v4493, 4
      %v4495 = vadd.f32 %v4493, %v4494
      %v4496 = vrot.slane %v4495, 2
      %v4497 = vadd.f32 %v4495, %v4496
      %v4498 = vrot.slane %v4497, 1
      %v4499 = vadd.f32 %v4497, %v4498
      %v4500 = vsel %vm282, %v4462, 0.0
      %v4501 = vrot.slane %v4500, 4
      %v4502 = vadd.f32 %v4500, %v4501
      %v4503 = vrot.slane %v4502, 2
      %v4504 = vadd.f32 %v4502, %v4503
      %v4505 = vrot.slane %v4504, 1
      %v4506 = vadd.f32 %v4504, %v4505
      %v4507 = vsel %vm282, %v4463, 0.0
      %v4508 = vrot.slane %v4507, 4
      %v4509 = vadd.f32 %v4507, %v4508
      %v4510 = vrot.slane %v4509, 2
      %v4511 = vadd.f32 %v4509, %v4510
      %v4512 = vrot.slane %v4511, 1
      %v4513 = vadd.f32 %v4511, %v4512
      %v4514 = vsel %vm282, %v4464, 0.0
      %v4515 = vrot.slane %v4514, 4
      %v4516 = vadd.f32 %v4514, %v4515
      %v4517 = vrot.slane %v4516, 2
      %v4518 = vadd.f32 %v4516, %v4517
      %v4519 = vrot.slane %v4518, 1
      %v4520 = vadd.f32 %v4518, %v4519
      %v4529 = vsel %vm347, %v4478, %v4471
      %v4530 = vsel %vm349, %v4485, %v4529
      %v4531 = vsel %vm351, %v4492, %v4530
      %v4532 = vsel %vm353, %v4499, %v4531
      %v4533 = vsel %vm355, %v4506, %v4532
      %v4534 = vsel %vm357, %v4513, %v4533
      %v4535 = vsel %vm359, %v4520, %v4534
      %v4536 = vsel %vm361, %v4535, 0
      %4538 = vmatpush.msra.mxu0 0.0
      %4539 = vmatpush.msra.mxu0 0.0
      %4540 = vmatpush.msra.mxu0 0.0
      %4541 = vmatpush.msra.mxu0 0.0
      %4542 = vmatpush.msra.mxu0 0.0
      %4543 = vmatpush.msra.mxu0 0.0
      %4544 = vmatpush.msra.mxu0 0.0
      %4545 = vmatpush.msra.mxu0 0.0
      %4546 = vmatpush.msra.mxu0 0.0
      %4547 = vmatpush.msra.mxu0 0.0
      %4548 = vmatpush.msra.mxu0 0.0
      %4549 = vmatpush.msra.mxu0 0.0
      %4550 = vmatpush.msra.mxu0 %v258
      %4551 = vmatpush.msra.mxu0 %v257
      %4552 = vmatpush.msra.mxu0 %v256
      %4553 = vmatpush.msra.mxu0 %v255
      %4554 = vmatmul.f32.gmra.mxu0 %v4536
      %v4555 = vpop.f32.mrf.mxu0
      %v4556 = vadd.f32 0.0, %v4555
      %4557 = vdwg.mxu0
      %v4558 = vpack.c.bf16 %v4556, %v4556
      %s4559 = scalar_lea.vmem %s3, 232
      %v4560 = vld [vmem:[%s4559] sm:$0xf]
      %v4561 = vld [vmem:[%s4559 + $0x4] sm:$0xf]
      %v4564 = vunpack.c.l.b16 %v4560
      %v4565 = vunpack.c.l.b16 %v4561
      %v4566 = vpack.c.b16 %v4565, %v4564
      %v4569 = vsel %vm514, %v4558, 0
      %4571 = vmatpush.bf16.msra.mxu0 0
      %4572 = vmatpush.bf16.msra.mxu0 0
      %4573 = vmatpush.bf16.msra.mxu0 0
      %4574 = vmatpush.bf16.msra.mxu0 0
      %4575 = vmatpush.bf16.msra.mxu0 0
      %4576 = vmatpush.bf16.msra.mxu0 0
      %4577 = vmatpush.bf16.msra.mxu0 0
      %4578 = vmatpush.bf16.msra.mxu0 %v4566
      %4579 = vmatmul.bf16.gmra.mxu0 %v4569
      %v4580 = vpop.f32.mrf.mxu0
      %v4581 = vadd.f32 0.0, %v4580
      %v4582 = vpop.f32.mrf.mxu0
      %4583 = vdwg.mxu0
      %v4584 = vadd.f32 %v4440, %v4581
      %s4585 = scalar_lea.vmem %s242, 46
      %v4586 = vld [vmem:[%s4585] ss:$16 sm:$0x3]
      %s4587 = scalar_lea.vmem %s242, 110
      %v4588 = vld [vmem:[%s4587] ss:$16 sm:$0x3]
      %s4589 = scalar_lea.vmem %s242, 174
      %v4590 = vld [vmem:[%s4589] ss:$16 sm:$0x3]
      %s4591 = scalar_lea.vmem %s242, 238
      %v4592 = vld [vmem:[%s4591] ss:$16 sm:$0x3]
      %s4593 = scalar_lea.vmem %s242, 302
      %v4594 = vld [vmem:[%s4593] ss:$16 sm:$0x3]
      %s4595 = scalar_lea.vmem %s242, 366
      %v4596 = vld [vmem:[%s4595] ss:$16 sm:$0x3]
      %s4597 = scalar_lea.vmem %s242, 430
      %v4598 = vld [vmem:[%s4597] ss:$16 sm:$0x3]
      %s4599 = scalar_lea.vmem %s242, 494
      %v4600 = vld [vmem:[%s4599] ss:$16 sm:$0x3]
      %v4601 = vmul.f32 %v4586, %v254
      %v4602 = vmul.f32 %v4588, %v254
      %v4603 = vmul.f32 %v4590, %v254
      %v4604 = vmul.f32 %v4592, %v254
      %v4605 = vmul.f32 %v4594, %v254
      %v4606 = vmul.f32 %v4596, %v254
      %v4607 = vmul.f32 %v4598, %v254
      %v4608 = vmul.f32 %v4600, %v254
      %v4609 = vsel %vm282, %v4601, 0.0
      %v4610 = vrot.slane %v4609, 4
      %v4611 = vadd.f32 %v4609, %v4610
      %v4612 = vrot.slane %v4611, 2
      %v4613 = vadd.f32 %v4611, %v4612
      %v4614 = vrot.slane %v4613, 1
      %v4615 = vadd.f32 %v4613, %v4614
      %v4616 = vsel %vm282, %v4602, 0.0
      %v4617 = vrot.slane %v4616, 4
      %v4618 = vadd.f32 %v4616, %v4617
      %v4619 = vrot.slane %v4618, 2
      %v4620 = vadd.f32 %v4618, %v4619
      %v4621 = vrot.slane %v4620, 1
      %v4622 = vadd.f32 %v4620, %v4621
      %v4623 = vsel %vm282, %v4603, 0.0
      %v4624 = vrot.slane %v4623, 4
      %v4625 = vadd.f32 %v4623, %v4624
      %v4626 = vrot.slane %v4625, 2
      %v4627 = vadd.f32 %v4625, %v4626
      %v4628 = vrot.slane %v4627, 1
      %v4629 = vadd.f32 %v4627, %v4628
      %v4630 = vsel %vm282, %v4604, 0.0
      %v4631 = vrot.slane %v4630, 4
      %v4632 = vadd.f32 %v4630, %v4631
      %v4633 = vrot.slane %v4632, 2
      %v4634 = vadd.f32 %v4632, %v4633
      %v4635 = vrot.slane %v4634, 1
      %v4636 = vadd.f32 %v4634, %v4635
      %v4637 = vsel %vm282, %v4605, 0.0
      %v4638 = vrot.slane %v4637, 4
      %v4639 = vadd.f32 %v4637, %v4638
      %v4640 = vrot.slane %v4639, 2
      %v4641 = vadd.f32 %v4639, %v4640
      %v4642 = vrot.slane %v4641, 1
      %v4643 = vadd.f32 %v4641, %v4642
      %v4644 = vsel %vm282, %v4606, 0.0
      %v4645 = vrot.slane %v4644, 4
      %v4646 = vadd.f32 %v4644, %v4645
      %v4647 = vrot.slane %v4646, 2
      %v4648 = vadd.f32 %v4646, %v4647
      %v4649 = vrot.slane %v4648, 1
      %v4650 = vadd.f32 %v4648, %v4649
      %v4651 = vsel %vm282, %v4607, 0.0
      %v4652 = vrot.slane %v4651, 4
      %v4653 = vadd.f32 %v4651, %v4652
      %v4654 = vrot.slane %v4653, 2
      %v4655 = vadd.f32 %v4653, %v4654
      %v4656 = vrot.slane %v4655, 1
      %v4657 = vadd.f32 %v4655, %v4656
      %v4658 = vsel %vm282, %v4608, 0.0
      %v4659 = vrot.slane %v4658, 4
      %v4660 = vadd.f32 %v4658, %v4659
      %v4661 = vrot.slane %v4660, 2
      %v4662 = vadd.f32 %v4660, %v4661
      %v4663 = vrot.slane %v4662, 1
      %v4664 = vadd.f32 %v4662, %v4663
      %v4673 = vsel %vm347, %v4622, %v4615
      %v4674 = vsel %vm349, %v4629, %v4673
      %v4675 = vsel %vm351, %v4636, %v4674
      %v4676 = vsel %vm353, %v4643, %v4675
      %v4677 = vsel %vm355, %v4650, %v4676
      %v4678 = vsel %vm357, %v4657, %v4677
      %v4679 = vsel %vm359, %v4664, %v4678
      %v4680 = vsel %vm361, %v4679, 0
      %4682 = vmatpush.msra.mxu0 0.0
      %4683 = vmatpush.msra.mxu0 0.0
      %4684 = vmatpush.msra.mxu0 0.0
      %4685 = vmatpush.msra.mxu0 0.0
      %4686 = vmatpush.msra.mxu0 0.0
      %4687 = vmatpush.msra.mxu0 0.0
      %4688 = vmatpush.msra.mxu0 0.0
      %4689 = vmatpush.msra.mxu0 0.0
      %4690 = vmatpush.msra.mxu0 0.0
      %4691 = vmatpush.msra.mxu0 0.0
      %4692 = vmatpush.msra.mxu0 0.0
      %4693 = vmatpush.msra.mxu0 0.0
      %4694 = vmatpush.msra.mxu0 %v258
      %4695 = vmatpush.msra.mxu0 %v257
      %4696 = vmatpush.msra.mxu0 %v256
      %4697 = vmatpush.msra.mxu0 %v255
      %4698 = vmatmul.f32.gmra.mxu0 %v4680
      %v4699 = vpop.f32.mrf.mxu0
      %v4700 = vadd.f32 0.0, %v4699
      %4701 = vdwg.mxu0
      %v4702 = vpack.c.bf16 %v4700, %v4700
      %s4703 = scalar_lea.vmem %s3, 240
      %v4704 = vld [vmem:[%s4703] sm:$0xf]
      %v4705 = vld [vmem:[%s4703 + $0x4] sm:$0xf]
      %v4708 = vunpack.c.l.b16 %v4704
      %v4709 = vunpack.c.l.b16 %v4705
      %v4710 = vpack.c.b16 %v4709, %v4708
      %v4713 = vsel %vm514, %v4702, 0
      %4715 = vmatpush.bf16.msra.mxu0 0
      %4716 = vmatpush.bf16.msra.mxu0 0
      %4717 = vmatpush.bf16.msra.mxu0 0
      %4718 = vmatpush.bf16.msra.mxu0 0
      %4719 = vmatpush.bf16.msra.mxu0 0
      %4720 = vmatpush.bf16.msra.mxu0 0
      %4721 = vmatpush.bf16.msra.mxu0 0
      %4722 = vmatpush.bf16.msra.mxu0 %v4710
      %4723 = vmatmul.bf16.gmra.mxu0 %v4713
      %v4724 = vpop.f32.mrf.mxu0
      %v4725 = vadd.f32 0.0, %v4724
      %v4726 = vpop.f32.mrf.mxu0
      %4727 = vdwg.mxu0
      %v4728 = vadd.f32 %v4584, %v4725
      %s4729 = scalar_lea.vmem %s242, 47
      %v4730 = vld [vmem:[%s4729] ss:$16 sm:$0x3]
      %s4731 = scalar_lea.vmem %s242, 111
      %v4732 = vld [vmem:[%s4731] ss:$16 sm:$0x3]
      %s4733 = scalar_lea.vmem %s242, 175
      %v4734 = vld [vmem:[%s4733] ss:$16 sm:$0x3]
      %s4735 = scalar_lea.vmem %s242, 239
      %v4736 = vld [vmem:[%s4735] ss:$16 sm:$0x3]
      %s4737 = scalar_lea.vmem %s242, 303
      %v4738 = vld [vmem:[%s4737] ss:$16 sm:$0x3]
      %s4739 = scalar_lea.vmem %s242, 367
      %v4740 = vld [vmem:[%s4739] ss:$16 sm:$0x3]
      %s4741 = scalar_lea.vmem %s242, 431
      %v4742 = vld [vmem:[%s4741] ss:$16 sm:$0x3]
      %s4743 = scalar_lea.vmem %s242, 495
      %v4744 = vld [vmem:[%s4743] ss:$16 sm:$0x3]
      %v4745 = vmul.f32 %v4730, %v254
      %v4746 = vmul.f32 %v4732, %v254
      %v4747 = vmul.f32 %v4734, %v254
      %v4748 = vmul.f32 %v4736, %v254
      %v4749 = vmul.f32 %v4738, %v254
      %v4750 = vmul.f32 %v4740, %v254
      %v4751 = vmul.f32 %v4742, %v254
      %v4752 = vmul.f32 %v4744, %v254
      %v4753 = vsel %vm282, %v4745, 0.0
      %v4754 = vrot.slane %v4753, 4
      %v4755 = vadd.f32 %v4753, %v4754
      %v4756 = vrot.slane %v4755, 2
      %v4757 = vadd.f32 %v4755, %v4756
      %v4758 = vrot.slane %v4757, 1
      %v4759 = vadd.f32 %v4757, %v4758
      %v4760 = vsel %vm282, %v4746, 0.0
      %v4761 = vrot.slane %v4760, 4
      %v4762 = vadd.f32 %v4760, %v4761
      %v4763 = vrot.slane %v4762, 2
      %v4764 = vadd.f32 %v4762, %v4763
      %v4765 = vrot.slane %v4764, 1
      %v4766 = vadd.f32 %v4764, %v4765
      %v4767 = vsel %vm282, %v4747, 0.0
      %v4768 = vrot.slane %v4767, 4
      %v4769 = vadd.f32 %v4767, %v4768
      %v4770 = vrot.slane %v4769, 2
      %v4771 = vadd.f32 %v4769, %v4770
      %v4772 = vrot.slane %v4771, 1
      %v4773 = vadd.f32 %v4771, %v4772
      %v4774 = vsel %vm282, %v4748, 0.0
      %v4775 = vrot.slane %v4774, 4
      %v4776 = vadd.f32 %v4774, %v4775
      %v4777 = vrot.slane %v4776, 2
      %v4778 = vadd.f32 %v4776, %v4777
      %v4779 = vrot.slane %v4778, 1
      %v4780 = vadd.f32 %v4778, %v4779
      %v4781 = vsel %vm282, %v4749, 0.0
      %v4782 = vrot.slane %v4781, 4
      %v4783 = vadd.f32 %v4781, %v4782
      %v4784 = vrot.slane %v4783, 2
      %v4785 = vadd.f32 %v4783, %v4784
      %v4786 = vrot.slane %v4785, 1
      %v4787 = vadd.f32 %v4785, %v4786
      %v4788 = vsel %vm282, %v4750, 0.0
      %v4789 = vrot.slane %v4788, 4
      %v4790 = vadd.f32 %v4788, %v4789
      %v4791 = vrot.slane %v4790, 2
      %v4792 = vadd.f32 %v4790, %v4791
      %v4793 = vrot.slane %v4792, 1
      %v4794 = vadd.f32 %v4792, %v4793
      %v4795 = vsel %vm282, %v4751, 0.0
      %v4796 = vrot.slane %v4795, 4
      %v4797 = vadd.f32 %v4795, %v4796
      %v4798 = vrot.slane %v4797, 2
      %v4799 = vadd.f32 %v4797, %v4798
      %v4800 = vrot.slane %v4799, 1
      %v4801 = vadd.f32 %v4799, %v4800
      %v4802 = vsel %vm282, %v4752, 0.0
      %v4803 = vrot.slane %v4802, 4
      %v4804 = vadd.f32 %v4802, %v4803
      %v4805 = vrot.slane %v4804, 2
      %v4806 = vadd.f32 %v4804, %v4805
      %v4807 = vrot.slane %v4806, 1
      %v4808 = vadd.f32 %v4806, %v4807
      %v4817 = vsel %vm347, %v4766, %v4759
      %v4818 = vsel %vm349, %v4773, %v4817
      %v4819 = vsel %vm351, %v4780, %v4818
      %v4820 = vsel %vm353, %v4787, %v4819
      %v4821 = vsel %vm355, %v4794, %v4820
      %v4822 = vsel %vm357, %v4801, %v4821
      %v4823 = vsel %vm359, %v4808, %v4822
      %v4824 = vsel %vm361, %v4823, 0
      %4826 = vmatpush.msra.mxu0 0.0
      %4827 = vmatpush.msra.mxu0 0.0
      %4828 = vmatpush.msra.mxu0 0.0
      %4829 = vmatpush.msra.mxu0 0.0
      %4830 = vmatpush.msra.mxu0 0.0
      %4831 = vmatpush.msra.mxu0 0.0
      %4832 = vmatpush.msra.mxu0 0.0
      %4833 = vmatpush.msra.mxu0 0.0
      %4834 = vmatpush.msra.mxu0 0.0
      %4835 = vmatpush.msra.mxu0 0.0
      %4836 = vmatpush.msra.mxu0 0.0
      %4837 = vmatpush.msra.mxu0 0.0
      %4838 = vmatpush.msra.mxu0 %v258
      %4839 = vmatpush.msra.mxu0 %v257
      %4840 = vmatpush.msra.mxu0 %v256
      %4841 = vmatpush.msra.mxu0 %v255
      %4842 = vmatmul.f32.gmra.mxu0 %v4824
      %v4843 = vpop.f32.mrf.mxu0
      %v4844 = vadd.f32 0.0, %v4843
      %4845 = vdwg.mxu0
      %v4846 = vpack.c.bf16 %v4844, %v4844
      %s4847 = scalar_lea.vmem %s3, 248
      %v4848 = vld [vmem:[%s4847] sm:$0xf]
      %v4849 = vld [vmem:[%s4847 + $0x4] sm:$0xf]
      %v4852 = vunpack.c.l.b16 %v4848
      %v4853 = vunpack.c.l.b16 %v4849
      %v4854 = vpack.c.b16 %v4853, %v4852
      %v4857 = vsel %vm514, %v4846, 0
      %4859 = vmatpush.bf16.msra.mxu0 0
      %4860 = vmatpush.bf16.msra.mxu0 0
      %4861 = vmatpush.bf16.msra.mxu0 0
      %4862 = vmatpush.bf16.msra.mxu0 0
      %4863 = vmatpush.bf16.msra.mxu0 0
      %4864 = vmatpush.bf16.msra.mxu0 0
      %4865 = vmatpush.bf16.msra.mxu0 0
      %4866 = vmatpush.bf16.msra.mxu0 %v4854
      %4867 = vmatmul.bf16.gmra.mxu0 %v4857
      %v4868 = vpop.f32.mrf.mxu0
      %v4869 = vadd.f32 0.0, %v4868
      %v4870 = vpop.f32.mrf.mxu0
      %4871 = vdwg.mxu0
      %v4872 = vadd.f32 %v4728, %v4869
      %v4873 = vld [vmem:[%s4] sm:$0x1]
      %v4875 = vperm.slane %v4873, 0
      %v4877 = vadd.f32 %v4872, %v4875
      %4878 = vst.msk [vmem:[%s252] sm:$0xff] %vm361, %v4877
      %p4879 = scmp.lt.s32.totalorder %s16, 1
      %s4880 = scalar_select %p4879, %s16, 1
      %s4881 = smul.addr %s4880, 8
      %s4882 = scalar_lea.vmem %s5, %s4881
      // Predicated region
      $region41: #{temporal_of_embedding_forward.2} parent=39 // pred_check
        %p4883 = pneg %p144
      $region42: #{temporal_of_embedding_forward.2} parent=39 // pred_check_branch
        %4885 = sbr.rel (%p4883) target = $region44
      $region43: #{temporal_of_embedding_forward.2} parent=39 // pred_region
        _
      $region44: #{temporal_of_embedding_forward.2} parent=39 // pred_fallthru
        _
    $region40: #{temporal_of_embedding_forward.2} parent=5 // pred_fallthru
      _
    %p4886 = scmp.le.s32.totalorder 2, %s11
    // Predicated region
    $region45: #{temporal_of_embedding_forward.2} parent=5 // pred_check
      %p4887 = pneg %p4886
    $region46: #{temporal_of_embedding_forward.2} parent=5 // pred_check_branch
      %4889 = sbr.rel (%p4887) target = $region48
    $region47: #{temporal_of_embedding_forward.2} parent=5 // pred_region
      %s4890 = ssub.s32 %s11, 2
      // Predicated region
      $region49: #{temporal_of_embedding_forward.2} parent=47 // pred_check
        %p4891 = pneg %p150
      $region50: #{temporal_of_embedding_forward.2} parent=47 // pred_check_branch
        %4893 = sbr.rel (%p4891) target = $region52
      $region51: #{temporal_of_embedding_forward.2} parent=47 // pred_region
        %p4894 = scmp.lt.s32.totalorder %s17, 1
        %s4895 = scalar_select %p4894, %s17, 1
        %s4896 = smul.addr %s4895, 8
        %s4897 = scalar_lea.vmem %s5, %s4896
      $region52: #{temporal_of_embedding_forward.2} parent=47 // pred_fallthru
        _
    $region48: #{temporal_of_embedding_forward.2} parent=5 // pred_fallthru
      _
  $region6: #{temporal_of_embedding_forward.2} parent=0 // loop_footer
    %s15 = sadd.s32 1, %s11
  $region7: #{temporal_of_embedding_forward.2} parent=0 // loop_footer_branch
    %10 = sbr.rel target = $region3
  $region8: #{temporal_of_embedding_forward.2} parent=0 // loop_exit
    _

</llo_original>
